<compile_context>
chip_gen: v7x
topology: tpu7x:2x2x1
jax: 0.10.0
libtpu: 0.0.40
codegen_flags: <defaults>
</compile_context>

<pallas_src>
import functools

import jax
import jax.numpy as jnp
from jax import lax
from jax.experimental import pallas as pl
from jax.experimental.pallas import tpu as pltpu


# ----------------------------------------------------------------------------
# Kernel bodies
# ----------------------------------------------------------------------------
def _bilstm_recurrence(x_ref, wih_f_ref, whh_f_ref, b_f_ref,
                       wih_b_ref, whh_b_ref, b_b_ref,
                       hf_ref, hb_ref, gx_f_ref, gx_b_ref, H):
    """Fused fwd+bwd LSTM recurrence for one layer.

    x_ref   : [T, B, D_in] f32 input sequence (time-major, batch padded to 8)
    wih_*   : [D_in, 4H] bf16 (transposed torch weight_ih)
    whh_*   : [H, 4H]    bf16 (transposed torch weight_hh)
    b_*     : [1, 4H]    f32  (b_ih + b_hh)
    hf_ref  : [T, B, H] f32 scratch -> forward hidden states
    hb_ref  : [T, B, H] f32 scratch -> backward hidden states
    gx_*    : [T, B, 4H] f32 scratch -> hoisted input projections
    """
    T = x_ref.shape[0]
    B = x_ref.shape[1]
    D = x_ref.shape[2]

    # Hoisted input projection: one big matmul per direction for every
    # timestep (bias folded in), so only h @ W_hh remains inside the loop.
    x2d = x_ref[...].reshape(T * B, D).astype(jnp.bfloat16)
    gx_f_ref[...] = (
        jnp.dot(x2d, wih_f_ref[...], preferred_element_type=jnp.float32)
        + b_f_ref[...]
    ).reshape(T, B, 4 * H)
    gx_b_ref[...] = (
        jnp.dot(x2d, wih_b_ref[...], preferred_element_type=jnp.float32)
        + b_b_ref[...]
    ).reshape(T, B, 4 * H)

    whh_f = whh_f_ref[...]
    whh_b = whh_b_ref[...]

    def cell(gates, c):
        # PyTorch gate order: i, f, g, o.  Elementwise stays f32 (v5e-safe).
        i_g = jax.nn.sigmoid(gates[:, 0 * H:1 * H])
        f_g = jax.nn.sigmoid(gates[:, 1 * H:2 * H])
        g_g = jnp.tanh(gates[:, 2 * H:3 * H])
        o_g = jax.nn.sigmoid(gates[:, 3 * H:4 * H])
        c_new = f_g * c + i_g * g_g
        h_new = o_g * jnp.tanh(c_new)
        return h_new, c_new

    def step(t, carry):
        h_f, c_f, h_b, c_b = carry
        tb = T - 1 - t  # backward direction walks the sequence in reverse
        gates_f = gx_f_ref[t] + jnp.dot(
            h_f.astype(jnp.bfloat16), whh_f, preferred_element_type=jnp.float32)
        gates_b = gx_b_ref[tb] + jnp.dot(
            h_b.astype(jnp.bfloat16), whh_b, preferred_element_type=jnp.float32)
        h_f, c_f = cell(gates_f, c_f)
        h_b, c_b = cell(gates_b, c_b)
        hf_ref[t] = h_f
        hb_ref[tb] = h_b
        return (h_f, c_f, h_b, c_b)

    z = jnp.zeros((B, H), jnp.float32)
    # Short static trip count: unroll for LLO scheduling visibility.
    lax.fori_loop(0, T, step, (z, z, z, z), unroll=True)


def _bilstm_layer_kernel(x_ref, wih_f_ref, whh_f_ref, b_f_ref,
                         wih_b_ref, whh_b_ref, b_b_ref,
                         out_ref, hf_ref, hb_ref, gx_f_ref, gx_b_ref,
                         *, hidden):
    """Intermediate bidirectional layer: out [T, B, 2H] = concat(fwd, bwd)."""
    _bilstm_recurrence(x_ref, wih_f_ref, whh_f_ref, b_f_ref,
                       wih_b_ref, whh_b_ref, b_b_ref,
                       hf_ref, hb_ref, gx_f_ref, gx_b_ref, hidden)
    out_ref[...] = jnp.concatenate([hf_ref[...], hb_ref[...]], axis=-1)


def _bilstm_cls_kernel(x_ref, wih_f_ref, whh_f_ref, b_f_ref,
                       wih_b_ref, whh_b_ref, b_b_ref,
                       wcls_ref, bcls_ref,
                       logits_ref, hf_ref, hb_ref, gx_f_ref, gx_b_ref,
                       *, hidden):
    """Last bidirectional layer with the classifier fused into its epilogue.

    wcls_ref : [2H, C_pad] bf16, bcls_ref: [1, C_pad] f32 (lane-padded to 128)
    logits_ref: [T, B, C_pad] f32
    """
    _bilstm_recurrence(x_ref, wih_f_ref, whh_f_ref, b_f_ref,
                       wih_b_ref, whh_b_ref, b_b_ref,
                       hf_ref, hb_ref, gx_f_ref, gx_b_ref, hidden)
    T, B, H = hf_ref.shape
    feats = jnp.concatenate(
        [hf_ref[...], hb_ref[...]], axis=-1).reshape(T * B, 2 * H)
    logits = (
        jnp.dot(feats.astype(jnp.bfloat16), wcls_ref[...],
                preferred_element_type=jnp.float32)
        + bcls_ref[...]
    )
    logits_ref[...] = logits.reshape(T, B, logits_ref.shape[2])


# ----------------------------------------------------------------------------
# pallas_call wrappers
# ----------------------------------------------------------------------------
def _lstm_scratch(T, B, H):
    return [
        pltpu.VMEM((T, B, H), jnp.float32),       # fwd hidden states
        pltpu.VMEM((T, B, H), jnp.float32),       # bwd hidden states
        pltpu.VMEM((T, B, 4 * H), jnp.float32),   # hoisted fwd input proj
        pltpu.VMEM((T, B, 4 * H), jnp.float32),   # hoisted bwd input proj
    ]


def bilstm_layer(x_tbd, p):
    """x_tbd: [T, B_pad, D_in] -> [T, B_pad, 2H]."""
    T, B, _ = x_tbd.shape
    H = p["whh_f"].shape[0]
    kernel = functools.partial(_bilstm_layer_kernel, hidden=H)
    return pl.pallas_call(
        kernel,
        out_shape=jax.ShapeDtypeStruct((T, B, 2 * H), jnp.float32),
        in_specs=[pl.BlockSpec(memory_space=pltpu.MemorySpace.VMEM)] * 7,
        out_specs=pl.BlockSpec(memory_space=pltpu.MemorySpace.VMEM),
        scratch_shapes=_lstm_scratch(T, B, H),
    )(x_tbd, p["wih_f"], p["whh_f"], p["b_f"],
      p["wih_b"], p["whh_b"], p["b_b"])


def bilstm_cls_layer(x_tbd, p, w_cls_t, b_cls):
    """x_tbd: [T, B_pad, D_in] -> logits [T, B_pad, C_pad]."""
    T, B, _ = x_tbd.shape
    H = p["whh_f"].shape[0]
    C_pad = w_cls_t.shape[1]
    kernel = functools.partial(_bilstm_cls_kernel, hidden=H)
    return pl.pallas_call(
        kernel,
        out_shape=jax.ShapeDtypeStruct((T, B, C_pad), jnp.float32),
        in_specs=[pl.BlockSpec(memory_space=pltpu.MemorySpace.VMEM)] * 9,
        out_specs=pl.BlockSpec(memory_space=pltpu.MemorySpace.VMEM),
        scratch_shapes=_lstm_scratch(T, B, H),
    )(x_tbd, p["wih_f"], p["whh_f"], p["b_f"],
      p["wih_b"], p["whh_b"], p["b_b"], w_cls_t, b_cls)


# ----------------------------------------------------------------------------
# Parameters (shapes match TorchModel; PyTorch-style uniform init)
# ----------------------------------------------------------------------------
def init_params(key, *, vocab_size, hidden_size, class_num, num_layers):
    H = hidden_size
    vocab_plus = vocab_size + 1          # matches config['vocab_size'] + 1
    keys = jax.random.split(key, 1 + 8 * num_layers + 2)
    k_iter = iter(keys)

    # nn.Embedding default init N(0,1); padding_idx=0 row zeroed.
    # (Inference-only emulation of padding_idx.)
    emb = jax.random.normal(next(k_iter), (vocab_plus, H), jnp.float32)
    emb = emb.at[0].set(0.0)

    bound = 1.0 / (H ** 0.5)             # PyTorch LSTM default uniform bound

    def uni(k, shape, b):
        return jax.random.uniform(k, shape, jnp.float32, -b, b)

    lstm = []
    for layer in range(num_layers):
        d_in = H if layer == 0 else 2 * H
        layer_p = {}
        for d in ("f", "b"):
            w_ih = uni(next(k_iter), (4 * H, d_in), bound)
            w_hh = uni(next(k_iter), (4 * H, H), bound)
            b_ih = uni(next(k_iter), (4 * H,), bound)
            b_hh = uni(next(k_iter), (4 * H,), bound)
            # Pre-transpose so the kernel does x @ W; store bf16 for the MXU.
            layer_p["wih_" + d] = jnp.asarray(w_ih.T, jnp.bfloat16)
            layer_p["whh_" + d] = jnp.asarray(w_hh.T, jnp.bfloat16)
            layer_p["b_" + d] = jnp.asarray(
                (b_ih + b_hh).reshape(1, 4 * H), jnp.float32)
        lstm.append(layer_p)

    # Classifier Linear(2H, class_num), class dim padded to 128 lanes.
    C_pad = 128 * pl.cdiv(class_num, 128)
    cbound = 1.0 / ((2 * H) ** 0.5)
    w_cls = uni(next(k_iter), (class_num, 2 * H), cbound)
    b_cls = uni(next(k_iter), (class_num,), cbound)
    w_cls_t = jnp.zeros((2 * H, C_pad), jnp.float32).at[:, :class_num].set(w_cls.T)
    b_cls_p = jnp.zeros((1, C_pad), jnp.float32).at[0, :class_num].set(b_cls)

    return {
        "embedding": emb,
        "lstm": lstm,
        "classify_w_t": jnp.asarray(w_cls_t, jnp.bfloat16),
        "classify_b": b_cls_p,
    }


# ----------------------------------------------------------------------------
# Forward pass (LSTM branch, target=None, use_crf=False)
# ----------------------------------------------------------------------------
def torch_model_forward(params, tokens, *, class_num):
    """tokens: [B, T] int32 -> predict logits [B, T, class_num]."""
    B, T = tokens.shape
    B_pad = max(8, ((B + 7) // 8) * 8)            # sublane-align the batch
    if B_pad != B:
        tokens = jnp.pad(tokens, ((0, B_pad - B), (0, 0)))  # pad with idx 0

    # Embedding gather straight into time-major layout [T, B_pad, H].
    x_tbd = jnp.take(params["embedding"], tokens.T, axis=0)

    lstm_layers = params["lstm"]
    for layer_p in lstm_layers[:-1]:
        x_tbd = bilstm_layer(x_tbd, layer_p)

    # Last layer: recurrence + fused classifier -> [T, B_pad, C_pad]
    logits_p = bilstm_cls_layer(
        x_tbd, lstm_layers[-1], params["classify_w_t"], params["classify_b"])

    # Back to batch-major, strip batch / class-lane padding.
    return jnp.transpose(logits_p, (1, 0, 2))[:B, :, :class_num]


if __name__ == "__main__":
    config = {
        "hidden_size": 32,
        "vocab_size": 20,
        "max_length": 8,
        "class_num": 5,
        "num_layers": 2,
        "model": "LSTM",
        "use_crf": False,
    }

    key = jax.random.PRNGKey(0)
    pkey, dkey = jax.random.split(key)

    params = init_params(
        pkey,
        vocab_size=config["vocab_size"],
        hidden_size=config["hidden_size"],
        class_num=config["class_num"],
        num_layers=config["num_layers"],
    )

    B, T = 2, config["max_length"]
    tokens = jax.random.randint(
        dkey, (B, T), minval=0, maxval=config["vocab_size"] + 1, dtype=jnp.int32)

    forward = jax.jit(functools.partial(
        torch_model_forward, class_num=config["class_num"]))

    predict = forward(params, tokens)
    predict = jax.block_until_ready(predict)

    assert predict.shape == (B, T, config["class_num"])
    assert predict.dtype == jnp.float32
    assert bool(jnp.all(jnp.isfinite(predict)))
    print("KERNEL_OK")
</pallas_src>

<mosaic_0001>
module attributes {stable_mosaic.version = 11 : i64} {
  func.func @_bilstm_layer_kernel(%arg0: memref<8x8x32xf32, #tpu.memory_space<vmem>>, %arg1: memref<32x128xbf16, #tpu.memory_space<vmem>>, %arg2: memref<32x128xbf16, #tpu.memory_space<vmem>>, %arg3: memref<1x128xf32, #tpu.memory_space<vmem>>, %arg4: memref<32x128xbf16, #tpu.memory_space<vmem>>, %arg5: memref<32x128xbf16, #tpu.memory_space<vmem>>, %arg6: memref<1x128xf32, #tpu.memory_space<vmem>>, %arg7: memref<8x8x64xf32, #tpu.memory_space<vmem>>, %arg8: memref<8x8x32xf32, #tpu.memory_space<vmem>>, %arg9: memref<8x8x32xf32, #tpu.memory_space<vmem>>, %arg10: memref<8x8x128xf32, #tpu.memory_space<vmem>>, %arg11: memref<8x8x128xf32, #tpu.memory_space<vmem>>) attributes {dimension_semantics = [], scalar_prefetch = 0 : i64, scratch_operands = 4 : i64, tpu.core_type = #tpu.core_type<tc>} {
    %c0 = arith.constant 0 : index
    %c0_0 = arith.constant 0 : index
    %c0_1 = arith.constant 0 : index
    %0 = vector.load %arg0[%c0, %c0_0, %c0_1] : memref<8x8x32xf32, #tpu.memory_space<vmem>>, vector<8x8x32xf32>
    %1 = vector.shape_cast %0 : vector<8x8x32xf32> to vector<64x32xf32>
    %2 = arith.truncf %1 : vector<64x32xf32> to vector<64x32xbf16>
    %c0_2 = arith.constant 0 : index
    %c0_3 = arith.constant 0 : index
    %3 = vector.load %arg1[%c0_2, %c0_3] : memref<32x128xbf16, #tpu.memory_space<vmem>>, vector<32x128xbf16>
    %cst = arith.constant dense<0.000000e+00> : vector<64x128xf32>
    %4 = tpu.matmul %2, %3, %cst {dimension_numbers = #tpu.dot_dimension_numbers<[1], [0], [0], [1], [0, 0, 1, 1], [], []>} : vector<64x32xbf16>, vector<32x128xbf16>, vector<64x128xf32> -> vector<64x128xf32>
    %c0_4 = arith.constant 0 : index
    %c0_5 = arith.constant 0 : index
    %5 = vector.load %arg3[%c0_4, %c0_5] : memref<1x128xf32, #tpu.memory_space<vmem>>, vector<1x128xf32>
    %6 = vector.broadcast %5 : vector<1x128xf32> to vector<64x128xf32>
    %7 = arith.addf %4, %6 : vector<64x128xf32>
    %8 = vector.shape_cast %7 : vector<64x128xf32> to vector<8x8x128xf32>
    %c0_6 = arith.constant 0 : index
    %c0_7 = arith.constant 0 : index
    %c0_8 = arith.constant 0 : index
    %9 = vector.load %arg10[%c0_6, %c0_7, %c0_8] : memref<8x8x128xf32, #tpu.memory_space<vmem>>, vector<8x8x128xf32>
    tpu.vector_store %arg10[%c0_6, %c0_7, %c0_8], %8 {strides = array<i32>} : memref<8x8x128xf32, #tpu.memory_space<vmem>>, vector<8x8x128xf32>,
    %c0_9 = arith.constant 0 : index
    %c0_10 = arith.constant 0 : index
    %10 = vector.load %arg4[%c0_9, %c0_10] : memref<32x128xbf16, #tpu.memory_space<vmem>>, vector<32x128xbf16>
    %cst_11 = arith.constant dense<0.000000e+00> : vector<64x128xf32>
    %11 = tpu.matmul %2, %10, %cst_11 {dimension_numbers = #tpu.dot_dimension_numbers<[1], [0], [0], [1], [0, 0, 1, 1], [], []>} : vector<64x32xbf16>, vector<32x128xbf16>, vector<64x128xf32> -> vector<64x128xf32>
    %c0_12 = arith.constant 0 : index
    %c0_13 = arith.constant 0 : index
    %12 = vector.load %arg6[%c0_12, %c0_13] : memref<1x128xf32, #tpu.memory_space<vmem>>, vector<1x128xf32>
    %13 = vector.broadcast %12 : vector<1x128xf32> to vector<64x128xf32>
    %14 = arith.addf %11, %13 : vector<64x128xf32>
    %15 = vector.shape_cast %14 : vector<64x128xf32> to vector<8x8x128xf32>
    %c0_14 = arith.constant 0 : index
    %c0_15 = arith.constant 0 : index
    %c0_16 = arith.constant 0 : index
    %16 = vector.load %arg11[%c0_14, %c0_15, %c0_16] : memref<8x8x128xf32, #tpu.memory_space<vmem>>, vector<8x8x128xf32>
    tpu.vector_store %arg11[%c0_14, %c0_15, %c0_16], %15 {strides = array<i32>} : memref<8x8x128xf32, #tpu.memory_space<vmem>>, vector<8x8x128xf32>,
    %c0_17 = arith.constant 0 : index
    %c0_18 = arith.constant 0 : index
    %17 = vector.load %arg2[%c0_17, %c0_18] : memref<32x128xbf16, #tpu.memory_space<vmem>>, vector<32x128xbf16>
    %c0_19 = arith.constant 0 : index
    %c0_20 = arith.constant 0 : index
    %18 = vector.load %arg5[%c0_19, %c0_20] : memref<32x128xbf16, #tpu.memory_space<vmem>>, vector<32x128xbf16>
    %cst_21 = arith.constant 0.000000e+00 : f32
    %19 = vector.broadcast %cst_21 : f32 to vector<8x32xf32>
    %c0_i32 = arith.constant 0 : i32
    %c7_i32 = arith.constant 7 : i32
    %20 = arith.subi %c7_i32, %c0_i32 : i32
    %21 = arith.index_cast %c0_i32 : i32 to index
    %c0_22 = arith.constant 0 : index
    %c0_23 = arith.constant 0 : index
    %22 = vector.load %arg10[%21, %c0_22, %c0_23] : memref<8x8x128xf32, #tpu.memory_space<vmem>>, vector<1x8x128xf32>
    %23 = vector.shape_cast %22 : vector<1x8x128xf32> to vector<8x128xf32>
    %24 = arith.truncf %19 : vector<8x32xf32> to vector<8x32xbf16>
    %cst_24 = arith.constant dense<0.000000e+00> : vector<8x128xf32>
    %25 = tpu.matmul %24, %17, %cst_24 {dimension_numbers = #tpu.dot_dimension_numbers<[1], [0], [0], [1], [0, 0, 1, 1], [], []>} : vector<8x32xbf16>, vector<32x128xbf16>, vector<8x128xf32> -> vector<8x128xf32>
    %26 = arith.addf %23, %25 : vector<8x128xf32>
    %27 = arith.index_cast %20 : i32 to index
    %c0_25 = arith.constant 0 : index
    %c0_26 = arith.constant 0 : index
    %28 = vector.load %arg11[%27, %c0_25, %c0_26] : memref<8x8x128xf32, #tpu.memory_space<vmem>>, vector<1x8x128xf32>
    %29 = vector.shape_cast %28 : vector<1x8x128xf32> to vector<8x128xf32>
    %30 = arith.truncf %19 : vector<8x32xf32> to vector<8x32xbf16>
    %cst_27 = arith.constant dense<0.000000e+00> : vector<8x128xf32>
    %31 = tpu.matmul %30, %18, %cst_27 {dimension_numbers = #tpu.dot_dimension_numbers<[1], [0], [0], [1], [0, 0, 1, 1], [], []>} : vector<8x32xbf16>, vector<32x128xbf16>, vector<8x128xf32> -> vector<8x128xf32>
    %32 = arith.addf %29, %31 : vector<8x128xf32>
    %33 = vector.extract_strided_slice %26 {offsets = [0, 0], sizes = [8, 32], strides = [1, 1]} : vector<8x128xf32> to vector<8x32xf32>
    %34 = arith.negf %33 : vector<8x32xf32>
    %35 = math.exp %34 : vector<8x32xf32>
    %cst_28 = arith.constant 1.000000e+00 : f32
    %36 = vector.broadcast %cst_28 : f32 to vector<8x32xf32>
    %37 = arith.addf %36, %35 : vector<8x32xf32>
    %38 = arith.divf %36, %37 : vector<8x32xf32>
    %39 = vector.extract_strided_slice %26 {offsets = [0, 32], sizes = [8, 32], strides = [1, 1]} : vector<8x128xf32> to vector<8x32xf32>
    %40 = arith.negf %39 : vector<8x32xf32>
    %41 = math.exp %40 : vector<8x32xf32>
    %cst_29 = arith.constant 1.000000e+00 : f32
    %42 = vector.broadcast %cst_29 : f32 to vector<8x32xf32>
    %43 = arith.addf %42, %41 : vector<8x32xf32>
    %44 = arith.divf %42, %43 : vector<8x32xf32>
    %45 = vector.extract_strided_slice %26 {offsets = [0, 64], sizes = [8, 32], strides = [1, 1]} : vector<8x128xf32> to vector<8x32xf32>
    %46 = math.tanh %45 : vector<8x32xf32>
    %47 = vector.extract_strided_slice %26 {offsets = [0, 96], sizes = [8, 32], strides = [1, 1]} : vector<8x128xf32> to vector<8x32xf32>
    %48 = arith.negf %47 : vector<8x32xf32>
    %49 = math.exp %48 : vector<8x32xf32>
    %cst_30 = arith.constant 1.000000e+00 : f32
    %50 = vector.broadcast %cst_30 : f32 to vector<8x32xf32>
    %51 = arith.addf %50, %49 : vector<8x32xf32>
    %52 = arith.divf %50, %51 : vector<8x32xf32>
    %53 = arith.mulf %44, %19 : vector<8x32xf32>
    %54 = arith.mulf %38, %46 : vector<8x32xf32>
    %55 = arith.addf %53, %54 : vector<8x32xf32>
    %56 = math.tanh %55 : vector<8x32xf32>
    %57 = arith.mulf %52, %56 : vector<8x32xf32>
    %58 = vector.extract_strided_slice %32 {offsets = [0, 0], sizes = [8, 32], strides = [1, 1]} : vector<8x128xf32> to vector<8x32xf32>
    %59 = arith.negf %58 : vector<8x32xf32>
    %60 = math.exp %59 : vector<8x32xf32>
    %cst_31 = arith.constant 1.000000e+00 : f32
    %61 = vector.broadcast %cst_31 : f32 to vector<8x32xf32>
    %62 = arith.addf %61, %60 : vector<8x32xf32>
    %63 = arith.divf %61, %62 : vector<8x32xf32>
    %64 = vector.extract_strided_slice %32 {offsets = [0, 32], sizes = [8, 32], strides = [1, 1]} : vector<8x128xf32> to vector<8x32xf32>
    %65 = arith.negf %64 : vector<8x32xf32>
    %66 = math.exp %65 : vector<8x32xf32>
    %cst_32 = arith.constant 1.000000e+00 : f32
    %67 = vector.broadcast %cst_32 : f32 to vector<8x32xf32>
    %68 = arith.addf %67, %66 : vector<8x32xf32>
    %69 = arith.divf %67, %68 : vector<8x32xf32>
    %70 = vector.extract_strided_slice %32 {offsets = [0, 64], sizes = [8, 32], strides = [1, 1]} : vector<8x128xf32> to vector<8x32xf32>
    %71 = math.tanh %70 : vector<8x32xf32>
    %72 = vector.extract_strided_slice %32 {offsets = [0, 96], sizes = [8, 32], strides = [1, 1]} : vector<8x128xf32> to vector<8x32xf32>
    %73 = arith.negf %72 : vector<8x32xf32>
    %74 = math.exp %73 : vector<8x32xf32>
    %cst_33 = arith.constant 1.000000e+00 : f32
    %75 = vector.broadcast %cst_33 : f32 to vector<8x32xf32>
    %76 = arith.addf %75, %74 : vector<8x32xf32>
    %77 = arith.divf %75, %76 : vector<8x32xf32>
    %78 = arith.mulf %69, %19 : vector<8x32xf32>
    %79 = arith.mulf %63, %71 : vector<8x32xf32>
    %80 = arith.addf %78, %79 : vector<8x32xf32>
    %81 = math.tanh %80 : vector<8x32xf32>
    %82 = arith.mulf %77, %81 : vector<8x32xf32>
    %83 = arith.index_cast %c0_i32 : i32 to index
    %c0_34 = arith.constant 0 : index
    %c0_35 = arith.constant 0 : index
    %84 = vector.load %arg8[%83, %c0_34, %c0_35] : memref<8x8x32xf32, #tpu.memory_space<vmem>>, vector<1x8x32xf32>
    %85 = vector.shape_cast %84 : vector<1x8x32xf32> to vector<8x32xf32>
    %86 = vector.shape_cast %57 : vector<8x32xf32> to vector<1x8x32xf32>
    tpu.vector_store %arg8[%83, %c0_34, %c0_35], %86 {strides = array<i32>} : memref<8x8x32xf32, #tpu.memory_space<vmem>>, vector<1x8x32xf32>,
    %87 = arith.index_cast %20 : i32 to index
    %c0_36 = arith.constant 0 : index
    %c0_37 = arith.constant 0 : index
    %88 = vector.load %arg9[%87, %c0_36, %c0_37] : memref<8x8x32xf32, #tpu.memory_space<vmem>>, vector<1x8x32xf32>
    %89 = vector.shape_cast %88 : vector<1x8x32xf32> to vector<8x32xf32>
    %90 = vector.shape_cast %82 : vector<8x32xf32> to vector<1x8x32xf32>
    tpu.vector_store %arg9[%87, %c0_36, %c0_37], %90 {strides = array<i32>} : memref<8x8x32xf32, #tpu.memory_space<vmem>>, vector<1x8x32xf32>,
    %c1_i32 = arith.constant 1 : i32
    %c7_i32_38 = arith.constant 7 : i32
    %91 = arith.subi %c7_i32_38, %c1_i32 : i32
    %92 = arith.index_cast %c1_i32 : i32 to index
    %c0_39 = arith.constant 0 : index
    %c0_40 = arith.constant 0 : index
    %93 = vector.load %arg10[%92, %c0_39, %c0_40] : memref<8x8x128xf32, #tpu.memory_space<vmem>>, vector<1x8x128xf32>
    %94 = vector.shape_cast %93 : vector<1x8x128xf32> to vector<8x128xf32>
    %95 = arith.truncf %57 : vector<8x32xf32> to vector<8x32xbf16>
    %cst_41 = arith.constant dense<0.000000e+00> : vector<8x128xf32>
    %96 = tpu.matmul %95, %17, %cst_41 {dimension_numbers = #tpu.dot_dimension_numbers<[1], [0], [0], [1], [0, 0, 1, 1], [], []>} : vector<8x32xbf16>, vector<32x128xbf16>, vector<8x128xf32> -> vector<8x128xf32>
    %97 = arith.addf %94, %96 : vector<8x128xf32>
    %98 = arith.index_cast %91 : i32 to index
    %c0_42 = arith.constant 0 : index
    %c0_43 = arith.constant 0 : index
    %99 = vector.load %arg11[%98, %c0_42, %c0_43] : memref<8x8x128xf32, #tpu.memory_space<vmem>>, vector<1x8x128xf32>
    %100 = vector.shape_cast %99 : vector<1x8x128xf32> to vector<8x128xf32>
    %101 = arith.truncf %82 : vector<8x32xf32> to vector<8x32xbf16>
    %cst_44 = arith.constant dense<0.000000e+00> : vector<8x128xf32>
    %102 = tpu.matmul %101, %18, %cst_44 {dimension_numbers = #tpu.dot_dimension_numbers<[1], [0], [0], [1], [0, 0, 1, 1], [], []>} : vector<8x32xbf16>, vector<32x128xbf16>, vector<8x128xf32> -> vector<8x128xf32>
    %103 = arith.addf %100, %102 : vector<8x128xf32>
    %104 = vector.extract_strided_slice %97 {offsets = [0, 0], sizes = [8, 32], strides = [1, 1]} : vector<8x128xf32> to vector<8x32xf32>
    %105 = arith.negf %104 : vector<8x32xf32>
    %106 = math.exp %105 : vector<8x32xf32>
    %cst_45 = arith.constant 1.000000e+00 : f32
    %107 = vector.broadcast %cst_45 : f32 to vector<8x32xf32>
    %108 = arith.addf %107, %106 : vector<8x32xf32>
    %109 = arith.divf %107, %108 : vector<8x32xf32>
    %110 = vector.extract_strided_slice %97 {offsets = [0, 32], sizes = [8, 32], strides = [1, 1]} : vector<8x128xf32> to vector<8x32xf32>
    %111 = arith.negf %110 : vector<8x32xf32>
    %112 = math.exp %111 : vector<8x32xf32>
    %cst_46 = arith.constant 1.000000e+00 : f32
    %113 = vector.broadcast %cst_46 : f32 to vector<8x32xf32>
    %114 = arith.addf %113, %112 : vector<8x32xf32>
    %115 = arith.divf %113, %114 : vector<8x32xf32>
    %116 = vector.extract_strided_slice %97 {offsets = [0, 64], sizes = [8, 32], strides = [1, 1]} : vector<8x128xf32> to vector<8x32xf32>
    %117 = math.tanh %116 : vector<8x32xf32>
    %118 = vector.extract_strided_slice %97 {offsets = [0, 96], sizes = [8, 32], strides = [1, 1]} : vector<8x128xf32> to vector<8x32xf32>
    %119 = arith.negf %118 : vector<8x32xf32>
    %120 = math.exp %119 : vector<8x32xf32>
    %cst_47 = arith.constant 1.000000e+00 : f32
    %121 = vector.broadcast %cst_47 : f32 to vector<8x32xf32>
    %122 = arith.addf %121, %120 : vector<8x32xf32>
    %123 = arith.divf %121, %122 : vector<8x32xf32>
    %124 = arith.mulf %115, %55 : vector<8x32xf32>
    %125 = arith.mulf %109, %117 : vector<8x32xf32>
    %126 = arith.addf %124, %125 : vector<8x32xf32>
    %127 = math.tanh %126 : vector<8x32xf32>
    %128 = arith.mulf %123, %127 : vector<8x32xf32>
    %129 = vector.extract_strided_slice %103 {offsets = [0, 0], sizes = [8, 32], strides = [1, 1]} : vector<8x128xf32> to vector<8x32xf32>
    %130 = arith.negf %129 : vector<8x32xf32>
    %131 = math.exp %130 : vector<8x32xf32>
    %cst_48 = arith.constant 1.000000e+00 : f32
    %132 = vector.broadcast %cst_48 : f32 to vector<8x32xf32>
    %133 = arith.addf %132, %131 : vector<8x32xf32>
    %134 = arith.divf %132, %133 : vector<8x32xf32>
    %135 = vector.extract_strided_slice %103 {offsets = [0, 32], sizes = [8, 32], strides = [1, 1]} : vector<8x128xf32> to vector<8x32xf32>
    %136 = arith.negf %135 : vector<8x32xf32>
    %137 = math.exp %136 : vector<8x32xf32>
    %cst_49 = arith.constant 1.000000e+00 : f32
    %138 = vector.broadcast %cst_49 : f32 to vector<8x32xf32>
    %139 = arith.addf %138, %137 : vector<8x32xf32>
    %140 = arith.divf %138, %139 : vector<8x32xf32>
    %141 = vector.extract_strided_slice %103 {offsets = [0, 64], sizes = [8, 32], strides = [1, 1]} : vector<8x128xf32> to vector<8x32xf32>
    %142 = math.tanh %141 : vector<8x32xf32>
    %143 = vector.extract_strided_slice %103 {offsets = [0, 96], sizes = [8, 32], strides = [1, 1]} : vector<8x128xf32> to vector<8x32xf32>
    %144 = arith.negf %143 : vector<8x32xf32>
    %145 = math.exp %144 : vector<8x32xf32>
    %cst_50 = arith.constant 1.000000e+00 : f32
    %146 = vector.broadcast %cst_50 : f32 to vector<8x32xf32>
    %147 = arith.addf %146, %145 : vector<8x32xf32>
    %148 = arith.divf %146, %147 : vector<8x32xf32>
    %149 = arith.mulf %140, %80 : vector<8x32xf32>
    %150 = arith.mulf %134, %142 : vector<8x32xf32>
    %151 = arith.addf %149, %150 : vector<8x32xf32>
    %152 = math.tanh %151 : vector<8x32xf32>
    %153 = arith.mulf %148, %152 : vector<8x32xf32>
    %154 = arith.index_cast %c1_i32 : i32 to index
    %c0_51 = arith.constant 0 : index
    %c0_52 = arith.constant 0 : index
    %155 = vector.load %arg8[%154, %c0_51, %c0_52] : memref<8x8x32xf32, #tpu.memory_space<vmem>>, vector<1x8x32xf32>
    %156 = vector.shape_cast %155 : vector<1x8x32xf32> to vector<8x32xf32>
    %157 = vector.shape_cast %128 : vector<8x32xf32> to vector<1x8x32xf32>
    tpu.vector_store %arg8[%154, %c0_51, %c0_52], %157 {strides = array<i32>} : memref<8x8x32xf32, #tpu.memory_space<vmem>>, vector<1x8x32xf32>,
    %158 = arith.index_cast %91 : i32 to index
    %c0_53 = arith.constant 0 : index
    %c0_54 = arith.constant 0 : index
    %159 = vector.load %arg9[%158, %c0_53, %c0_54] : memref<8x8x32xf32, #tpu.memory_space<vmem>>, vector<1x8x32xf32>
    %160 = vector.shape_cast %159 : vector<1x8x32xf32> to vector<8x32xf32>
    %161 = vector.shape_cast %153 : vector<8x32xf32> to vector<1x8x32xf32>
    tpu.vector_store %arg9[%158, %c0_53, %c0_54], %161 {strides = array<i32>} : memref<8x8x32xf32, #tpu.memory_space<vmem>>, vector<1x8x32xf32>,
    %c2_i32 = arith.constant 2 : i32
    %c7_i32_55 = arith.constant 7 : i32
    %162 = arith.subi %c7_i32_55, %c2_i32 : i32
    %163 = arith.index_cast %c2_i32 : i32 to index
    %c0_56 = arith.constant 0 : index
    %c0_57 = arith.constant 0 : index
    %164 = vector.load %arg10[%163, %c0_56, %c0_57] : memref<8x8x128xf32, #tpu.memory_space<vmem>>, vector<1x8x128xf32>
    %165 = vector.shape_cast %164 : vector<1x8x128xf32> to vector<8x128xf32>
    %166 = arith.truncf %128 : vector<8x32xf32> to vector<8x32xbf16>
    %cst_58 = arith.constant dense<0.000000e+00> : vector<8x128xf32>
    %167 = tpu.matmul %166, %17, %cst_58 {dimension_numbers = #tpu.dot_dimension_numbers<[1], [0], [0], [1], [0, 0, 1, 1], [], []>} : vector<8x32xbf16>, vector<32x128xbf16>, vector<8x128xf32> -> vector<8x128xf32>
    %168 = arith.addf %165, %167 : vector<8x128xf32>
    %169 = arith.index_cast %162 : i32 to index
    %c0_59 = arith.constant 0 : index
    %c0_60 = arith.constant 0 : index
    %170 = vector.load %arg11[%169, %c0_59, %c0_60] : memref<8x8x128xf32, #tpu.memory_space<vmem>>, vector<1x8x128xf32>
    %171 = vector.shape_cast %170 : vector<1x8x128xf32> to vector<8x128xf32>
    %172 = arith.truncf %153 : vector<8x32xf32> to vector<8x32xbf16>
    %cst_61 = arith.constant dense<0.000000e+00> : vector<8x128xf32>
    %173 = tpu.matmul %172, %18, %cst_61 {dimension_numbers = #tpu.dot_dimension_numbers<[1], [0], [0], [1], [0, 0, 1, 1], [], []>} : vector<8x32xbf16>, vector<32x128xbf16>, vector<8x128xf32> -> vector<8x128xf32>
    %174 = arith.addf %171, %173 : vector<8x128xf32>
    %175 = vector.extract_strided_slice %168 {offsets = [0, 0], sizes = [8, 32], strides = [1, 1]} : vector<8x128xf32> to vector<8x32xf32>
    %176 = arith.negf %175 : vector<8x32xf32>
    %177 = math.exp %176 : vector<8x32xf32>
    %cst_62 = arith.constant 1.000000e+00 : f32
    %178 = vector.broadcast %cst_62 : f32 to vector<8x32xf32>
    %179 = arith.addf %178, %177 : vector<8x32xf32>
    %180 = arith.divf %178, %179 : vector<8x32xf32>
    %181 = vector.extract_strided_slice %168 {offsets = [0, 32], sizes = [8, 32], strides = [1, 1]} : vector<8x128xf32> to vector<8x32xf32>
    %182 = arith.negf %181 : vector<8x32xf32>
    %183 = math.exp %182 : vector<8x32xf32>
    %cst_63 = arith.constant 1.000000e+00 : f32
    %184 = vector.broadcast %cst_63 : f32 to vector<8x32xf32>
    %185 = arith.addf %184, %183 : vector<8x32xf32>
    %186 = arith.divf %184, %185 : vector<8x32xf32>
    %187 = vector.extract_strided_slice %168 {offsets = [0, 64], sizes = [8, 32], strides = [1, 1]} : vector<8x128xf32> to vector<8x32xf32>
    %188 = math.tanh %187 : vector<8x32xf32>
    %189 = vector.extract_strided_slice %168 {offsets = [0, 96], sizes = [8, 32], strides = [1, 1]} : vector<8x128xf32> to vector<8x32xf32>
    %190 = arith.negf %189 : vector<8x32xf32>
    %191 = math.exp %190 : vector<8x32xf32>
    %cst_64 = arith.constant 1.000000e+00 : f32
    %192 = vector.broadcast %cst_64 : f32 to vector<8x32xf32>
    %193 = arith.addf %192, %191 : vector<8x32xf32>
    %194 = arith.divf %192, %193 : vector<8x32xf32>
    %195 = arith.mulf %186, %126 : vector<8x32xf32>
    %196 = arith.mulf %180, %188 : vector<8x32xf32>
    %197 = arith.addf %195, %196 : vector<8x32xf32>
    %198 = math.tanh %197 : vector<8x32xf32>
    %199 = arith.mulf %194, %198 : vector<8x32xf32>
    %200 = vector.extract_strided_slice %174 {offsets = [0, 0], sizes = [8, 32], strides = [1, 1]} : vector<8x128xf32> to vector<8x32xf32>
    %201 = arith.negf %200 : vector<8x32xf32>
    %202 = math.exp %201 : vector<8x32xf32>
    %cst_65 = arith.constant 1.000000e+00 : f32
    %203 = vector.broadcast %cst_65 : f32 to vector<8x32xf32>
    %204 = arith.addf %203, %202 : vector<8x32xf32>
    %205 = arith.divf %203, %204 : vector<8x32xf32>
    %206 = vector.extract_strided_slice %174 {offsets = [0, 32], sizes = [8, 32], strides = [1, 1]} : vector<8x128xf32> to vector<8x32xf32>
    %207 = arith.negf %206 : vector<8x32xf32>
    %208 = math.exp %207 : vector<8x32xf32>
    %cst_66 = arith.constant 1.000000e+00 : f32
    %209 = vector.broadcast %cst_66 : f32 to vector<8x32xf32>
    %210 = arith.addf %209, %208 : vector<8x32xf32>
    %211 = arith.divf %209, %210 : vector<8x32xf32>
    %212 = vector.extract_strided_slice %174 {offsets = [0, 64], sizes = [8, 32], strides = [1, 1]} : vector<8x128xf32> to vector<8x32xf32>
    %213 = math.tanh %212 : vector<8x32xf32>
    %214 = vector.extract_strided_slice %174 {offsets = [0, 96], sizes = [8, 32], strides = [1, 1]} : vector<8x128xf32> to vector<8x32xf32>
    %215 = arith.negf %214 : vector<8x32xf32>
    %216 = math.exp %215 : vector<8x32xf32>
    %cst_67 = arith.constant 1.000000e+00 : f32
    %217 = vector.broadcast %cst_67 : f32 to vector<8x32xf32>
    %218 = arith.addf %217, %216 : vector<8x32xf32>
    %219 = arith.divf %217, %218 : vector<8x32xf32>
    %220 = arith.mulf %211, %151 : vector<8x32xf32>
    %221 = arith.mulf %205, %213 : vector<8x32xf32>
    %222 = arith.addf %220, %221 : vector<8x32xf32>
    %223 = math.tanh %222 : vector<8x32xf32>
    %224 = arith.mulf %219, %223 : vector<8x32xf32>
    %225 = arith.index_cast %c2_i32 : i32 to index
    %c0_68 = arith.constant 0 : index
    %c0_69 = arith.constant 0 : index
    %226 = vector.load %arg8[%225, %c0_68, %c0_69] : memref<8x8x32xf32, #tpu.memory_space<vmem>>, vector<1x8x32xf32>
    %227 = vector.shape_cast %226 : vector<1x8x32xf32> to vector<8x32xf32>
    %228 = vector.shape_cast %199 : vector<8x32xf32> to vector<1x8x32xf32>
    tpu.vector_store %arg8[%225, %c0_68, %c0_69], %228 {strides = array<i32>} : memref<8x8x32xf32, #tpu.memory_space<vmem>>, vector<1x8x32xf32>,
    %229 = arith.index_cast %162 : i32 to index
    %c0_70 = arith.constant 0 : index
    %c0_71 = arith.constant 0 : index
    %230 = vector.load %arg9[%229, %c0_70, %c0_71] : memref<8x8x32xf32, #tpu.memory_space<vmem>>, vector<1x8x32xf32>
    %231 = vector.shape_cast %230 : vector<1x8x32xf32> to vector<8x32xf32>
    %232 = vector.shape_cast %224 : vector<8x32xf32> to vector<1x8x32xf32>
    tpu.vector_store %arg9[%229, %c0_70, %c0_71], %232 {strides = array<i32>} : memref<8x8x32xf32, #tpu.memory_space<vmem>>, vector<1x8x32xf32>,
    %c3_i32 = arith.constant 3 : i32
    %c7_i32_72 = arith.constant 7 : i32
    %233 = arith.subi %c7_i32_72, %c3_i32 : i32
    %234 = arith.index_cast %c3_i32 : i32 to index
    %c0_73 = arith.constant 0 : index
    %c0_74 = arith.constant 0 : index
    %235 = vector.load %arg10[%234, %c0_73, %c0_74] : memref<8x8x128xf32, #tpu.memory_space<vmem>>, vector<1x8x128xf32>
    %236 = vector.shape_cast %235 : vector<1x8x128xf32> to vector<8x128xf32>
    %237 = arith.truncf %199 : vector<8x32xf32> to vector<8x32xbf16>
    %cst_75 = arith.constant dense<0.000000e+00> : vector<8x128xf32>
    %238 = tpu.matmul %237, %17, %cst_75 {dimension_numbers = #tpu.dot_dimension_numbers<[1], [0], [0], [1], [0, 0, 1, 1], [], []>} : vector<8x32xbf16>, vector<32x128xbf16>, vector<8x128xf32> -> vector<8x128xf32>
    %239 = arith.addf %236, %238 : vector<8x128xf32>
    %240 = arith.index_cast %233 : i32 to index
    %c0_76 = arith.constant 0 : index
    %c0_77 = arith.constant 0 : index
    %241 = vector.load %arg11[%240, %c0_76, %c0_77] : memref<8x8x128xf32, #tpu.memory_space<vmem>>, vector<1x8x128xf32>
    %242 = vector.shape_cast %241 : vector<1x8x128xf32> to vector<8x128xf32>
    %243 = arith.truncf %224 : vector<8x32xf32> to vector<8x32xbf16>
    %cst_78 = arith.constant dense<0.000000e+00> : vector<8x128xf32>
    %244 = tpu.matmul %243, %18, %cst_78 {dimension_numbers = #tpu.dot_dimension_numbers<[1], [0], [0], [1], [0, 0, 1, 1], [], []>} : vector<8x32xbf16>, vector<32x128xbf16>, vector<8x128xf32> -> vector<8x128xf32>
    %245 = arith.addf %242, %244 : vector<8x128xf32>
    %246 = vector.extract_strided_slice %239 {offsets = [0, 0], sizes = [8, 32], strides = [1, 1]} : vector<8x128xf32> to vector<8x32xf32>
    %247 = arith.negf %246 : vector<8x32xf32>
    %248 = math.exp %247 : vector<8x32xf32>
    %cst_79 = arith.constant 1.000000e+00 : f32
    %249 = vector.broadcast %cst_79 : f32 to vector<8x32xf32>
    %250 = arith.addf %249, %248 : vector<8x32xf32>
    %251 = arith.divf %249, %250 : vector<8x32xf32>
    %252 = vector.extract_strided_slice %239 {offsets = [0, 32], sizes = [8, 32], strides = [1, 1]} : vector<8x128xf32> to vector<8x32xf32>
    %253 = arith.negf %252 : vector<8x32xf32>
    %254 = math.exp %253 : vector<8x32xf32>
    %cst_80 = arith.constant 1.000000e+00 : f32
    %255 = vector.broadcast %cst_80 : f32 to vector<8x32xf32>
    %256 = arith.addf %255, %254 : vector<8x32xf32>
    %257 = arith.divf %255, %256 : vector<8x32xf32>
    %258 = vector.extract_strided_slice %239 {offsets = [0, 64], sizes = [8, 32], strides = [1, 1]} : vector<8x128xf32> to vector<8x32xf32>
    %259 = math.tanh %258 : vector<8x32xf32>
    %260 = vector.extract_strided_slice %239 {offsets = [0, 96], sizes = [8, 32], strides = [1, 1]} : vector<8x128xf32> to vector<8x32xf32>
    %261 = arith.negf %260 : vector<8x32xf32>
    %262 = math.exp %261 : vector<8x32xf32>
    %cst_81 = arith.constant 1.000000e+00 : f32
    %263 = vector.broadcast %cst_81 : f32 to vector<8x32xf32>
    %264 = arith.addf %263, %262 : vector<8x32xf32>
    %265 = arith.divf %263, %264 : vector<8x32xf32>
    %266 = arith.mulf %257, %197 : vector<8x32xf32>
    %267 = arith.mulf %251, %259 : vector<8x32xf32>
    %268 = arith.addf %266, %267 : vector<8x32xf32>
    %269 = math.tanh %268 : vector<8x32xf32>
    %270 = arith.mulf %265, %269 : vector<8x32xf32>
    %271 = vector.extract_strided_slice %245 {offsets = [0, 0], sizes = [8, 32], strides = [1, 1]} : vector<8x128xf32> to vector<8x32xf32>
    %272 = arith.negf %271 : vector<8x32xf32>
    %273 = math.exp %272 : vector<8x32xf32>
    %cst_82 = arith.constant 1.000000e+00 : f32
    %274 = vector.broadcast %cst_82 : f32 to vector<8x32xf32>
    %275 = arith.addf %274, %273 : vector<8x32xf32>
    %276 = arith.divf %274, %275 : vector<8x32xf32>
    %277 = vector.extract_strided_slice %245 {offsets = [0, 32], sizes = [8, 32], strides = [1, 1]} : vector<8x128xf32> to vector<8x32xf32>
    %278 = arith.negf %277 : vector<8x32xf32>
    %279 = math.exp %278 : vector<8x32xf32>
    %cst_83 = arith.constant 1.000000e+00 : f32
    %280 = vector.broadcast %cst_83 : f32 to vector<8x32xf32>
    %281 = arith.addf %280, %279 : vector<8x32xf32>
    %282 = arith.divf %280, %281 : vector<8x32xf32>
    %283 = vector.extract_strided_slice %245 {offsets = [0, 64], sizes = [8, 32], strides = [1, 1]} : vector<8x128xf32> to vector<8x32xf32>
    %284 = math.tanh %283 : vector<8x32xf32>
    %285 = vector.extract_strided_slice %245 {offsets = [0, 96], sizes = [8, 32], strides = [1, 1]} : vector<8x128xf32> to vector<8x32xf32>
    %286 = arith.negf %285 : vector<8x32xf32>
    %287 = math.exp %286 : vector<8x32xf32>
    %cst_84 = arith.constant 1.000000e+00 : f32
    %288 = vector.broadcast %cst_84 : f32 to vector<8x32xf32>
    %289 = arith.addf %288, %287 : vector<8x32xf32>
    %290 = arith.divf %288, %289 : vector<8x32xf32>
    %291 = arith.mulf %282, %222 : vector<8x32xf32>
    %292 = arith.mulf %276, %284 : vector<8x32xf32>
    %293 = arith.addf %291, %292 : vector<8x32xf32>
    %294 = math.tanh %293 : vector<8x32xf32>
    %295 = arith.mulf %290, %294 : vector<8x32xf32>
    %296 = arith.index_cast %c3_i32 : i32 to index
    %c0_85 = arith.constant 0 : index
    %c0_86 = arith.constant 0 : index
    %297 = vector.load %arg8[%296, %c0_85, %c0_86] : memref<8x8x32xf32, #tpu.memory_space<vmem>>, vector<1x8x32xf32>
    %298 = vector.shape_cast %297 : vector<1x8x32xf32> to vector<8x32xf32>
    %299 = vector.shape_cast %270 : vector<8x32xf32> to vector<1x8x32xf32>
    tpu.vector_store %arg8[%296, %c0_85, %c0_86], %299 {strides = array<i32>} : memref<8x8x32xf32, #tpu.memory_space<vmem>>, vector<1x8x32xf32>,
    %300 = arith.index_cast %233 : i32 to index
    %c0_87 = arith.constant 0 : index
    %c0_88 = arith.constant 0 : index
    %301 = vector.load %arg9[%300, %c0_87, %c0_88] : memref<8x8x32xf32, #tpu.memory_space<vmem>>, vector<1x8x32xf32>
    %302 = vector.shape_cast %301 : vector<1x8x32xf32> to vector<8x32xf32>
    %303 = vector.shape_cast %295 : vector<8x32xf32> to vector<1x8x32xf32>
    tpu.vector_store %arg9[%300, %c0_87, %c0_88], %303 {strides = array<i32>} : memref<8x8x32xf32, #tpu.memory_space<vmem>>, vector<1x8x32xf32>,
    %c4_i32 = arith.constant 4 : i32
    %c7_i32_89 = arith.constant 7 : i32
    %304 = arith.subi %c7_i32_89, %c4_i32 : i32
    %305 = arith.index_cast %c4_i32 : i32 to index
    %c0_90 = arith.constant 0 : index
    %c0_91 = arith.constant 0 : index
    %306 = vector.load %arg10[%305, %c0_90, %c0_91] : memref<8x8x128xf32, #tpu.memory_space<vmem>>, vector<1x8x128xf32>
    %307 = vector.shape_cast %306 : vector<1x8x128xf32> to vector<8x128xf32>
    %308 = arith.truncf %270 : vector<8x32xf32> to vector<8x32xbf16>
    %cst_92 = arith.constant dense<0.000000e+00> : vector<8x128xf32>
    %309 = tpu.matmul %308, %17, %cst_92 {dimension_numbers = #tpu.dot_dimension_numbers<[1], [0], [0], [1], [0, 0, 1, 1], [], []>} : vector<8x32xbf16>, vector<32x128xbf16>, vector<8x128xf32> -> vector<8x128xf32>
    %310 = arith.addf %307, %309 : vector<8x128xf32>
    %311 = arith.index_cast %304 : i32 to index
    %c0_93 = arith.constant 0 : index
    %c0_94 = arith.constant 0 : index
    %312 = vector.load %arg11[%311, %c0_93, %c0_94] : memref<8x8x128xf32, #tpu.memory_space<vmem>>, vector<1x8x128xf32>
    %313 = vector.shape_cast %312 : vector<1x8x128xf32> to vector<8x128xf32>
    %314 = arith.truncf %295 : vector<8x32xf32> to vector<8x32xbf16>
    %cst_95 = arith.constant dense<0.000000e+00> : vector<8x128xf32>
    %315 = tpu.matmul %314, %18, %cst_95 {dimension_numbers = #tpu.dot_dimension_numbers<[1], [0], [0], [1], [0, 0, 1, 1], [], []>} : vector<8x32xbf16>, vector<32x128xbf16>, vector<8x128xf32> -> vector<8x128xf32>
    %316 = arith.addf %313, %315 : vector<8x128xf32>
    %317 = vector.extract_strided_slice %310 {offsets = [0, 0], sizes = [8, 32], strides = [1, 1]} : vector<8x128xf32> to vector<8x32xf32>
    %318 = arith.negf %317 : vector<8x32xf32>
    %319 = math.exp %318 : vector<8x32xf32>
    %cst_96 = arith.constant 1.000000e+00 : f32
    %320 = vector.broadcast %cst_96 : f32 to vector<8x32xf32>
    %321 = arith.addf %320, %319 : vector<8x32xf32>
    %322 = arith.divf %320, %321 : vector<8x32xf32>
    %323 = vector.extract_strided_slice %310 {offsets = [0, 32], sizes = [8, 32], strides = [1, 1]} : vector<8x128xf32> to vector<8x32xf32>
    %324 = arith.negf %323 : vector<8x32xf32>
    %325 = math.exp %324 : vector<8x32xf32>
    %cst_97 = arith.constant 1.000000e+00 : f32
    %326 = vector.broadcast %cst_97 : f32 to vector<8x32xf32>
    %327 = arith.addf %326, %325 : vector<8x32xf32>
    %328 = arith.divf %326, %327 : vector<8x32xf32>
    %329 = vector.extract_strided_slice %310 {offsets = [0, 64], sizes = [8, 32], strides = [1, 1]} : vector<8x128xf32> to vector<8x32xf32>
    %330 = math.tanh %329 : vector<8x32xf32>
    %331 = vector.extract_strided_slice %310 {offsets = [0, 96], sizes = [8, 32], strides = [1, 1]} : vector<8x128xf32> to vector<8x32xf32>
    %332 = arith.negf %331 : vector<8x32xf32>
    %333 = math.exp %332 : vector<8x32xf32>
    %cst_98 = arith.constant 1.000000e+00 : f32
    %334 = vector.broadcast %cst_98 : f32 to vector<8x32xf32>
    %335 = arith.addf %334, %333 : vector<8x32xf32>
    %336 = arith.divf %334, %335 : vector<8x32xf32>
    %337 = arith.mulf %328, %268 : vector<8x32xf32>
    %338 = arith.mulf %322, %330 : vector<8x32xf32>
    %339 = arith.addf %337, %338 : vector<8x32xf32>
    %340 = math.tanh %339 : vector<8x32xf32>
    %341 = arith.mulf %336, %340 : vector<8x32xf32>
    %342 = vector.extract_strided_slice %316 {offsets = [0, 0], sizes = [8, 32], strides = [1, 1]} : vector<8x128xf32> to vector<8x32xf32>
    %343 = arith.negf %342 : vector<8x32xf32>
    %344 = math.exp %343 : vector<8x32xf32>
    %cst_99 = arith.constant 1.000000e+00 : f32
    %345 = vector.broadcast %cst_99 : f32 to vector<8x32xf32>
    %346 = arith.addf %345, %344 : vector<8x32xf32>
    %347 = arith.divf %345, %346 : vector<8x32xf32>
    %348 = vector.extract_strided_slice %316 {offsets = [0, 32], sizes = [8, 32], strides = [1, 1]} : vector<8x128xf32> to vector<8x32xf32>
    %349 = arith.negf %348 : vector<8x32xf32>
    %350 = math.exp %349 : vector<8x32xf32>
    %cst_100 = arith.constant 1.000000e+00 : f32
    %351 = vector.broadcast %cst_100 : f32 to vector<8x32xf32>
    %352 = arith.addf %351, %350 : vector<8x32xf32>
    %353 = arith.divf %351, %352 : vector<8x32xf32>
    %354 = vector.extract_strided_slice %316 {offsets = [0, 64], sizes = [8, 32], strides = [1, 1]} : vector<8x128xf32> to vector<8x32xf32>
    %355 = math.tanh %354 : vector<8x32xf32>
    %356 = vector.extract_strided_slice %316 {offsets = [0, 96], sizes = [8, 32], strides = [1, 1]} : vector<8x128xf32> to vector<8x32xf32>
    %357 = arith.negf %356 : vector<8x32xf32>
    %358 = math.exp %357 : vector<8x32xf32>
    %cst_101 = arith.constant 1.000000e+00 : f32
    %359 = vector.broadcast %cst_101 : f32 to vector<8x32xf32>
    %360 = arith.addf %359, %358 : vector<8x32xf32>
    %361 = arith.divf %359, %360 : vector<8x32xf32>
    %362 = arith.mulf %353, %293 : vector<8x32xf32>
    %363 = arith.mulf %347, %355 : vector<8x32xf32>
    %364 = arith.addf %362, %363 : vector<8x32xf32>
    %365 = math.tanh %364 : vector<8x32xf32>
    %366 = arith.mulf %361, %365 : vector<8x32xf32>
    %367 = arith.index_cast %c4_i32 : i32 to index
    %c0_102 = arith.constant 0 : index
    %c0_103 = arith.constant 0 : index
    %368 = vector.load %arg8[%367, %c0_102, %c0_103] : memref<8x8x32xf32, #tpu.memory_space<vmem>>, vector<1x8x32xf32>
    %369 = vector.shape_cast %368 : vector<1x8x32xf32> to vector<8x32xf32>
    %370 = vector.shape_cast %341 : vector<8x32xf32> to vector<1x8x32xf32>
    tpu.vector_store %arg8[%367, %c0_102, %c0_103], %370 {strides = array<i32>} : memref<8x8x32xf32, #tpu.memory_space<vmem>>, vector<1x8x32xf32>,
    %371 = arith.index_cast %304 : i32 to index
    %c0_104 = arith.constant 0 : index
    %c0_105 = arith.constant 0 : index
    %372 = vector.load %arg9[%371, %c0_104, %c0_105] : memref<8x8x32xf32, #tpu.memory_space<vmem>>, vector<1x8x32xf32>
    %373 = vector.shape_cast %372 : vector<1x8x32xf32> to vector<8x32xf32>
    %374 = vector.shape_cast %366 : vector<8x32xf32> to vector<1x8x32xf32>
    tpu.vector_store %arg9[%371, %c0_104, %c0_105], %374 {strides = array<i32>} : memref<8x8x32xf32, #tpu.memory_space<vmem>>, vector<1x8x32xf32>,
    %c5_i32 = arith.constant 5 : i32
    %c7_i32_106 = arith.constant 7 : i32
    %375 = arith.subi %c7_i32_106, %c5_i32 : i32
    %376 = arith.index_cast %c5_i32 : i32 to index
    %c0_107 = arith.constant 0 : index
    %c0_108 = arith.constant 0 : index
    %377 = vector.load %arg10[%376, %c0_107, %c0_108] : memref<8x8x128xf32, #tpu.memory_space<vmem>>, vector<1x8x128xf32>
    %378 = vector.shape_cast %377 : vector<1x8x128xf32> to vector<8x128xf32>
    %379 = arith.truncf %341 : vector<8x32xf32> to vector<8x32xbf16>
    %cst_109 = arith.constant dense<0.000000e+00> : vector<8x128xf32>
    %380 = tpu.matmul %379, %17, %cst_109 {dimension_numbers = #tpu.dot_dimension_numbers<[1], [0], [0], [1], [0, 0, 1, 1], [], []>} : vector<8x32xbf16>, vector<32x128xbf16>, vector<8x128xf32> -> vector<8x128xf32>
    %381 = arith.addf %378, %380 : vector<8x128xf32>
    %382 = arith.index_cast %375 : i32 to index
    %c0_110 = arith.constant 0 : index
    %c0_111 = arith.constant 0 : index
    %383 = vector.load %arg11[%382, %c0_110, %c0_111] : memref<8x8x128xf32, #tpu.memory_space<vmem>>, vector<1x8x128xf32>
    %384 = vector.shape_cast %383 : vector<1x8x128xf32> to vector<8x128xf32>
    %385 = arith.truncf %366 : vector<8x32xf32> to vector<8x32xbf16>
    %cst_112 = arith.constant dense<0.000000e+00> : vector<8x128xf32>
    %386 = tpu.matmul %385, %18, %cst_112 {dimension_numbers = #tpu.dot_dimension_numbers<[1], [0], [0], [1], [0, 0, 1, 1], [], []>} : vector<8x32xbf16>, vector<32x128xbf16>, vector<8x128xf32> -> vector<8x128xf32>
    %387 = arith.addf %384, %386 : vector<8x128xf32>
    %388 = vector.extract_strided_slice %381 {offsets = [0, 0], sizes = [8, 32], strides = [1, 1]} : vector<8x128xf32> to vector<8x32xf32>
    %389 = arith.negf %388 : vector<8x32xf32>
    %390 = math.exp %389 : vector<8x32xf32>
    %cst_113 = arith.constant 1.000000e+00 : f32
    %391 = vector.broadcast %cst_113 : f32 to vector<8x32xf32>
    %392 = arith.addf %391, %390 : vector<8x32xf32>
    %393 = arith.divf %391, %392 : vector<8x32xf32>
    %394 = vector.extract_strided_slice %381 {offsets = [0, 32], sizes = [8, 32], strides = [1, 1]} : vector<8x128xf32> to vector<8x32xf32>
    %395 = arith.negf %394 : vector<8x32xf32>
    %396 = math.exp %395 : vector<8x32xf32>
    %cst_114 = arith.constant 1.000000e+00 : f32
    %397 = vector.broadcast %cst_114 : f32 to vector<8x32xf32>
    %398 = arith.addf %397, %396 : vector<8x32xf32>
    %399 = arith.divf %397, %398 : vector<8x32xf32>
    %400 = vector.extract_strided_slice %381 {offsets = [0, 64], sizes = [8, 32], strides = [1, 1]} : vector<8x128xf32> to vector<8x32xf32>
    %401 = math.tanh %400 : vector<8x32xf32>
    %402 = vector.extract_strided_slice %381 {offsets = [0, 96], sizes = [8, 32], strides = [1, 1]} : vector<8x128xf32> to vector<8x32xf32>
    %403 = arith.negf %402 : vector<8x32xf32>
    %404 = math.exp %403 : vector<8x32xf32>
    %cst_115 = arith.constant 1.000000e+00 : f32
    %405 = vector.broadcast %cst_115 : f32 to vector<8x32xf32>
    %406 = arith.addf %405, %404 : vector<8x32xf32>
    %407 = arith.divf %405, %406 : vector<8x32xf32>
    %408 = arith.mulf %399, %339 : vector<8x32xf32>
    %409 = arith.mulf %393, %401 : vector<8x32xf32>
    %410 = arith.addf %408, %409 : vector<8x32xf32>
    %411 = math.tanh %410 : vector<8x32xf32>
    %412 = arith.mulf %407, %411 : vector<8x32xf32>
    %413 = vector.extract_strided_slice %387 {offsets = [0, 0], sizes = [8, 32], strides = [1, 1]} : vector<8x128xf32> to vector<8x32xf32>
    %414 = arith.negf %413 : vector<8x32xf32>
    %415 = math.exp %414 : vector<8x32xf32>
    %cst_116 = arith.constant 1.000000e+00 : f32
    %416 = vector.broadcast %cst_116 : f32 to vector<8x32xf32>
    %417 = arith.addf %416, %415 : vector<8x32xf32>
    %418 = arith.divf %416, %417 : vector<8x32xf32>
    %419 = vector.extract_strided_slice %387 {offsets = [0, 32], sizes = [8, 32], strides = [1, 1]} : vector<8x128xf32> to vector<8x32xf32>
    %420 = arith.negf %419 : vector<8x32xf32>
    %421 = math.exp %420 : vector<8x32xf32>
    %cst_117 = arith.constant 1.000000e+00 : f32
    %422 = vector.broadcast %cst_117 : f32 to vector<8x32xf32>
    %423 = arith.addf %422, %421 : vector<8x32xf32>
    %424 = arith.divf %422, %423 : vector<8x32xf32>
    %425 = vector.extract_strided_slice %387 {offsets = [0, 64], sizes = [8, 32], strides = [1, 1]} : vector<8x128xf32> to vector<8x32xf32>
    %426 = math.tanh %425 : vector<8x32xf32>
    %427 = vector.extract_strided_slice %387 {offsets = [0, 96], sizes = [8, 32], strides = [1, 1]} : vector<8x128xf32> to vector<8x32xf32>
    %428 = arith.negf %427 : vector<8x32xf32>
    %429 = math.exp %428 : vector<8x32xf32>
    %cst_118 = arith.constant 1.000000e+00 : f32
    %430 = vector.broadcast %cst_118 : f32 to vector<8x32xf32>
    %431 = arith.addf %430, %429 : vector<8x32xf32>
    %432 = arith.divf %430, %431 : vector<8x32xf32>
    %433 = arith.mulf %424, %364 : vector<8x32xf32>
    %434 = arith.mulf %418, %426 : vector<8x32xf32>
    %435 = arith.addf %433, %434 : vector<8x32xf32>
    %436 = math.tanh %435 : vector<8x32xf32>
    %437 = arith.mulf %432, %436 : vector<8x32xf32>
    %438 = arith.index_cast %c5_i32 : i32 to index
    %c0_119 = arith.constant 0 : index
    %c0_120 = arith.constant 0 : index
    %439 = vector.load %arg8[%438, %c0_119, %c0_120] : memref<8x8x32xf32, #tpu.memory_space<vmem>>, vector<1x8x32xf32>
    %440 = vector.shape_cast %439 : vector<1x8x32xf32> to vector<8x32xf32>
    %441 = vector.shape_cast %412 : vector<8x32xf32> to vector<1x8x32xf32>
    tpu.vector_store %arg8[%438, %c0_119, %c0_120], %441 {strides = array<i32>} : memref<8x8x32xf32, #tpu.memory_space<vmem>>, vector<1x8x32xf32>,
    %442 = arith.index_cast %375 : i32 to index
    %c0_121 = arith.constant 0 : index
    %c0_122 = arith.constant 0 : index
    %443 = vector.load %arg9[%442, %c0_121, %c0_122] : memref<8x8x32xf32, #tpu.memory_space<vmem>>, vector<1x8x32xf32>
    %444 = vector.shape_cast %443 : vector<1x8x32xf32> to vector<8x32xf32>
    %445 = vector.shape_cast %437 : vector<8x32xf32> to vector<1x8x32xf32>
    tpu.vector_store %arg9[%442, %c0_121, %c0_122], %445 {strides = array<i32>} : memref<8x8x32xf32, #tpu.memory_space<vmem>>, vector<1x8x32xf32>,
    %c6_i32 = arith.constant 6 : i32
    %c7_i32_123 = arith.constant 7 : i32
    %446 = arith.subi %c7_i32_123, %c6_i32 : i32
    %447 = arith.index_cast %c6_i32 : i32 to index
    %c0_124 = arith.constant 0 : index
    %c0_125 = arith.constant 0 : index
    %448 = vector.load %arg10[%447, %c0_124, %c0_125] : memref<8x8x128xf32, #tpu.memory_space<vmem>>, vector<1x8x128xf32>
    %449 = vector.shape_cast %448 : vector<1x8x128xf32> to vector<8x128xf32>
    %450 = arith.truncf %412 : vector<8x32xf32> to vector<8x32xbf16>
    %cst_126 = arith.constant dense<0.000000e+00> : vector<8x128xf32>
    %451 = tpu.matmul %450, %17, %cst_126 {dimension_numbers = #tpu.dot_dimension_numbers<[1], [0], [0], [1], [0, 0, 1, 1], [], []>} : vector<8x32xbf16>, vector<32x128xbf16>, vector<8x128xf32> -> vector<8x128xf32>
    %452 = arith.addf %449, %451 : vector<8x128xf32>
    %453 = arith.index_cast %446 : i32 to index
    %c0_127 = arith.constant 0 : index
    %c0_128 = arith.constant 0 : index
    %454 = vector.load %arg11[%453, %c0_127, %c0_128] : memref<8x8x128xf32, #tpu.memory_space<vmem>>, vector<1x8x128xf32>
    %455 = vector.shape_cast %454 : vector<1x8x128xf32> to vector<8x128xf32>
    %456 = arith.truncf %437 : vector<8x32xf32> to vector<8x32xbf16>
    %cst_129 = arith.constant dense<0.000000e+00> : vector<8x128xf32>
    %457 = tpu.matmul %456, %18, %cst_129 {dimension_numbers = #tpu.dot_dimension_numbers<[1], [0], [0], [1], [0, 0, 1, 1], [], []>} : vector<8x32xbf16>, vector<32x128xbf16>, vector<8x128xf32> -> vector<8x128xf32>
    %458 = arith.addf %455, %457 : vector<8x128xf32>
    %459 = vector.extract_strided_slice %452 {offsets = [0, 0], sizes = [8, 32], strides = [1, 1]} : vector<8x128xf32> to vector<8x32xf32>
    %460 = arith.negf %459 : vector<8x32xf32>
    %461 = math.exp %460 : vector<8x32xf32>
    %cst_130 = arith.constant 1.000000e+00 : f32
    %462 = vector.broadcast %cst_130 : f32 to vector<8x32xf32>
    %463 = arith.addf %462, %461 : vector<8x32xf32>
    %464 = arith.divf %462, %463 : vector<8x32xf32>
    %465 = vector.extract_strided_slice %452 {offsets = [0, 32], sizes = [8, 32], strides = [1, 1]} : vector<8x128xf32> to vector<8x32xf32>
    %466 = arith.negf %465 : vector<8x32xf32>
    %467 = math.exp %466 : vector<8x32xf32>
    %cst_131 = arith.constant 1.000000e+00 : f32
    %468 = vector.broadcast %cst_131 : f32 to vector<8x32xf32>
    %469 = arith.addf %468, %467 : vector<8x32xf32>
    %470 = arith.divf %468, %469 : vector<8x32xf32>
    %471 = vector.extract_strided_slice %452 {offsets = [0, 64], sizes = [8, 32], strides = [1, 1]} : vector<8x128xf32> to vector<8x32xf32>
    %472 = math.tanh %471 : vector<8x32xf32>
    %473 = vector.extract_strided_slice %452 {offsets = [0, 96], sizes = [8, 32], strides = [1, 1]} : vector<8x128xf32> to vector<8x32xf32>
    %474 = arith.negf %473 : vector<8x32xf32>
    %475 = math.exp %474 : vector<8x32xf32>
    %cst_132 = arith.constant 1.000000e+00 : f32
    %476 = vector.broadcast %cst_132 : f32 to vector<8x32xf32>
    %477 = arith.addf %476, %475 : vector<8x32xf32>
    %478 = arith.divf %476, %477 : vector<8x32xf32>
    %479 = arith.mulf %470, %410 : vector<8x32xf32>
    %480 = arith.mulf %464, %472 : vector<8x32xf32>
    %481 = arith.addf %479, %480 : vector<8x32xf32>
    %482 = math.tanh %481 : vector<8x32xf32>
    %483 = arith.mulf %478, %482 : vector<8x32xf32>
    %484 = vector.extract_strided_slice %458 {offsets = [0, 0], sizes = [8, 32], strides = [1, 1]} : vector<8x128xf32> to vector<8x32xf32>
    %485 = arith.negf %484 : vector<8x32xf32>
    %486 = math.exp %485 : vector<8x32xf32>
    %cst_133 = arith.constant 1.000000e+00 : f32
    %487 = vector.broadcast %cst_133 : f32 to vector<8x32xf32>
    %488 = arith.addf %487, %486 : vector<8x32xf32>
    %489 = arith.divf %487, %488 : vector<8x32xf32>
    %490 = vector.extract_strided_slice %458 {offsets = [0, 32], sizes = [8, 32], strides = [1, 1]} : vector<8x128xf32> to vector<8x32xf32>
    %491 = arith.negf %490 : vector<8x32xf32>
    %492 = math.exp %491 : vector<8x32xf32>
    %cst_134 = arith.constant 1.000000e+00 : f32
    %493 = vector.broadcast %cst_134 : f32 to vector<8x32xf32>
    %494 = arith.addf %493, %492 : vector<8x32xf32>
    %495 = arith.divf %493, %494 : vector<8x32xf32>
    %496 = vector.extract_strided_slice %458 {offsets = [0, 64], sizes = [8, 32], strides = [1, 1]} : vector<8x128xf32> to vector<8x32xf32>
    %497 = math.tanh %496 : vector<8x32xf32>
    %498 = vector.extract_strided_slice %458 {offsets = [0, 96], sizes = [8, 32], strides = [1, 1]} : vector<8x128xf32> to vector<8x32xf32>
    %499 = arith.negf %498 : vector<8x32xf32>
    %500 = math.exp %499 : vector<8x32xf32>
    %cst_135 = arith.constant 1.000000e+00 : f32
    %501 = vector.broadcast %cst_135 : f32 to vector<8x32xf32>
    %502 = arith.addf %501, %500 : vector<8x32xf32>
    %503 = arith.divf %501, %502 : vector<8x32xf32>
    %504 = arith.mulf %495, %435 : vector<8x32xf32>
    %505 = arith.mulf %489, %497 : vector<8x32xf32>
    %506 = arith.addf %504, %505 : vector<8x32xf32>
    %507 = math.tanh %506 : vector<8x32xf32>
    %508 = arith.mulf %503, %507 : vector<8x32xf32>
    %509 = arith.index_cast %c6_i32 : i32 to index
    %c0_136 = arith.constant 0 : index
    %c0_137 = arith.constant 0 : index
    %510 = vector.load %arg8[%509, %c0_136, %c0_137] : memref<8x8x32xf32, #tpu.memory_space<vmem>>, vector<1x8x32xf32>
    %511 = vector.shape_cast %510 : vector<1x8x32xf32> to vector<8x32xf32>
    %512 = vector.shape_cast %483 : vector<8x32xf32> to vector<1x8x32xf32>
    tpu.vector_store %arg8[%509, %c0_136, %c0_137], %512 {strides = array<i32>} : memref<8x8x32xf32, #tpu.memory_space<vmem>>, vector<1x8x32xf32>,
    %513 = arith.index_cast %446 : i32 to index
    %c0_138 = arith.constant 0 : index
    %c0_139 = arith.constant 0 : index
    %514 = vector.load %arg9[%513, %c0_138, %c0_139] : memref<8x8x32xf32, #tpu.memory_space<vmem>>, vector<1x8x32xf32>
    %515 = vector.shape_cast %514 : vector<1x8x32xf32> to vector<8x32xf32>
    %516 = vector.shape_cast %508 : vector<8x32xf32> to vector<1x8x32xf32>
    tpu.vector_store %arg9[%513, %c0_138, %c0_139], %516 {strides = array<i32>} : memref<8x8x32xf32, #tpu.memory_space<vmem>>, vector<1x8x32xf32>,
    %c7_i32_140 = arith.constant 7 : i32
    %c7_i32_141 = arith.constant 7 : i32
    %517 = arith.subi %c7_i32_141, %c7_i32_140 : i32
    %518 = arith.index_cast %c7_i32_140 : i32 to index
    %c0_142 = arith.constant 0 : index
    %c0_143 = arith.constant 0 : index
    %519 = vector.load %arg10[%518, %c0_142, %c0_143] : memref<8x8x128xf32, #tpu.memory_space<vmem>>, vector<1x8x128xf32>
    %520 = vector.shape_cast %519 : vector<1x8x128xf32> to vector<8x128xf32>
    %521 = arith.truncf %483 : vector<8x32xf32> to vector<8x32xbf16>
    %cst_144 = arith.constant dense<0.000000e+00> : vector<8x128xf32>
    %522 = tpu.matmul %521, %17, %cst_144 {dimension_numbers = #tpu.dot_dimension_numbers<[1], [0], [0], [1], [0, 0, 1, 1], [], []>} : vector<8x32xbf16>, vector<32x128xbf16>, vector<8x128xf32> -> vector<8x128xf32>
    %523 = arith.addf %520, %522 : vector<8x128xf32>
    %524 = arith.index_cast %517 : i32 to index
    %c0_145 = arith.constant 0 : index
    %c0_146 = arith.constant 0 : index
    %525 = vector.load %arg11[%524, %c0_145, %c0_146] : memref<8x8x128xf32, #tpu.memory_space<vmem>>, vector<1x8x128xf32>
    %526 = vector.shape_cast %525 : vector<1x8x128xf32> to vector<8x128xf32>
    %527 = arith.truncf %508 : vector<8x32xf32> to vector<8x32xbf16>
    %cst_147 = arith.constant dense<0.000000e+00> : vector<8x128xf32>
    %528 = tpu.matmul %527, %18, %cst_147 {dimension_numbers = #tpu.dot_dimension_numbers<[1], [0], [0], [1], [0, 0, 1, 1], [], []>} : vector<8x32xbf16>, vector<32x128xbf16>, vector<8x128xf32> -> vector<8x128xf32>
    %529 = arith.addf %526, %528 : vector<8x128xf32>
    %530 = vector.extract_strided_slice %523 {offsets = [0, 0], sizes = [8, 32], strides = [1, 1]} : vector<8x128xf32> to vector<8x32xf32>
    %531 = arith.negf %530 : vector<8x32xf32>
    %532 = math.exp %531 : vector<8x32xf32>
    %cst_148 = arith.constant 1.000000e+00 : f32
    %533 = vector.broadcast %cst_148 : f32 to vector<8x32xf32>
    %534 = arith.addf %533, %532 : vector<8x32xf32>
    %535 = arith.divf %533, %534 : vector<8x32xf32>
    %536 = vector.extract_strided_slice %523 {offsets = [0, 32], sizes = [8, 32], strides = [1, 1]} : vector<8x128xf32> to vector<8x32xf32>
    %537 = arith.negf %536 : vector<8x32xf32>
    %538 = math.exp %537 : vector<8x32xf32>
    %cst_149 = arith.constant 1.000000e+00 : f32
    %539 = vector.broadcast %cst_149 : f32 to vector<8x32xf32>
    %540 = arith.addf %539, %538 : vector<8x32xf32>
    %541 = arith.divf %539, %540 : vector<8x32xf32>
    %542 = vector.extract_strided_slice %523 {offsets = [0, 64], sizes = [8, 32], strides = [1, 1]} : vector<8x128xf32> to vector<8x32xf32>
    %543 = math.tanh %542 : vector<8x32xf32>
    %544 = vector.extract_strided_slice %523 {offsets = [0, 96], sizes = [8, 32], strides = [1, 1]} : vector<8x128xf32> to vector<8x32xf32>
    %545 = arith.negf %544 : vector<8x32xf32>
    %546 = math.exp %545 : vector<8x32xf32>
    %cst_150 = arith.constant 1.000000e+00 : f32
    %547 = vector.broadcast %cst_150 : f32 to vector<8x32xf32>
    %548 = arith.addf %547, %546 : vector<8x32xf32>
    %549 = arith.divf %547, %548 : vector<8x32xf32>
    %550 = arith.mulf %541, %481 : vector<8x32xf32>
    %551 = arith.mulf %535, %543 : vector<8x32xf32>
    %552 = arith.addf %550, %551 : vector<8x32xf32>
    %553 = math.tanh %552 : vector<8x32xf32>
    %554 = arith.mulf %549, %553 : vector<8x32xf32>
    %555 = vector.extract_strided_slice %529 {offsets = [0, 0], sizes = [8, 32], strides = [1, 1]} : vector<8x128xf32> to vector<8x32xf32>
    %556 = arith.negf %555 : vector<8x32xf32>
    %557 = math.exp %556 : vector<8x32xf32>
    %cst_151 = arith.constant 1.000000e+00 : f32
    %558 = vector.broadcast %cst_151 : f32 to vector<8x32xf32>
    %559 = arith.addf %558, %557 : vector<8x32xf32>
    %560 = arith.divf %558, %559 : vector<8x32xf32>
    %561 = vector.extract_strided_slice %529 {offsets = [0, 32], sizes = [8, 32], strides = [1, 1]} : vector<8x128xf32> to vector<8x32xf32>
    %562 = arith.negf %561 : vector<8x32xf32>
    %563 = math.exp %562 : vector<8x32xf32>
    %cst_152 = arith.constant 1.000000e+00 : f32
    %564 = vector.broadcast %cst_152 : f32 to vector<8x32xf32>
    %565 = arith.addf %564, %563 : vector<8x32xf32>
    %566 = arith.divf %564, %565 : vector<8x32xf32>
    %567 = vector.extract_strided_slice %529 {offsets = [0, 64], sizes = [8, 32], strides = [1, 1]} : vector<8x128xf32> to vector<8x32xf32>
    %568 = math.tanh %567 : vector<8x32xf32>
    %569 = vector.extract_strided_slice %529 {offsets = [0, 96], sizes = [8, 32], strides = [1, 1]} : vector<8x128xf32> to vector<8x32xf32>
    %570 = arith.negf %569 : vector<8x32xf32>
    %571 = math.exp %570 : vector<8x32xf32>
    %cst_153 = arith.constant 1.000000e+00 : f32
    %572 = vector.broadcast %cst_153 : f32 to vector<8x32xf32>
    %573 = arith.addf %572, %571 : vector<8x32xf32>
    %574 = arith.divf %572, %573 : vector<8x32xf32>
    %575 = arith.mulf %566, %506 : vector<8x32xf32>
    %576 = arith.mulf %560, %568 : vector<8x32xf32>
    %577 = arith.addf %575, %576 : vector<8x32xf32>
    %578 = math.tanh %577 : vector<8x32xf32>
    %579 = arith.mulf %574, %578 : vector<8x32xf32>
    %580 = arith.index_cast %c7_i32_140 : i32 to index
    %c0_154 = arith.constant 0 : index
    %c0_155 = arith.constant 0 : index
    %581 = vector.load %arg8[%580, %c0_154, %c0_155] : memref<8x8x32xf32, #tpu.memory_space<vmem>>, vector<1x8x32xf32>
    %582 = vector.shape_cast %581 : vector<1x8x32xf32> to vector<8x32xf32>
    %583 = vector.shape_cast %554 : vector<8x32xf32> to vector<1x8x32xf32>
    tpu.vector_store %arg8[%580, %c0_154, %c0_155], %583 {strides = array<i32>} : memref<8x8x32xf32, #tpu.memory_space<vmem>>, vector<1x8x32xf32>,
    %584 = arith.index_cast %517 : i32 to index
    %c0_156 = arith.constant 0 : index
    %c0_157 = arith.constant 0 : index
    %585 = vector.load %arg9[%584, %c0_156, %c0_157] : memref<8x8x32xf32, #tpu.memory_space<vmem>>, vector<1x8x32xf32>
    %586 = vector.shape_cast %585 : vector<1x8x32xf32> to vector<8x32xf32>
    %587 = vector.shape_cast %579 : vector<8x32xf32> to vector<1x8x32xf32>
    tpu.vector_store %arg9[%584, %c0_156, %c0_157], %587 {strides = array<i32>} : memref<8x8x32xf32, #tpu.memory_space<vmem>>, vector<1x8x32xf32>,
    %c8_i32 = arith.constant 8 : i32
    %c0_158 = arith.constant 0 : index
    %c0_159 = arith.constant 0 : index
    %c0_160 = arith.constant 0 : index
    %588 = vector.load %arg8[%c0_158, %c0_159, %c0_160] : memref<8x8x32xf32, #tpu.memory_space<vmem>>, vector<8x8x32xf32>
    %c0_161 = arith.constant 0 : index
    %c0_162 = arith.constant 0 : index
    %c0_163 = arith.constant 0 : index
    %589 = vector.load %arg9[%c0_161, %c0_162, %c0_163] : memref<8x8x32xf32, #tpu.memory_space<vmem>>, vector<8x8x32xf32>
    %590 = tpu.concatenate %588, %589 in 2 : vector<8x8x32xf32>, vector<8x8x32xf32> -> vector<8x8x64xf32>
    %c0_164 = arith.constant 0 : index
    %c0_165 = arith.constant 0 : index
    %c0_166 = arith.constant 0 : index
    %591 = vector.load %arg7[%c0_164, %c0_165, %c0_166] : memref<8x8x64xf32, #tpu.memory_space<vmem>>, vector<8x8x64xf32>
    tpu.vector_store %arg7[%c0_164, %c0_165, %c0_166], %590 {strides = array<i32>} : memref<8x8x64xf32, #tpu.memory_space<vmem>>, vector<8x8x64xf32>,
    return
  }
}

module attributes {stable_mosaic.version = 11 : i64} {
  func.func @_bilstm_cls_kernel(%arg0: memref<8x8x64xf32, #tpu.memory_space<vmem>>, %arg1: memref<64x128xbf16, #tpu.memory_space<vmem>>, %arg2: memref<32x128xbf16, #tpu.memory_space<vmem>>, %arg3: memref<1x128xf32, #tpu.memory_space<vmem>>, %arg4: memref<64x128xbf16, #tpu.memory_space<vmem>>, %arg5: memref<32x128xbf16, #tpu.memory_space<vmem>>, %arg6: memref<1x128xf32, #tpu.memory_space<vmem>>, %arg7: memref<64x128xbf16, #tpu.memory_space<vmem>>, %arg8: memref<1x128xf32, #tpu.memory_space<vmem>>, %arg9: memref<8x8x128xf32, #tpu.memory_space<vmem>>, %arg10: memref<8x8x32xf32, #tpu.memory_space<vmem>>, %arg11: memref<8x8x32xf32, #tpu.memory_space<vmem>>, %arg12: memref<8x8x128xf32, #tpu.memory_space<vmem>>, %arg13: memref<8x8x128xf32, #tpu.memory_space<vmem>>) attributes {dimension_semantics = [], scalar_prefetch = 0 : i64, scratch_operands = 4 : i64, tpu.core_type = #tpu.core_type<tc>} {
    %c0 = arith.constant 0 : index
    %c0_0 = arith.constant 0 : index
    %c0_1 = arith.constant 0 : index
    %0 = vector.load %arg0[%c0, %c0_0, %c0_1] : memref<8x8x64xf32, #tpu.memory_space<vmem>>, vector<8x8x64xf32>
    %1 = vector.shape_cast %0 : vector<8x8x64xf32> to vector<64x64xf32>
    %2 = arith.truncf %1 : vector<64x64xf32> to vector<64x64xbf16>
    %c0_2 = arith.constant 0 : index
    %c0_3 = arith.constant 0 : index
    %3 = vector.load %arg1[%c0_2, %c0_3] : memref<64x128xbf16, #tpu.memory_space<vmem>>, vector<64x128xbf16>
    %cst = arith.constant dense<0.000000e+00> : vector<64x128xf32>
    %4 = tpu.matmul %2, %3, %cst {dimension_numbers = #tpu.dot_dimension_numbers<[1], [0], [0], [1], [0, 0, 1, 1], [], []>} : vector<64x64xbf16>, vector<64x128xbf16>, vector<64x128xf32> -> vector<64x128xf32>
    %c0_4 = arith.constant 0 : index
    %c0_5 = arith.constant 0 : index
    %5 = vector.load %arg3[%c0_4, %c0_5] : memref<1x128xf32, #tpu.memory_space<vmem>>, vector<1x128xf32>
    %6 = vector.broadcast %5 : vector<1x128xf32> to vector<64x128xf32>
    %7 = arith.addf %4, %6 : vector<64x128xf32>
    %8 = vector.shape_cast %7 : vector<64x128xf32> to vector<8x8x128xf32>
    %c0_6 = arith.constant 0 : index
    %c0_7 = arith.constant 0 : index
    %c0_8 = arith.constant 0 : index
    %9 = vector.load %arg12[%c0_6, %c0_7, %c0_8] : memref<8x8x128xf32, #tpu.memory_space<vmem>>, vector<8x8x128xf32>
    tpu.vector_store %arg12[%c0_6, %c0_7, %c0_8], %8 {strides = array<i32>} : memref<8x8x128xf32, #tpu.memory_space<vmem>>, vector<8x8x128xf32>,
    %c0_9 = arith.constant 0 : index
    %c0_10 = arith.constant 0 : index
    %10 = vector.load %arg4[%c0_9, %c0_10] : memref<64x128xbf16, #tpu.memory_space<vmem>>, vector<64x128xbf16>
    %cst_11 = arith.constant dense<0.000000e+00> : vector<64x128xf32>
    %11 = tpu.matmul %2, %10, %cst_11 {dimension_numbers = #tpu.dot_dimension_numbers<[1], [0], [0], [1], [0, 0, 1, 1], [], []>} : vector<64x64xbf16>, vector<64x128xbf16>, vector<64x128xf32> -> vector<64x128xf32>
    %c0_12 = arith.constant 0 : index
    %c0_13 = arith.constant 0 : index
    %12 = vector.load %arg6[%c0_12, %c0_13] : memref<1x128xf32, #tpu.memory_space<vmem>>, vector<1x128xf32>
    %13 = vector.broadcast %12 : vector<1x128xf32> to vector<64x128xf32>
    %14 = arith.addf %11, %13 : vector<64x128xf32>
    %15 = vector.shape_cast %14 : vector<64x128xf32> to vector<8x8x128xf32>
    %c0_14 = arith.constant 0 : index
    %c0_15 = arith.constant 0 : index
    %c0_16 = arith.constant 0 : index
    %16 = vector.load %arg13[%c0_14, %c0_15, %c0_16] : memref<8x8x128xf32, #tpu.memory_space<vmem>>, vector<8x8x128xf32>
    tpu.vector_store %arg13[%c0_14, %c0_15, %c0_16], %15 {strides = array<i32>} : memref<8x8x128xf32, #tpu.memory_space<vmem>>, vector<8x8x128xf32>,
    %c0_17 = arith.constant 0 : index
    %c0_18 = arith.constant 0 : index
    %17 = vector.load %arg2[%c0_17, %c0_18] : memref<32x128xbf16, #tpu.memory_space<vmem>>, vector<32x128xbf16>
    %c0_19 = arith.constant 0 : index
    %c0_20 = arith.constant 0 : index
    %18 = vector.load %arg5[%c0_19, %c0_20] : memref<32x128xbf16, #tpu.memory_space<vmem>>, vector<32x128xbf16>
    %cst_21 = arith.constant 0.000000e+00 : f32
    %19 = vector.broadcast %cst_21 : f32 to vector<8x32xf32>
    %c0_i32 = arith.constant 0 : i32
    %c7_i32 = arith.constant 7 : i32
    %20 = arith.subi %c7_i32, %c0_i32 : i32
    %21 = arith.index_cast %c0_i32 : i32 to index
    %c0_22 = arith.constant 0 : index
    %c0_23 = arith.constant 0 : index
    %22 = vector.load %arg12[%21, %c0_22, %c0_23] : memref<8x8x128xf32, #tpu.memory_space<vmem>>, vector<1x8x128xf32>
    %23 = vector.shape_cast %22 : vector<1x8x128xf32> to vector<8x128xf32>
    %24 = arith.truncf %19 : vector<8x32xf32> to vector<8x32xbf16>
    %cst_24 = arith.constant dense<0.000000e+00> : vector<8x128xf32>
    %25 = tpu.matmul %24, %17, %cst_24 {dimension_numbers = #tpu.dot_dimension_numbers<[1], [0], [0], [1], [0, 0, 1, 1], [], []>} : vector<8x32xbf16>, vector<32x128xbf16>, vector<8x128xf32> -> vector<8x128xf32>
    %26 = arith.addf %23, %25 : vector<8x128xf32>
    %27 = arith.index_cast %20 : i32 to index
    %c0_25 = arith.constant 0 : index
    %c0_26 = arith.constant 0 : index
    %28 = vector.load %arg13[%27, %c0_25, %c0_26] : memref<8x8x128xf32, #tpu.memory_space<vmem>>, vector<1x8x128xf32>
    %29 = vector.shape_cast %28 : vector<1x8x128xf32> to vector<8x128xf32>
    %30 = arith.truncf %19 : vector<8x32xf32> to vector<8x32xbf16>
    %cst_27 = arith.constant dense<0.000000e+00> : vector<8x128xf32>
    %31 = tpu.matmul %30, %18, %cst_27 {dimension_numbers = #tpu.dot_dimension_numbers<[1], [0], [0], [1], [0, 0, 1, 1], [], []>} : vector<8x32xbf16>, vector<32x128xbf16>, vector<8x128xf32> -> vector<8x128xf32>
    %32 = arith.addf %29, %31 : vector<8x128xf32>
    %33 = vector.extract_strided_slice %26 {offsets = [0, 0], sizes = [8, 32], strides = [1, 1]} : vector<8x128xf32> to vector<8x32xf32>
    %34 = arith.negf %33 : vector<8x32xf32>
    %35 = math.exp %34 : vector<8x32xf32>
    %cst_28 = arith.constant 1.000000e+00 : f32
    %36 = vector.broadcast %cst_28 : f32 to vector<8x32xf32>
    %37 = arith.addf %36, %35 : vector<8x32xf32>
    %38 = arith.divf %36, %37 : vector<8x32xf32>
    %39 = vector.extract_strided_slice %26 {offsets = [0, 32], sizes = [8, 32], strides = [1, 1]} : vector<8x128xf32> to vector<8x32xf32>
    %40 = arith.negf %39 : vector<8x32xf32>
    %41 = math.exp %40 : vector<8x32xf32>
    %cst_29 = arith.constant 1.000000e+00 : f32
    %42 = vector.broadcast %cst_29 : f32 to vector<8x32xf32>
    %43 = arith.addf %42, %41 : vector<8x32xf32>
    %44 = arith.divf %42, %43 : vector<8x32xf32>
    %45 = vector.extract_strided_slice %26 {offsets = [0, 64], sizes = [8, 32], strides = [1, 1]} : vector<8x128xf32> to vector<8x32xf32>
    %46 = math.tanh %45 : vector<8x32xf32>
    %47 = vector.extract_strided_slice %26 {offsets = [0, 96], sizes = [8, 32], strides = [1, 1]} : vector<8x128xf32> to vector<8x32xf32>
    %48 = arith.negf %47 : vector<8x32xf32>
    %49 = math.exp %48 : vector<8x32xf32>
    %cst_30 = arith.constant 1.000000e+00 : f32
    %50 = vector.broadcast %cst_30 : f32 to vector<8x32xf32>
    %51 = arith.addf %50, %49 : vector<8x32xf32>
    %52 = arith.divf %50, %51 : vector<8x32xf32>
    %53 = arith.mulf %44, %19 : vector<8x32xf32>
    %54 = arith.mulf %38, %46 : vector<8x32xf32>
    %55 = arith.addf %53, %54 : vector<8x32xf32>
    %56 = math.tanh %55 : vector<8x32xf32>
    %57 = arith.mulf %52, %56 : vector<8x32xf32>
    %58 = vector.extract_strided_slice %32 {offsets = [0, 0], sizes = [8, 32], strides = [1, 1]} : vector<8x128xf32> to vector<8x32xf32>
    %59 = arith.negf %58 : vector<8x32xf32>
    %60 = math.exp %59 : vector<8x32xf32>
    %cst_31 = arith.constant 1.000000e+00 : f32
    %61 = vector.broadcast %cst_31 : f32 to vector<8x32xf32>
    %62 = arith.addf %61, %60 : vector<8x32xf32>
    %63 = arith.divf %61, %62 : vector<8x32xf32>
    %64 = vector.extract_strided_slice %32 {offsets = [0, 32], sizes = [8, 32], strides = [1, 1]} : vector<8x128xf32> to vector<8x32xf32>
    %65 = arith.negf %64 : vector<8x32xf32>
    %66 = math.exp %65 : vector<8x32xf32>
    %cst_32 = arith.constant 1.000000e+00 : f32
    %67 = vector.broadcast %cst_32 : f32 to vector<8x32xf32>
    %68 = arith.addf %67, %66 : vector<8x32xf32>
    %69 = arith.divf %67, %68 : vector<8x32xf32>
    %70 = vector.extract_strided_slice %32 {offsets = [0, 64], sizes = [8, 32], strides = [1, 1]} : vector<8x128xf32> to vector<8x32xf32>
    %71 = math.tanh %70 : vector<8x32xf32>
    %72 = vector.extract_strided_slice %32 {offsets = [0, 96], sizes = [8, 32], strides = [1, 1]} : vector<8x128xf32> to vector<8x32xf32>
    %73 = arith.negf %72 : vector<8x32xf32>
    %74 = math.exp %73 : vector<8x32xf32>
    %cst_33 = arith.constant 1.000000e+00 : f32
    %75 = vector.broadcast %cst_33 : f32 to vector<8x32xf32>
    %76 = arith.addf %75, %74 : vector<8x32xf32>
    %77 = arith.divf %75, %76 : vector<8x32xf32>
    %78 = arith.mulf %69, %19 : vector<8x32xf32>
    %79 = arith.mulf %63, %71 : vector<8x32xf32>
    %80 = arith.addf %78, %79 : vector<8x32xf32>
    %81 = math.tanh %80 : vector<8x32xf32>
    %82 = arith.mulf %77, %81 : vector<8x32xf32>
    %83 = arith.index_cast %c0_i32 : i32 to index
    %c0_34 = arith.constant 0 : index
    %c0_35 = arith.constant 0 : index
    %84 = vector.load %arg10[%83, %c0_34, %c0_35] : memref<8x8x32xf32, #tpu.memory_space<vmem>>, vector<1x8x32xf32>
    %85 = vector.shape_cast %84 : vector<1x8x32xf32> to vector<8x32xf32>
    %86 = vector.shape_cast %57 : vector<8x32xf32> to vector<1x8x32xf32>
    tpu.vector_store %arg10[%83, %c0_34, %c0_35], %86 {strides = array<i32>} : memref<8x8x32xf32, #tpu.memory_space<vmem>>, vector<1x8x32xf32>,
    %87 = arith.index_cast %20 : i32 to index
    %c0_36 = arith.constant 0 : index
    %c0_37 = arith.constant 0 : index
    %88 = vector.load %arg11[%87, %c0_36, %c0_37] : memref<8x8x32xf32, #tpu.memory_space<vmem>>, vector<1x8x32xf32>
    %89 = vector.shape_cast %88 : vector<1x8x32xf32> to vector<8x32xf32>
    %90 = vector.shape_cast %82 : vector<8x32xf32> to vector<1x8x32xf32>
    tpu.vector_store %arg11[%87, %c0_36, %c0_37], %90 {strides = array<i32>} : memref<8x8x32xf32, #tpu.memory_space<vmem>>, vector<1x8x32xf32>,
    %c1_i32 = arith.constant 1 : i32
    %c7_i32_38 = arith.constant 7 : i32
    %91 = arith.subi %c7_i32_38, %c1_i32 : i32
    %92 = arith.index_cast %c1_i32 : i32 to index
    %c0_39 = arith.constant 0 : index
    %c0_40 = arith.constant 0 : index
    %93 = vector.load %arg12[%92, %c0_39, %c0_40] : memref<8x8x128xf32, #tpu.memory_space<vmem>>, vector<1x8x128xf32>
    %94 = vector.shape_cast %93 : vector<1x8x128xf32> to vector<8x128xf32>
    %95 = arith.truncf %57 : vector<8x32xf32> to vector<8x32xbf16>
    %cst_41 = arith.constant dense<0.000000e+00> : vector<8x128xf32>
    %96 = tpu.matmul %95, %17, %cst_41 {dimension_numbers = #tpu.dot_dimension_numbers<[1], [0], [0], [1], [0, 0, 1, 1], [], []>} : vector<8x32xbf16>, vector<32x128xbf16>, vector<8x128xf32> -> vector<8x128xf32>
    %97 = arith.addf %94, %96 : vector<8x128xf32>
    %98 = arith.index_cast %91 : i32 to index
    %c0_42 = arith.constant 0 : index
    %c0_43 = arith.constant 0 : index
    %99 = vector.load %arg13[%98, %c0_42, %c0_43] : memref<8x8x128xf32, #tpu.memory_space<vmem>>, vector<1x8x128xf32>
    %100 = vector.shape_cast %99 : vector<1x8x128xf32> to vector<8x128xf32>
    %101 = arith.truncf %82 : vector<8x32xf32> to vector<8x32xbf16>
    %cst_44 = arith.constant dense<0.000000e+00> : vector<8x128xf32>
    %102 = tpu.matmul %101, %18, %cst_44 {dimension_numbers = #tpu.dot_dimension_numbers<[1], [0], [0], [1], [0, 0, 1, 1], [], []>} : vector<8x32xbf16>, vector<32x128xbf16>, vector<8x128xf32> -> vector<8x128xf32>
    %103 = arith.addf %100, %102 : vector<8x128xf32>
    %104 = vector.extract_strided_slice %97 {offsets = [0, 0], sizes = [8, 32], strides = [1, 1]} : vector<8x128xf32> to vector<8x32xf32>
    %105 = arith.negf %104 : vector<8x32xf32>
    %106 = math.exp %105 : vector<8x32xf32>
    %cst_45 = arith.constant 1.000000e+00 : f32
    %107 = vector.broadcast %cst_45 : f32 to vector<8x32xf32>
    %108 = arith.addf %107, %106 : vector<8x32xf32>
    %109 = arith.divf %107, %108 : vector<8x32xf32>
    %110 = vector.extract_strided_slice %97 {offsets = [0, 32], sizes = [8, 32], strides = [1, 1]} : vector<8x128xf32> to vector<8x32xf32>
    %111 = arith.negf %110 : vector<8x32xf32>
    %112 = math.exp %111 : vector<8x32xf32>
    %cst_46 = arith.constant 1.000000e+00 : f32
    %113 = vector.broadcast %cst_46 : f32 to vector<8x32xf32>
    %114 = arith.addf %113, %112 : vector<8x32xf32>
    %115 = arith.divf %113, %114 : vector<8x32xf32>
    %116 = vector.extract_strided_slice %97 {offsets = [0, 64], sizes = [8, 32], strides = [1, 1]} : vector<8x128xf32> to vector<8x32xf32>
    %117 = math.tanh %116 : vector<8x32xf32>
    %118 = vector.extract_strided_slice %97 {offsets = [0, 96], sizes = [8, 32], strides = [1, 1]} : vector<8x128xf32> to vector<8x32xf32>
    %119 = arith.negf %118 : vector<8x32xf32>
    %120 = math.exp %119 : vector<8x32xf32>
    %cst_47 = arith.constant 1.000000e+00 : f32
    %121 = vector.broadcast %cst_47 : f32 to vector<8x32xf32>
    %122 = arith.addf %121, %120 : vector<8x32xf32>
    %123 = arith.divf %121, %122 : vector<8x32xf32>
    %124 = arith.mulf %115, %55 : vector<8x32xf32>
    %125 = arith.mulf %109, %117 : vector<8x32xf32>
    %126 = arith.addf %124, %125 : vector<8x32xf32>
    %127 = math.tanh %126 : vector<8x32xf32>
    %128 = arith.mulf %123, %127 : vector<8x32xf32>
    %129 = vector.extract_strided_slice %103 {offsets = [0, 0], sizes = [8, 32], strides = [1, 1]} : vector<8x128xf32> to vector<8x32xf32>
    %130 = arith.negf %129 : vector<8x32xf32>
    %131 = math.exp %130 : vector<8x32xf32>
    %cst_48 = arith.constant 1.000000e+00 : f32
    %132 = vector.broadcast %cst_48 : f32 to vector<8x32xf32>
    %133 = arith.addf %132, %131 : vector<8x32xf32>
    %134 = arith.divf %132, %133 : vector<8x32xf32>
    %135 = vector.extract_strided_slice %103 {offsets = [0, 32], sizes = [8, 32], strides = [1, 1]} : vector<8x128xf32> to vector<8x32xf32>
    %136 = arith.negf %135 : vector<8x32xf32>
    %137 = math.exp %136 : vector<8x32xf32>
    %cst_49 = arith.constant 1.000000e+00 : f32
    %138 = vector.broadcast %cst_49 : f32 to vector<8x32xf32>
    %139 = arith.addf %138, %137 : vector<8x32xf32>
    %140 = arith.divf %138, %139 : vector<8x32xf32>
    %141 = vector.extract_strided_slice %103 {offsets = [0, 64], sizes = [8, 32], strides = [1, 1]} : vector<8x128xf32> to vector<8x32xf32>
    %142 = math.tanh %141 : vector<8x32xf32>
    %143 = vector.extract_strided_slice %103 {offsets = [0, 96], sizes = [8, 32], strides = [1, 1]} : vector<8x128xf32> to vector<8x32xf32>
    %144 = arith.negf %143 : vector<8x32xf32>
    %145 = math.exp %144 : vector<8x32xf32>
    %cst_50 = arith.constant 1.000000e+00 : f32
    %146 = vector.broadcast %cst_50 : f32 to vector<8x32xf32>
    %147 = arith.addf %146, %145 : vector<8x32xf32>
    %148 = arith.divf %146, %147 : vector<8x32xf32>
    %149 = arith.mulf %140, %80 : vector<8x32xf32>
    %150 = arith.mulf %134, %142 : vector<8x32xf32>
    %151 = arith.addf %149, %150 : vector<8x32xf32>
    %152 = math.tanh %151 : vector<8x32xf32>
    %153 = arith.mulf %148, %152 : vector<8x32xf32>
    %154 = arith.index_cast %c1_i32 : i32 to index
    %c0_51 = arith.constant 0 : index
    %c0_52 = arith.constant 0 : index
    %155 = vector.load %arg10[%154, %c0_51, %c0_52] : memref<8x8x32xf32, #tpu.memory_space<vmem>>, vector<1x8x32xf32>
    %156 = vector.shape_cast %155 : vector<1x8x32xf32> to vector<8x32xf32>
    %157 = vector.shape_cast %128 : vector<8x32xf32> to vector<1x8x32xf32>
    tpu.vector_store %arg10[%154, %c0_51, %c0_52], %157 {strides = array<i32>} : memref<8x8x32xf32, #tpu.memory_space<vmem>>, vector<1x8x32xf32>,
    %158 = arith.index_cast %91 : i32 to index
    %c0_53 = arith.constant 0 : index
    %c0_54 = arith.constant 0 : index
    %159 = vector.load %arg11[%158, %c0_53, %c0_54] : memref<8x8x32xf32, #tpu.memory_space<vmem>>, vector<1x8x32xf32>
    %160 = vector.shape_cast %159 : vector<1x8x32xf32> to vector<8x32xf32>
    %161 = vector.shape_cast %153 : vector<8x32xf32> to vector<1x8x32xf32>
    tpu.vector_store %arg11[%158, %c0_53, %c0_54], %161 {strides = array<i32>} : memref<8x8x32xf32, #tpu.memory_space<vmem>>, vector<1x8x32xf32>,
    %c2_i32 = arith.constant 2 : i32
    %c7_i32_55 = arith.constant 7 : i32
    %162 = arith.subi %c7_i32_55, %c2_i32 : i32
    %163 = arith.index_cast %c2_i32 : i32 to index
    %c0_56 = arith.constant 0 : index
    %c0_57 = arith.constant 0 : index
    %164 = vector.load %arg12[%163, %c0_56, %c0_57] : memref<8x8x128xf32, #tpu.memory_space<vmem>>, vector<1x8x128xf32>
    %165 = vector.shape_cast %164 : vector<1x8x128xf32> to vector<8x128xf32>
    %166 = arith.truncf %128 : vector<8x32xf32> to vector<8x32xbf16>
    %cst_58 = arith.constant dense<0.000000e+00> : vector<8x128xf32>
    %167 = tpu.matmul %166, %17, %cst_58 {dimension_numbers = #tpu.dot_dimension_numbers<[1], [0], [0], [1], [0, 0, 1, 1], [], []>} : vector<8x32xbf16>, vector<32x128xbf16>, vector<8x128xf32> -> vector<8x128xf32>
    %168 = arith.addf %165, %167 : vector<8x128xf32>
    %169 = arith.index_cast %162 : i32 to index
    %c0_59 = arith.constant 0 : index
    %c0_60 = arith.constant 0 : index
    %170 = vector.load %arg13[%169, %c0_59, %c0_60] : memref<8x8x128xf32, #tpu.memory_space<vmem>>, vector<1x8x128xf32>
    %171 = vector.shape_cast %170 : vector<1x8x128xf32> to vector<8x128xf32>
    %172 = arith.truncf %153 : vector<8x32xf32> to vector<8x32xbf16>
    %cst_61 = arith.constant dense<0.000000e+00> : vector<8x128xf32>
    %173 = tpu.matmul %172, %18, %cst_61 {dimension_numbers = #tpu.dot_dimension_numbers<[1], [0], [0], [1], [0, 0, 1, 1], [], []>} : vector<8x32xbf16>, vector<32x128xbf16>, vector<8x128xf32> -> vector<8x128xf32>
    %174 = arith.addf %171, %173 : vector<8x128xf32>
    %175 = vector.extract_strided_slice %168 {offsets = [0, 0], sizes = [8, 32], strides = [1, 1]} : vector<8x128xf32> to vector<8x32xf32>
    %176 = arith.negf %175 : vector<8x32xf32>
    %177 = math.exp %176 : vector<8x32xf32>
    %cst_62 = arith.constant 1.000000e+00 : f32
    %178 = vector.broadcast %cst_62 : f32 to vector<8x32xf32>
    %179 = arith.addf %178, %177 : vector<8x32xf32>
    %180 = arith.divf %178, %179 : vector<8x32xf32>
    %181 = vector.extract_strided_slice %168 {offsets = [0, 32], sizes = [8, 32], strides = [1, 1]} : vector<8x128xf32> to vector<8x32xf32>
    %182 = arith.negf %181 : vector<8x32xf32>
    %183 = math.exp %182 : vector<8x32xf32>
    %cst_63 = arith.constant 1.000000e+00 : f32
    %184 = vector.broadcast %cst_63 : f32 to vector<8x32xf32>
    %185 = arith.addf %184, %183 : vector<8x32xf32>
    %186 = arith.divf %184, %185 : vector<8x32xf32>
    %187 = vector.extract_strided_slice %168 {offsets = [0, 64], sizes = [8, 32], strides = [1, 1]} : vector<8x128xf32> to vector<8x32xf32>
    %188 = math.tanh %187 : vector<8x32xf32>
    %189 = vector.extract_strided_slice %168 {offsets = [0, 96], sizes = [8, 32], strides = [1, 1]} : vector<8x128xf32> to vector<8x32xf32>
    %190 = arith.negf %189 : vector<8x32xf32>
    %191 = math.exp %190 : vector<8x32xf32>
    %cst_64 = arith.constant 1.000000e+00 : f32
    %192 = vector.broadcast %cst_64 : f32 to vector<8x32xf32>
    %193 = arith.addf %192, %191 : vector<8x32xf32>
    %194 = arith.divf %192, %193 : vector<8x32xf32>
    %195 = arith.mulf %186, %126 : vector<8x32xf32>
    %196 = arith.mulf %180, %188 : vector<8x32xf32>
    %197 = arith.addf %195, %196 : vector<8x32xf32>
    %198 = math.tanh %197 : vector<8x32xf32>
    %199 = arith.mulf %194, %198 : vector<8x32xf32>
    %200 = vector.extract_strided_slice %174 {offsets = [0, 0], sizes = [8, 32], strides = [1, 1]} : vector<8x128xf32> to vector<8x32xf32>
    %201 = arith.negf %200 : vector<8x32xf32>
    %202 = math.exp %201 : vector<8x32xf32>
    %cst_65 = arith.constant 1.000000e+00 : f32
    %203 = vector.broadcast %cst_65 : f32 to vector<8x32xf32>
    %204 = arith.addf %203, %202 : vector<8x32xf32>
    %205 = arith.divf %203, %204 : vector<8x32xf32>
    %206 = vector.extract_strided_slice %174 {offsets = [0, 32], sizes = [8, 32], strides = [1, 1]} : vector<8x128xf32> to vector<8x32xf32>
    %207 = arith.negf %206 : vector<8x32xf32>
    %208 = math.exp %207 : vector<8x32xf32>
    %cst_66 = arith.constant 1.000000e+00 : f32
    %209 = vector.broadcast %cst_66 : f32 to vector<8x32xf32>
    %210 = arith.addf %209, %208 : vector<8x32xf32>
    %211 = arith.divf %209, %210 : vector<8x32xf32>
    %212 = vector.extract_strided_slice %174 {offsets = [0, 64], sizes = [8, 32], strides = [1, 1]} : vector<8x128xf32> to vector<8x32xf32>
    %213 = math.tanh %212 : vector<8x32xf32>
    %214 = vector.extract_strided_slice %174 {offsets = [0, 96], sizes = [8, 32], strides = [1, 1]} : vector<8x128xf32> to vector<8x32xf32>
    %215 = arith.negf %214 : vector<8x32xf32>
    %216 = math.exp %215 : vector<8x32xf32>
    %cst_67 = arith.constant 1.000000e+00 : f32
    %217 = vector.broadcast %cst_67 : f32 to vector<8x32xf32>
    %218 = arith.addf %217, %216 : vector<8x32xf32>
    %219 = arith.divf %217, %218 : vector<8x32xf32>
    %220 = arith.mulf %211, %151 : vector<8x32xf32>
    %221 = arith.mulf %205, %213 : vector<8x32xf32>
    %222 = arith.addf %220, %221 : vector<8x32xf32>
    %223 = math.tanh %222 : vector<8x32xf32>
    %224 = arith.mulf %219, %223 : vector<8x32xf32>
    %225 = arith.index_cast %c2_i32 : i32 to index
    %c0_68 = arith.constant 0 : index
    %c0_69 = arith.constant 0 : index
    %226 = vector.load %arg10[%225, %c0_68, %c0_69] : memref<8x8x32xf32, #tpu.memory_space<vmem>>, vector<1x8x32xf32>
    %227 = vector.shape_cast %226 : vector<1x8x32xf32> to vector<8x32xf32>
    %228 = vector.shape_cast %199 : vector<8x32xf32> to vector<1x8x32xf32>
    tpu.vector_store %arg10[%225, %c0_68, %c0_69], %228 {strides = array<i32>} : memref<8x8x32xf32, #tpu.memory_space<vmem>>, vector<1x8x32xf32>,
    %229 = arith.index_cast %162 : i32 to index
    %c0_70 = arith.constant 0 : index
    %c0_71 = arith.constant 0 : index
    %230 = vector.load %arg11[%229, %c0_70, %c0_71] : memref<8x8x32xf32, #tpu.memory_space<vmem>>, vector<1x8x32xf32>
    %231 = vector.shape_cast %230 : vector<1x8x32xf32> to vector<8x32xf32>
    %232 = vector.shape_cast %224 : vector<8x32xf32> to vector<1x8x32xf32>
    tpu.vector_store %arg11[%229, %c0_70, %c0_71], %232 {strides = array<i32>} : memref<8x8x32xf32, #tpu.memory_space<vmem>>, vector<1x8x32xf32>,
    %c3_i32 = arith.constant 3 : i32
    %c7_i32_72 = arith.constant 7 : i32
    %233 = arith.subi %c7_i32_72, %c3_i32 : i32
    %234 = arith.index_cast %c3_i32 : i32 to index
    %c0_73 = arith.constant 0 : index
    %c0_74 = arith.constant 0 : index
    %235 = vector.load %arg12[%234, %c0_73, %c0_74] : memref<8x8x128xf32, #tpu.memory_space<vmem>>, vector<1x8x128xf32>
    %236 = vector.shape_cast %235 : vector<1x8x128xf32> to vector<8x128xf32>
    %237 = arith.truncf %199 : vector<8x32xf32> to vector<8x32xbf16>
    %cst_75 = arith.constant dense<0.000000e+00> : vector<8x128xf32>
    %238 = tpu.matmul %237, %17, %cst_75 {dimension_numbers = #tpu.dot_dimension_numbers<[1], [0], [0], [1], [0, 0, 1, 1], [], []>} : vector<8x32xbf16>, vector<32x128xbf16>, vector<8x128xf32> -> vector<8x128xf32>
    %239 = arith.addf %236, %238 : vector<8x128xf32>
    %240 = arith.index_cast %233 : i32 to index
    %c0_76 = arith.constant 0 : index
    %c0_77 = arith.constant 0 : index
    %241 = vector.load %arg13[%240, %c0_76, %c0_77] : memref<8x8x128xf32, #tpu.memory_space<vmem>>, vector<1x8x128xf32>
    %242 = vector.shape_cast %241 : vector<1x8x128xf32> to vector<8x128xf32>
    %243 = arith.truncf %224 : vector<8x32xf32> to vector<8x32xbf16>
    %cst_78 = arith.constant dense<0.000000e+00> : vector<8x128xf32>
    %244 = tpu.matmul %243, %18, %cst_78 {dimension_numbers = #tpu.dot_dimension_numbers<[1], [0], [0], [1], [0, 0, 1, 1], [], []>} : vector<8x32xbf16>, vector<32x128xbf16>, vector<8x128xf32> -> vector<8x128xf32>
    %245 = arith.addf %242, %244 : vector<8x128xf32>
    %246 = vector.extract_strided_slice %239 {offsets = [0, 0], sizes = [8, 32], strides = [1, 1]} : vector<8x128xf32> to vector<8x32xf32>
    %247 = arith.negf %246 : vector<8x32xf32>
    %248 = math.exp %247 : vector<8x32xf32>
    %cst_79 = arith.constant 1.000000e+00 : f32
    %249 = vector.broadcast %cst_79 : f32 to vector<8x32xf32>
    %250 = arith.addf %249, %248 : vector<8x32xf32>
    %251 = arith.divf %249, %250 : vector<8x32xf32>
    %252 = vector.extract_strided_slice %239 {offsets = [0, 32], sizes = [8, 32], strides = [1, 1]} : vector<8x128xf32> to vector<8x32xf32>
    %253 = arith.negf %252 : vector<8x32xf32>
    %254 = math.exp %253 : vector<8x32xf32>
    %cst_80 = arith.constant 1.000000e+00 : f32
    %255 = vector.broadcast %cst_80 : f32 to vector<8x32xf32>
    %256 = arith.addf %255, %254 : vector<8x32xf32>
    %257 = arith.divf %255, %256 : vector<8x32xf32>
    %258 = vector.extract_strided_slice %239 {offsets = [0, 64], sizes = [8, 32], strides = [1, 1]} : vector<8x128xf32> to vector<8x32xf32>
    %259 = math.tanh %258 : vector<8x32xf32>
    %260 = vector.extract_strided_slice %239 {offsets = [0, 96], sizes = [8, 32], strides = [1, 1]} : vector<8x128xf32> to vector<8x32xf32>
    %261 = arith.negf %260 : vector<8x32xf32>
    %262 = math.exp %261 : vector<8x32xf32>
    %cst_81 = arith.constant 1.000000e+00 : f32
    %263 = vector.broadcast %cst_81 : f32 to vector<8x32xf32>
    %264 = arith.addf %263, %262 : vector<8x32xf32>
    %265 = arith.divf %263, %264 : vector<8x32xf32>
    %266 = arith.mulf %257, %197 : vector<8x32xf32>
    %267 = arith.mulf %251, %259 : vector<8x32xf32>
    %268 = arith.addf %266, %267 : vector<8x32xf32>
    %269 = math.tanh %268 : vector<8x32xf32>
    %270 = arith.mulf %265, %269 : vector<8x32xf32>
    %271 = vector.extract_strided_slice %245 {offsets = [0, 0], sizes = [8, 32], strides = [1, 1]} : vector<8x128xf32> to vector<8x32xf32>
    %272 = arith.negf %271 : vector<8x32xf32>
    %273 = math.exp %272 : vector<8x32xf32>
    %cst_82 = arith.constant 1.000000e+00 : f32
    %274 = vector.broadcast %cst_82 : f32 to vector<8x32xf32>
    %275 = arith.addf %274, %273 : vector<8x32xf32>
    %276 = arith.divf %274, %275 : vector<8x32xf32>
    %277 = vector.extract_strided_slice %245 {offsets = [0, 32], sizes = [8, 32], strides = [1, 1]} : vector<8x128xf32> to vector<8x32xf32>
    %278 = arith.negf %277 : vector<8x32xf32>
    %279 = math.exp %278 : vector<8x32xf32>
    %cst_83 = arith.constant 1.000000e+00 : f32
    %280 = vector.broadcast %cst_83 : f32 to vector<8x32xf32>
    %281 = arith.addf %280, %279 : vector<8x32xf32>
    %282 = arith.divf %280, %281 : vector<8x32xf32>
    %283 = vector.extract_strided_slice %245 {offsets = [0, 64], sizes = [8, 32], strides = [1, 1]} : vector<8x128xf32> to vector<8x32xf32>
    %284 = math.tanh %283 : vector<8x32xf32>
    %285 = vector.extract_strided_slice %245 {offsets = [0, 96], sizes = [8, 32], strides = [1, 1]} : vector<8x128xf32> to vector<8x32xf32>
    %286 = arith.negf %285 : vector<8x32xf32>
    %287 = math.exp %286 : vector<8x32xf32>
    %cst_84 = arith.constant 1.000000e+00 : f32
    %288 = vector.broadcast %cst_84 : f32 to vector<8x32xf32>
    %289 = arith.addf %288, %287 : vector<8x32xf32>
    %290 = arith.divf %288, %289 : vector<8x32xf32>
    %291 = arith.mulf %282, %222 : vector<8x32xf32>
    %292 = arith.mulf %276, %284 : vector<8x32xf32>
    %293 = arith.addf %291, %292 : vector<8x32xf32>
    %294 = math.tanh %293 : vector<8x32xf32>
    %295 = arith.mulf %290, %294 : vector<8x32xf32>
    %296 = arith.index_cast %c3_i32 : i32 to index
    %c0_85 = arith.constant 0 : index
    %c0_86 = arith.constant 0 : index
    %297 = vector.load %arg10[%296, %c0_85, %c0_86] : memref<8x8x32xf32, #tpu.memory_space<vmem>>, vector<1x8x32xf32>
    %298 = vector.shape_cast %297 : vector<1x8x32xf32> to vector<8x32xf32>
    %299 = vector.shape_cast %270 : vector<8x32xf32> to vector<1x8x32xf32>
    tpu.vector_store %arg10[%296, %c0_85, %c0_86], %299 {strides = array<i32>} : memref<8x8x32xf32, #tpu.memory_space<vmem>>, vector<1x8x32xf32>,
    %300 = arith.index_cast %233 : i32 to index
    %c0_87 = arith.constant 0 : index
    %c0_88 = arith.constant 0 : index
    %301 = vector.load %arg11[%300, %c0_87, %c0_88] : memref<8x8x32xf32, #tpu.memory_space<vmem>>, vector<1x8x32xf32>
    %302 = vector.shape_cast %301 : vector<1x8x32xf32> to vector<8x32xf32>
    %303 = vector.shape_cast %295 : vector<8x32xf32> to vector<1x8x32xf32>
    tpu.vector_store %arg11[%300, %c0_87, %c0_88], %303 {strides = array<i32>} : memref<8x8x32xf32, #tpu.memory_space<vmem>>, vector<1x8x32xf32>,
    %c4_i32 = arith.constant 4 : i32
    %c7_i32_89 = arith.constant 7 : i32
    %304 = arith.subi %c7_i32_89, %c4_i32 : i32
    %305 = arith.index_cast %c4_i32 : i32 to index
    %c0_90 = arith.constant 0 : index
    %c0_91 = arith.constant 0 : index
    %306 = vector.load %arg12[%305, %c0_90, %c0_91] : memref<8x8x128xf32, #tpu.memory_space<vmem>>, vector<1x8x128xf32>
    %307 = vector.shape_cast %306 : vector<1x8x128xf32> to vector<8x128xf32>
    %308 = arith.truncf %270 : vector<8x32xf32> to vector<8x32xbf16>
    %cst_92 = arith.constant dense<0.000000e+00> : vector<8x128xf32>
    %309 = tpu.matmul %308, %17, %cst_92 {dimension_numbers = #tpu.dot_dimension_numbers<[1], [0], [0], [1], [0, 0, 1, 1], [], []>} : vector<8x32xbf16>, vector<32x128xbf16>, vector<8x128xf32> -> vector<8x128xf32>
    %310 = arith.addf %307, %309 : vector<8x128xf32>
    %311 = arith.index_cast %304 : i32 to index
    %c0_93 = arith.constant 0 : index
    %c0_94 = arith.constant 0 : index
    %312 = vector.load %arg13[%311, %c0_93, %c0_94] : memref<8x8x128xf32, #tpu.memory_space<vmem>>, vector<1x8x128xf32>
    %313 = vector.shape_cast %312 : vector<1x8x128xf32> to vector<8x128xf32>
    %314 = arith.truncf %295 : vector<8x32xf32> to vector<8x32xbf16>
    %cst_95 = arith.constant dense<0.000000e+00> : vector<8x128xf32>
    %315 = tpu.matmul %314, %18, %cst_95 {dimension_numbers = #tpu.dot_dimension_numbers<[1], [0], [0], [1], [0, 0, 1, 1], [], []>} : vector<8x32xbf16>, vector<32x128xbf16>, vector<8x128xf32> -> vector<8x128xf32>
    %316 = arith.addf %313, %315 : vector<8x128xf32>
    %317 = vector.extract_strided_slice %310 {offsets = [0, 0], sizes = [8, 32], strides = [1, 1]} : vector<8x128xf32> to vector<8x32xf32>
    %318 = arith.negf %317 : vector<8x32xf32>
    %319 = math.exp %318 : vector<8x32xf32>
    %cst_96 = arith.constant 1.000000e+00 : f32
    %320 = vector.broadcast %cst_96 : f32 to vector<8x32xf32>
    %321 = arith.addf %320, %319 : vector<8x32xf32>
    %322 = arith.divf %320, %321 : vector<8x32xf32>
    %323 = vector.extract_strided_slice %310 {offsets = [0, 32], sizes = [8, 32], strides = [1, 1]} : vector<8x128xf32> to vector<8x32xf32>
    %324 = arith.negf %323 : vector<8x32xf32>
    %325 = math.exp %324 : vector<8x32xf32>
    %cst_97 = arith.constant 1.000000e+00 : f32
    %326 = vector.broadcast %cst_97 : f32 to vector<8x32xf32>
    %327 = arith.addf %326, %325 : vector<8x32xf32>
    %328 = arith.divf %326, %327 : vector<8x32xf32>
    %329 = vector.extract_strided_slice %310 {offsets = [0, 64], sizes = [8, 32], strides = [1, 1]} : vector<8x128xf32> to vector<8x32xf32>
    %330 = math.tanh %329 : vector<8x32xf32>
    %331 = vector.extract_strided_slice %310 {offsets = [0, 96], sizes = [8, 32], strides = [1, 1]} : vector<8x128xf32> to vector<8x32xf32>
    %332 = arith.negf %331 : vector<8x32xf32>
    %333 = math.exp %332 : vector<8x32xf32>
    %cst_98 = arith.constant 1.000000e+00 : f32
    %334 = vector.broadcast %cst_98 : f32 to vector<8x32xf32>
    %335 = arith.addf %334, %333 : vector<8x32xf32>
    %336 = arith.divf %334, %335 : vector<8x32xf32>
    %337 = arith.mulf %328, %268 : vector<8x32xf32>
    %338 = arith.mulf %322, %330 : vector<8x32xf32>
    %339 = arith.addf %337, %338 : vector<8x32xf32>
    %340 = math.tanh %339 : vector<8x32xf32>
    %341 = arith.mulf %336, %340 : vector<8x32xf32>
    %342 = vector.extract_strided_slice %316 {offsets = [0, 0], sizes = [8, 32], strides = [1, 1]} : vector<8x128xf32> to vector<8x32xf32>
    %343 = arith.negf %342 : vector<8x32xf32>
    %344 = math.exp %343 : vector<8x32xf32>
    %cst_99 = arith.constant 1.000000e+00 : f32
    %345 = vector.broadcast %cst_99 : f32 to vector<8x32xf32>
    %346 = arith.addf %345, %344 : vector<8x32xf32>
    %347 = arith.divf %345, %346 : vector<8x32xf32>
    %348 = vector.extract_strided_slice %316 {offsets = [0, 32], sizes = [8, 32], strides = [1, 1]} : vector<8x128xf32> to vector<8x32xf32>
    %349 = arith.negf %348 : vector<8x32xf32>
    %350 = math.exp %349 : vector<8x32xf32>
    %cst_100 = arith.constant 1.000000e+00 : f32
    %351 = vector.broadcast %cst_100 : f32 to vector<8x32xf32>
    %352 = arith.addf %351, %350 : vector<8x32xf32>
    %353 = arith.divf %351, %352 : vector<8x32xf32>
    %354 = vector.extract_strided_slice %316 {offsets = [0, 64], sizes = [8, 32], strides = [1, 1]} : vector<8x128xf32> to vector<8x32xf32>
    %355 = math.tanh %354 : vector<8x32xf32>
    %356 = vector.extract_strided_slice %316 {offsets = [0, 96], sizes = [8, 32], strides = [1, 1]} : vector<8x128xf32> to vector<8x32xf32>
    %357 = arith.negf %356 : vector<8x32xf32>
    %358 = math.exp %357 : vector<8x32xf32>
    %cst_101 = arith.constant 1.000000e+00 : f32
    %359 = vector.broadcast %cst_101 : f32 to vector<8x32xf32>
    %360 = arith.addf %359, %358 : vector<8x32xf32>
    %361 = arith.divf %359, %360 : vector<8x32xf32>
    %362 = arith.mulf %353, %293 : vector<8x32xf32>
    %363 = arith.mulf %347, %355 : vector<8x32xf32>
    %364 = arith.addf %362, %363 : vector<8x32xf32>
    %365 = math.tanh %364 : vector<8x32xf32>
    %366 = arith.mulf %361, %365 : vector<8x32xf32>
    %367 = arith.index_cast %c4_i32 : i32 to index
    %c0_102 = arith.constant 0 : index
    %c0_103 = arith.constant 0 : index
    %368 = vector.load %arg10[%367, %c0_102, %c0_103] : memref<8x8x32xf32, #tpu.memory_space<vmem>>, vector<1x8x32xf32>
    %369 = vector.shape_cast %368 : vector<1x8x32xf32> to vector<8x32xf32>
    %370 = vector.shape_cast %341 : vector<8x32xf32> to vector<1x8x32xf32>
    tpu.vector_store %arg10[%367, %c0_102, %c0_103], %370 {strides = array<i32>} : memref<8x8x32xf32, #tpu.memory_space<vmem>>, vector<1x8x32xf32>,
    %371 = arith.index_cast %304 : i32 to index
    %c0_104 = arith.constant 0 : index
    %c0_105 = arith.constant 0 : index
    %372 = vector.load %arg11[%371, %c0_104, %c0_105] : memref<8x8x32xf32, #tpu.memory_space<vmem>>, vector<1x8x32xf32>
    %373 = vector.shape_cast %372 : vector<1x8x32xf32> to vector<8x32xf32>
    %374 = vector.shape_cast %366 : vector<8x32xf32> to vector<1x8x32xf32>
    tpu.vector_store %arg11[%371, %c0_104, %c0_105], %374 {strides = array<i32>} : memref<8x8x32xf32, #tpu.memory_space<vmem>>, vector<1x8x32xf32>,
    %c5_i32 = arith.constant 5 : i32
    %c7_i32_106 = arith.constant 7 : i32
    %375 = arith.subi %c7_i32_106, %c5_i32 : i32
    %376 = arith.index_cast %c5_i32 : i32 to index
    %c0_107 = arith.constant 0 : index
    %c0_108 = arith.constant 0 : index
    %377 = vector.load %arg12[%376, %c0_107, %c0_108] : memref<8x8x128xf32, #tpu.memory_space<vmem>>, vector<1x8x128xf32>
    %378 = vector.shape_cast %377 : vector<1x8x128xf32> to vector<8x128xf32>
    %379 = arith.truncf %341 : vector<8x32xf32> to vector<8x32xbf16>
    %cst_109 = arith.constant dense<0.000000e+00> : vector<8x128xf32>
    %380 = tpu.matmul %379, %17, %cst_109 {dimension_numbers = #tpu.dot_dimension_numbers<[1], [0], [0], [1], [0, 0, 1, 1], [], []>} : vector<8x32xbf16>, vector<32x128xbf16>, vector<8x128xf32> -> vector<8x128xf32>
    %381 = arith.addf %378, %380 : vector<8x128xf32>
    %382 = arith.index_cast %375 : i32 to index
    %c0_110 = arith.constant 0 : index
    %c0_111 = arith.constant 0 : index
    %383 = vector.load %arg13[%382, %c0_110, %c0_111] : memref<8x8x128xf32, #tpu.memory_space<vmem>>, vector<1x8x128xf32>
    %384 = vector.shape_cast %383 : vector<1x8x128xf32> to vector<8x128xf32>
    %385 = arith.truncf %366 : vector<8x32xf32> to vector<8x32xbf16>
    %cst_112 = arith.constant dense<0.000000e+00> : vector<8x128xf32>
    %386 = tpu.matmul %385, %18, %cst_112 {dimension_numbers = #tpu.dot_dimension_numbers<[1], [0], [0], [1], [0, 0, 1, 1], [], []>} : vector<8x32xbf16>, vector<32x128xbf16>, vector<8x128xf32> -> vector<8x128xf32>
    %387 = arith.addf %384, %386 : vector<8x128xf32>
    %388 = vector.extract_strided_slice %381 {offsets = [0, 0], sizes = [8, 32], strides = [1, 1]} : vector<8x128xf32> to vector<8x32xf32>
    %389 = arith.negf %388 : vector<8x32xf32>
    %390 = math.exp %389 : vector<8x32xf32>
    %cst_113 = arith.constant 1.000000e+00 : f32
    %391 = vector.broadcast %cst_113 : f32 to vector<8x32xf32>
    %392 = arith.addf %391, %390 : vector<8x32xf32>
    %393 = arith.divf %391, %392 : vector<8x32xf32>
    %394 = vector.extract_strided_slice %381 {offsets = [0, 32], sizes = [8, 32], strides = [1, 1]} : vector<8x128xf32> to vector<8x32xf32>
    %395 = arith.negf %394 : vector<8x32xf32>
    %396 = math.exp %395 : vector<8x32xf32>
    %cst_114 = arith.constant 1.000000e+00 : f32
    %397 = vector.broadcast %cst_114 : f32 to vector<8x32xf32>
    %398 = arith.addf %397, %396 : vector<8x32xf32>
    %399 = arith.divf %397, %398 : vector<8x32xf32>
    %400 = vector.extract_strided_slice %381 {offsets = [0, 64], sizes = [8, 32], strides = [1, 1]} : vector<8x128xf32> to vector<8x32xf32>
    %401 = math.tanh %400 : vector<8x32xf32>
    %402 = vector.extract_strided_slice %381 {offsets = [0, 96], sizes = [8, 32], strides = [1, 1]} : vector<8x128xf32> to vector<8x32xf32>
    %403 = arith.negf %402 : vector<8x32xf32>
    %404 = math.exp %403 : vector<8x32xf32>
    %cst_115 = arith.constant 1.000000e+00 : f32
    %405 = vector.broadcast %cst_115 : f32 to vector<8x32xf32>
    %406 = arith.addf %405, %404 : vector<8x32xf32>
    %407 = arith.divf %405, %406 : vector<8x32xf32>
    %408 = arith.mulf %399, %339 : vector<8x32xf32>
    %409 = arith.mulf %393, %401 : vector<8x32xf32>
    %410 = arith.addf %408, %409 : vector<8x32xf32>
    %411 = math.tanh %410 : vector<8x32xf32>
    %412 = arith.mulf %407, %411 : vector<8x32xf32>
    %413 = vector.extract_strided_slice %387 {offsets = [0, 0], sizes = [8, 32], strides = [1, 1]} : vector<8x128xf32> to vector<8x32xf32>
    %414 = arith.negf %413 : vector<8x32xf32>
    %415 = math.exp %414 : vector<8x32xf32>
    %cst_116 = arith.constant 1.000000e+00 : f32
    %416 = vector.broadcast %cst_116 : f32 to vector<8x32xf32>
    %417 = arith.addf %416, %415 : vector<8x32xf32>
    %418 = arith.divf %416, %417 : vector<8x32xf32>
    %419 = vector.extract_strided_slice %387 {offsets = [0, 32], sizes = [8, 32], strides = [1, 1]} : vector<8x128xf32> to vector<8x32xf32>
    %420 = arith.negf %419 : vector<8x32xf32>
    %421 = math.exp %420 : vector<8x32xf32>
    %cst_117 = arith.constant 1.000000e+00 : f32
    %422 = vector.broadcast %cst_117 : f32 to vector<8x32xf32>
    %423 = arith.addf %422, %421 : vector<8x32xf32>
    %424 = arith.divf %422, %423 : vector<8x32xf32>
    %425 = vector.extract_strided_slice %387 {offsets = [0, 64], sizes = [8, 32], strides = [1, 1]} : vector<8x128xf32> to vector<8x32xf32>
    %426 = math.tanh %425 : vector<8x32xf32>
    %427 = vector.extract_strided_slice %387 {offsets = [0, 96], sizes = [8, 32], strides = [1, 1]} : vector<8x128xf32> to vector<8x32xf32>
    %428 = arith.negf %427 : vector<8x32xf32>
    %429 = math.exp %428 : vector<8x32xf32>
    %cst_118 = arith.constant 1.000000e+00 : f32
    %430 = vector.broadcast %cst_118 : f32 to vector<8x32xf32>
    %431 = arith.addf %430, %429 : vector<8x32xf32>
    %432 = arith.divf %430, %431 : vector<8x32xf32>
    %433 = arith.mulf %424, %364 : vector<8x32xf32>
    %434 = arith.mulf %418, %426 : vector<8x32xf32>
    %435 = arith.addf %433, %434 : vector<8x32xf32>
    %436 = math.tanh %435 : vector<8x32xf32>
    %437 = arith.mulf %432, %436 : vector<8x32xf32>
    %438 = arith.index_cast %c5_i32 : i32 to index
    %c0_119 = arith.constant 0 : index
    %c0_120 = arith.constant 0 : index
    %439 = vector.load %arg10[%438, %c0_119, %c0_120] : memref<8x8x32xf32, #tpu.memory_space<vmem>>, vector<1x8x32xf32>
    %440 = vector.shape_cast %439 : vector<1x8x32xf32> to vector<8x32xf32>
    %441 = vector.shape_cast %412 : vector<8x32xf32> to vector<1x8x32xf32>
    tpu.vector_store %arg10[%438, %c0_119, %c0_120], %441 {strides = array<i32>} : memref<8x8x32xf32, #tpu.memory_space<vmem>>, vector<1x8x32xf32>,
    %442 = arith.index_cast %375 : i32 to index
    %c0_121 = arith.constant 0 : index
    %c0_122 = arith.constant 0 : index
    %443 = vector.load %arg11[%442, %c0_121, %c0_122] : memref<8x8x32xf32, #tpu.memory_space<vmem>>, vector<1x8x32xf32>
    %444 = vector.shape_cast %443 : vector<1x8x32xf32> to vector<8x32xf32>
    %445 = vector.shape_cast %437 : vector<8x32xf32> to vector<1x8x32xf32>
    tpu.vector_store %arg11[%442, %c0_121, %c0_122], %445 {strides = array<i32>} : memref<8x8x32xf32, #tpu.memory_space<vmem>>, vector<1x8x32xf32>,
    %c6_i32 = arith.constant 6 : i32
    %c7_i32_123 = arith.constant 7 : i32
    %446 = arith.subi %c7_i32_123, %c6_i32 : i32
    %447 = arith.index_cast %c6_i32 : i32 to index
    %c0_124 = arith.constant 0 : index
    %c0_125 = arith.constant 0 : index
    %448 = vector.load %arg12[%447, %c0_124, %c0_125] : memref<8x8x128xf32, #tpu.memory_space<vmem>>, vector<1x8x128xf32>
    %449 = vector.shape_cast %448 : vector<1x8x128xf32> to vector<8x128xf32>
    %450 = arith.truncf %412 : vector<8x32xf32> to vector<8x32xbf16>
    %cst_126 = arith.constant dense<0.000000e+00> : vector<8x128xf32>
    %451 = tpu.matmul %450, %17, %cst_126 {dimension_numbers = #tpu.dot_dimension_numbers<[1], [0], [0], [1], [0, 0, 1, 1], [], []>} : vector<8x32xbf16>, vector<32x128xbf16>, vector<8x128xf32> -> vector<8x128xf32>
    %452 = arith.addf %449, %451 : vector<8x128xf32>
    %453 = arith.index_cast %446 : i32 to index
    %c0_127 = arith.constant 0 : index
    %c0_128 = arith.constant 0 : index
    %454 = vector.load %arg13[%453, %c0_127, %c0_128] : memref<8x8x128xf32, #tpu.memory_space<vmem>>, vector<1x8x128xf32>
    %455 = vector.shape_cast %454 : vector<1x8x128xf32> to vector<8x128xf32>
    %456 = arith.truncf %437 : vector<8x32xf32> to vector<8x32xbf16>
    %cst_129 = arith.constant dense<0.000000e+00> : vector<8x128xf32>
    %457 = tpu.matmul %456, %18, %cst_129 {dimension_numbers = #tpu.dot_dimension_numbers<[1], [0], [0], [1], [0, 0, 1, 1], [], []>} : vector<8x32xbf16>, vector<32x128xbf16>, vector<8x128xf32> -> vector<8x128xf32>
    %458 = arith.addf %455, %457 : vector<8x128xf32>
    %459 = vector.extract_strided_slice %452 {offsets = [0, 0], sizes = [8, 32], strides = [1, 1]} : vector<8x128xf32> to vector<8x32xf32>
    %460 = arith.negf %459 : vector<8x32xf32>
    %461 = math.exp %460 : vector<8x32xf32>
    %cst_130 = arith.constant 1.000000e+00 : f32
    %462 = vector.broadcast %cst_130 : f32 to vector<8x32xf32>
    %463 = arith.addf %462, %461 : vector<8x32xf32>
    %464 = arith.divf %462, %463 : vector<8x32xf32>
    %465 = vector.extract_strided_slice %452 {offsets = [0, 32], sizes = [8, 32], strides = [1, 1]} : vector<8x128xf32> to vector<8x32xf32>
    %466 = arith.negf %465 : vector<8x32xf32>
    %467 = math.exp %466 : vector<8x32xf32>
    %cst_131 = arith.constant 1.000000e+00 : f32
    %468 = vector.broadcast %cst_131 : f32 to vector<8x32xf32>
    %469 = arith.addf %468, %467 : vector<8x32xf32>
    %470 = arith.divf %468, %469 : vector<8x32xf32>
    %471 = vector.extract_strided_slice %452 {offsets = [0, 64], sizes = [8, 32], strides = [1, 1]} : vector<8x128xf32> to vector<8x32xf32>
    %472 = math.tanh %471 : vector<8x32xf32>
    %473 = vector.extract_strided_slice %452 {offsets = [0, 96], sizes = [8, 32], strides = [1, 1]} : vector<8x128xf32> to vector<8x32xf32>
    %474 = arith.negf %473 : vector<8x32xf32>
    %475 = math.exp %474 : vector<8x32xf32>
    %cst_132 = arith.constant 1.000000e+00 : f32
    %476 = vector.broadcast %cst_132 : f32 to vector<8x32xf32>
    %477 = arith.addf %476, %475 : vector<8x32xf32>
    %478 = arith.divf %476, %477 : vector<8x32xf32>
    %479 = arith.mulf %470, %410 : vector<8x32xf32>
    %480 = arith.mulf %464, %472 : vector<8x32xf32>
    %481 = arith.addf %479, %480 : vector<8x32xf32>
    %482 = math.tanh %481 : vector<8x32xf32>
    %483 = arith.mulf %478, %482 : vector<8x32xf32>
    %484 = vector.extract_strided_slice %458 {offsets = [0, 0], sizes = [8, 32], strides = [1, 1]} : vector<8x128xf32> to vector<8x32xf32>
    %485 = arith.negf %484 : vector<8x32xf32>
    %486 = math.exp %485 : vector<8x32xf32>
    %cst_133 = arith.constant 1.000000e+00 : f32
    %487 = vector.broadcast %cst_133 : f32 to vector<8x32xf32>
    %488 = arith.addf %487, %486 : vector<8x32xf32>
    %489 = arith.divf %487, %488 : vector<8x32xf32>
    %490 = vector.extract_strided_slice %458 {offsets = [0, 32], sizes = [8, 32], strides = [1, 1]} : vector<8x128xf32> to vector<8x32xf32>
    %491 = arith.negf %490 : vector<8x32xf32>
    %492 = math.exp %491 : vector<8x32xf32>
    %cst_134 = arith.constant 1.000000e+00 : f32
    %493 = vector.broadcast %cst_134 : f32 to vector<8x32xf32>
    %494 = arith.addf %493, %492 : vector<8x32xf32>
    %495 = arith.divf %493, %494 : vector<8x32xf32>
    %496 = vector.extract_strided_slice %458 {offsets = [0, 64], sizes = [8, 32], strides = [1, 1]} : vector<8x128xf32> to vector<8x32xf32>
    %497 = math.tanh %496 : vector<8x32xf32>
    %498 = vector.extract_strided_slice %458 {offsets = [0, 96], sizes = [8, 32], strides = [1, 1]} : vector<8x128xf32> to vector<8x32xf32>
    %499 = arith.negf %498 : vector<8x32xf32>
    %500 = math.exp %499 : vector<8x32xf32>
    %cst_135 = arith.constant 1.000000e+00 : f32
    %501 = vector.broadcast %cst_135 : f32 to vector<8x32xf32>
    %502 = arith.addf %501, %500 : vector<8x32xf32>
    %503 = arith.divf %501, %502 : vector<8x32xf32>
    %504 = arith.mulf %495, %435 : vector<8x32xf32>
    %505 = arith.mulf %489, %497 : vector<8x32xf32>
    %506 = arith.addf %504, %505 : vector<8x32xf32>
    %507 = math.tanh %506 : vector<8x32xf32>
    %508 = arith.mulf %503, %507 : vector<8x32xf32>
    %509 = arith.index_cast %c6_i32 : i32 to index
    %c0_136 = arith.constant 0 : index
    %c0_137 = arith.constant 0 : index
    %510 = vector.load %arg10[%509, %c0_136, %c0_137] : memref<8x8x32xf32, #tpu.memory_space<vmem>>, vector<1x8x32xf32>
    %511 = vector.shape_cast %510 : vector<1x8x32xf32> to vector<8x32xf32>
    %512 = vector.shape_cast %483 : vector<8x32xf32> to vector<1x8x32xf32>
    tpu.vector_store %arg10[%509, %c0_136, %c0_137], %512 {strides = array<i32>} : memref<8x8x32xf32, #tpu.memory_space<vmem>>, vector<1x8x32xf32>,
    %513 = arith.index_cast %446 : i32 to index
    %c0_138 = arith.constant 0 : index
    %c0_139 = arith.constant 0 : index
    %514 = vector.load %arg11[%513, %c0_138, %c0_139] : memref<8x8x32xf32, #tpu.memory_space<vmem>>, vector<1x8x32xf32>
    %515 = vector.shape_cast %514 : vector<1x8x32xf32> to vector<8x32xf32>
    %516 = vector.shape_cast %508 : vector<8x32xf32> to vector<1x8x32xf32>
    tpu.vector_store %arg11[%513, %c0_138, %c0_139], %516 {strides = array<i32>} : memref<8x8x32xf32, #tpu.memory_space<vmem>>, vector<1x8x32xf32>,
    %c7_i32_140 = arith.constant 7 : i32
    %c7_i32_141 = arith.constant 7 : i32
    %517 = arith.subi %c7_i32_141, %c7_i32_140 : i32
    %518 = arith.index_cast %c7_i32_140 : i32 to index
    %c0_142 = arith.constant 0 : index
    %c0_143 = arith.constant 0 : index
    %519 = vector.load %arg12[%518, %c0_142, %c0_143] : memref<8x8x128xf32, #tpu.memory_space<vmem>>, vector<1x8x128xf32>
    %520 = vector.shape_cast %519 : vector<1x8x128xf32> to vector<8x128xf32>
    %521 = arith.truncf %483 : vector<8x32xf32> to vector<8x32xbf16>
    %cst_144 = arith.constant dense<0.000000e+00> : vector<8x128xf32>
    %522 = tpu.matmul %521, %17, %cst_144 {dimension_numbers = #tpu.dot_dimension_numbers<[1], [0], [0], [1], [0, 0, 1, 1], [], []>} : vector<8x32xbf16>, vector<32x128xbf16>, vector<8x128xf32> -> vector<8x128xf32>
    %523 = arith.addf %520, %522 : vector<8x128xf32>
    %524 = arith.index_cast %517 : i32 to index
    %c0_145 = arith.constant 0 : index
    %c0_146 = arith.constant 0 : index
    %525 = vector.load %arg13[%524, %c0_145, %c0_146] : memref<8x8x128xf32, #tpu.memory_space<vmem>>, vector<1x8x128xf32>
    %526 = vector.shape_cast %525 : vector<1x8x128xf32> to vector<8x128xf32>
    %527 = arith.truncf %508 : vector<8x32xf32> to vector<8x32xbf16>
    %cst_147 = arith.constant dense<0.000000e+00> : vector<8x128xf32>
    %528 = tpu.matmul %527, %18, %cst_147 {dimension_numbers = #tpu.dot_dimension_numbers<[1], [0], [0], [1], [0, 0, 1, 1], [], []>} : vector<8x32xbf16>, vector<32x128xbf16>, vector<8x128xf32> -> vector<8x128xf32>
    %529 = arith.addf %526, %528 : vector<8x128xf32>
    %530 = vector.extract_strided_slice %523 {offsets = [0, 0], sizes = [8, 32], strides = [1, 1]} : vector<8x128xf32> to vector<8x32xf32>
    %531 = arith.negf %530 : vector<8x32xf32>
    %532 = math.exp %531 : vector<8x32xf32>
    %cst_148 = arith.constant 1.000000e+00 : f32
    %533 = vector.broadcast %cst_148 : f32 to vector<8x32xf32>
    %534 = arith.addf %533, %532 : vector<8x32xf32>
    %535 = arith.divf %533, %534 : vector<8x32xf32>
    %536 = vector.extract_strided_slice %523 {offsets = [0, 32], sizes = [8, 32], strides = [1, 1]} : vector<8x128xf32> to vector<8x32xf32>
    %537 = arith.negf %536 : vector<8x32xf32>
    %538 = math.exp %537 : vector<8x32xf32>
    %cst_149 = arith.constant 1.000000e+00 : f32
    %539 = vector.broadcast %cst_149 : f32 to vector<8x32xf32>
    %540 = arith.addf %539, %538 : vector<8x32xf32>
    %541 = arith.divf %539, %540 : vector<8x32xf32>
    %542 = vector.extract_strided_slice %523 {offsets = [0, 64], sizes = [8, 32], strides = [1, 1]} : vector<8x128xf32> to vector<8x32xf32>
    %543 = math.tanh %542 : vector<8x32xf32>
    %544 = vector.extract_strided_slice %523 {offsets = [0, 96], sizes = [8, 32], strides = [1, 1]} : vector<8x128xf32> to vector<8x32xf32>
    %545 = arith.negf %544 : vector<8x32xf32>
    %546 = math.exp %545 : vector<8x32xf32>
    %cst_150 = arith.constant 1.000000e+00 : f32
    %547 = vector.broadcast %cst_150 : f32 to vector<8x32xf32>
    %548 = arith.addf %547, %546 : vector<8x32xf32>
    %549 = arith.divf %547, %548 : vector<8x32xf32>
    %550 = arith.mulf %541, %481 : vector<8x32xf32>
    %551 = arith.mulf %535, %543 : vector<8x32xf32>
    %552 = arith.addf %550, %551 : vector<8x32xf32>
    %553 = math.tanh %552 : vector<8x32xf32>
    %554 = arith.mulf %549, %553 : vector<8x32xf32>
    %555 = vector.extract_strided_slice %529 {offsets = [0, 0], sizes = [8, 32], strides = [1, 1]} : vector<8x128xf32> to vector<8x32xf32>
    %556 = arith.negf %555 : vector<8x32xf32>
    %557 = math.exp %556 : vector<8x32xf32>
    %cst_151 = arith.constant 1.000000e+00 : f32
    %558 = vector.broadcast %cst_151 : f32 to vector<8x32xf32>
    %559 = arith.addf %558, %557 : vector<8x32xf32>
    %560 = arith.divf %558, %559 : vector<8x32xf32>
    %561 = vector.extract_strided_slice %529 {offsets = [0, 32], sizes = [8, 32], strides = [1, 1]} : vector<8x128xf32> to vector<8x32xf32>
    %562 = arith.negf %561 : vector<8x32xf32>
    %563 = math.exp %562 : vector<8x32xf32>
    %cst_152 = arith.constant 1.000000e+00 : f32
    %564 = vector.broadcast %cst_152 : f32 to vector<8x32xf32>
    %565 = arith.addf %564, %563 : vector<8x32xf32>
    %566 = arith.divf %564, %565 : vector<8x32xf32>
    %567 = vector.extract_strided_slice %529 {offsets = [0, 64], sizes = [8, 32], strides = [1, 1]} : vector<8x128xf32> to vector<8x32xf32>
    %568 = math.tanh %567 : vector<8x32xf32>
    %569 = vector.extract_strided_slice %529 {offsets = [0, 96], sizes = [8, 32], strides = [1, 1]} : vector<8x128xf32> to vector<8x32xf32>
    %570 = arith.negf %569 : vector<8x32xf32>
    %571 = math.exp %570 : vector<8x32xf32>
    %cst_153 = arith.constant 1.000000e+00 : f32
    %572 = vector.broadcast %cst_153 : f32 to vector<8x32xf32>
    %573 = arith.addf %572, %571 : vector<8x32xf32>
    %574 = arith.divf %572, %573 : vector<8x32xf32>
    %575 = arith.mulf %566, %506 : vector<8x32xf32>
    %576 = arith.mulf %560, %568 : vector<8x32xf32>
    %577 = arith.addf %575, %576 : vector<8x32xf32>
    %578 = math.tanh %577 : vector<8x32xf32>
    %579 = arith.mulf %574, %578 : vector<8x32xf32>
    %580 = arith.index_cast %c7_i32_140 : i32 to index
    %c0_154 = arith.constant 0 : index
    %c0_155 = arith.constant 0 : index
    %581 = vector.load %arg10[%580, %c0_154, %c0_155] : memref<8x8x32xf32, #tpu.memory_space<vmem>>, vector<1x8x32xf32>
    %582 = vector.shape_cast %581 : vector<1x8x32xf32> to vector<8x32xf32>
    %583 = vector.shape_cast %554 : vector<8x32xf32> to vector<1x8x32xf32>
    tpu.vector_store %arg10[%580, %c0_154, %c0_155], %583 {strides = array<i32>} : memref<8x8x32xf32, #tpu.memory_space<vmem>>, vector<1x8x32xf32>,
    %584 = arith.index_cast %517 : i32 to index
    %c0_156 = arith.constant 0 : index
    %c0_157 = arith.constant 0 : index
    %585 = vector.load %arg11[%584, %c0_156, %c0_157] : memref<8x8x32xf32, #tpu.memory_space<vmem>>, vector<1x8x32xf32>
    %586 = vector.shape_cast %585 : vector<1x8x32xf32> to vector<8x32xf32>
    %587 = vector.shape_cast %579 : vector<8x32xf32> to vector<1x8x32xf32>
    tpu.vector_store %arg11[%584, %c0_156, %c0_157], %587 {strides = array<i32>} : memref<8x8x32xf32, #tpu.memory_space<vmem>>, vector<1x8x32xf32>,
    %c8_i32 = arith.constant 8 : i32
    %c0_158 = arith.constant 0 : index
    %c0_159 = arith.constant 0 : index
    %c0_160 = arith.constant 0 : index
    %588 = vector.load %arg10[%c0_158, %c0_159, %c0_160] : memref<8x8x32xf32, #tpu.memory_space<vmem>>, vector<8x8x32xf32>
    %c0_161 = arith.constant 0 : index
    %c0_162 = arith.constant 0 : index
    %c0_163 = arith.constant 0 : index
    %589 = vector.load %arg11[%c0_161, %c0_162, %c0_163] : memref<8x8x32xf32, #tpu.memory_space<vmem>>, vector<8x8x32xf32>
    %590 = tpu.concatenate %588, %589 in 2 : vector<8x8x32xf32>, vector<8x8x32xf32> -> vector<8x8x64xf32>
    %591 = vector.shape_cast %590 : vector<8x8x64xf32> to vector<64x64xf32>
    %592 = arith.truncf %591 : vector<64x64xf32> to vector<64x64xbf16>
    %c0_164 = arith.constant 0 : index
    %c0_165 = arith.constant 0 : index
    %593 = vector.load %arg7[%c0_164, %c0_165] : memref<64x128xbf16, #tpu.memory_space<vmem>>, vector<64x128xbf16>
    %cst_166 = arith.constant dense<0.000000e+00> : vector<64x128xf32>
    %594 = tpu.matmul %592, %593, %cst_166 {dimension_numbers = #tpu.dot_dimension_numbers<[1], [0], [0], [1], [0, 0, 1, 1], [], []>} : vector<64x64xbf16>, vector<64x128xbf16>, vector<64x128xf32> -> vector<64x128xf32>
    %c0_167 = arith.constant 0 : index
    %c0_168 = arith.constant 0 : index
    %595 = vector.load %arg8[%c0_167, %c0_168] : memref<1x128xf32, #tpu.memory_space<vmem>>, vector<1x128xf32>
    %596 = vector.broadcast %595 : vector<1x128xf32> to vector<64x128xf32>
    %597 = arith.addf %594, %596 : vector<64x128xf32>
    %598 = vector.shape_cast %597 : vector<64x128xf32> to vector<8x8x128xf32>
    %c0_169 = arith.constant 0 : index
    %c0_170 = arith.constant 0 : index
    %c0_171 = arith.constant 0 : index
    %599 = vector.load %arg9[%c0_169, %c0_170, %c0_171] : memref<8x8x128xf32, #tpu.memory_space<vmem>>, vector<8x8x128xf32>
    tpu.vector_store %arg9[%c0_169, %c0_170, %c0_171], %598 {strides = array<i32>} : memref<8x8x128xf32, #tpu.memory_space<vmem>>, vector<8x8x128xf32>,
    return
  }
}

</mosaic_0001>

<llo_original>
// kernel: torch_model_forward.2
$region0: #{torch_model_forward.2}
  #allocation0 [shape = 'u32[]', space=smem, size = 0x4, offset = 0x4, fixed_abs, tag = 'smem constant byte address 0x4 - core index']
  #allocation1 [shape = 'u32[144,128]{1,0:T(1,128)}', space=vmem, size = 0x12000, scoped, tag = 'internal scratch']
  #allocation2 [shape = 'f32[8,8,32]{2,1,0:T(8,128)}', space=vmem, size = 0x8000, scoped, tag = 'scratch operand']
  #allocation3 [shape = 'f32[8,8,32]{2,1,0:T(8,128)}', space=vmem, size = 0x8000, scoped, tag = 'scratch operand']
  #allocation4 [shape = 'f32[8,8,128]{2,1,0:T(8,128)}', space=vmem, size = 0x8000, scoped, tag = 'scratch operand']
  #allocation5 [shape = 'f32[8,8,128]{2,1,0:T(8,128)}', space=vmem, size = 0x8000, scoped, tag = 'scratch operand']
  %s0 = inlined_call_operand.vmem [shape: f32[8,8,32], index: 0, kind: input, shape index: {}]
  %s1 = inlined_call_operand.vmem [shape: bf16[32,128], index: 1, kind: input, shape index: {}]
  %s2 = inlined_call_operand.vmem [shape: bf16[32,128], index: 2, kind: input, shape index: {}]
  %s3 = inlined_call_operand.vmem [shape: f32[1,128], index: 3, kind: input, shape index: {}]
  %s4 = inlined_call_operand.vmem [shape: bf16[32,128], index: 4, kind: input, shape index: {}]
  %s5 = inlined_call_operand.vmem [shape: bf16[32,128], index: 5, kind: input, shape index: {}]
  %s6 = inlined_call_operand.vmem [shape: f32[1,128], index: 6, kind: input, shape index: {}]
  %s7 = inlined_call_operand.vmem [shape: f32[8,8,64], index: 7, kind: output, shape index: {}]
  %s8 = sld [smem:[#allocation0]]
  $region38: #{torch_model_forward.2} parent=0
    _
  %s10 = ssub.s32 1, %s8
  %s11 = scalar_select 0, %s10, %s8
  // Predicated region
  $region2: #{torch_model_forward.2} parent=0 // pred_check
    _
  $region3: #{torch_model_forward.2} parent=0 // pred_check_branch
    %13 = sbr.rel (0) target = $region5
  $region4: #{torch_model_forward.2} parent=0 // pred_region
    _
  $region5: #{torch_model_forward.2} parent=0 // pred_fallthru
    _
  // Predicated region
  $region6: #{torch_model_forward.2} parent=0 // pred_check
    _
  $region7: #{torch_model_forward.2} parent=0 // pred_check_branch
    %15 = sbr.rel (0) target = $region9
  $region8: #{torch_model_forward.2} parent=0 // pred_region
    _
  $region9: #{torch_model_forward.2} parent=0 // pred_fallthru
    _
  // Predicated region
  $region10: #{torch_model_forward.2} parent=0 // pred_check
    _
  $region11: #{torch_model_forward.2} parent=0 // pred_check_branch
    %17 = sbr.rel (0) target = $region13
  $region12: #{torch_model_forward.2} parent=0 // pred_region
    _
  $region13: #{torch_model_forward.2} parent=0 // pred_fallthru
    _
  // Predicated region
  $region14: #{torch_model_forward.2} parent=0 // pred_check
    _
  $region15: #{torch_model_forward.2} parent=0 // pred_check_branch
    %19 = sbr.rel (0) target = $region17
  $region16: #{torch_model_forward.2} parent=0 // pred_region
    _
  $region17: #{torch_model_forward.2} parent=0 // pred_fallthru
    _
  // Predicated region
  $region18: #{torch_model_forward.2} parent=0 // pred_check
    _
  $region19: #{torch_model_forward.2} parent=0 // pred_check_branch
    %21 = sbr.rel (0) target = $region21
  $region20: #{torch_model_forward.2} parent=0 // pred_region
    _
  $region21: #{torch_model_forward.2} parent=0 // pred_fallthru
    _
  // Predicated region
  $region22: #{torch_model_forward.2} parent=0 // pred_check
    _
  $region23: #{torch_model_forward.2} parent=0 // pred_check_branch
    %23 = sbr.rel (0) target = $region25
  $region24: #{torch_model_forward.2} parent=0 // pred_region
    _
  $region25: #{torch_model_forward.2} parent=0 // pred_fallthru
    _
  // Predicated region
  $region26: #{torch_model_forward.2} parent=0 // pred_check
    _
  $region27: #{torch_model_forward.2} parent=0 // pred_check_branch
    %25 = sbr.rel (0) target = $region29
  $region28: #{torch_model_forward.2} parent=0 // pred_region
    _
  $region29: #{torch_model_forward.2} parent=0 // pred_fallthru
    _
  %v27 = vld [vmem:[%s0] sm:$0xff]
  %v28 = vld [vmem:[%s0 + $0x8] sm:$0xff]
  %v29 = vld [vmem:[%s0 + $0x10] sm:$0xff]
  %v30 = vld [vmem:[%s0 + $0x18] sm:$0xff]
  %v31 = vld [vmem:[%s0 + $0x20] sm:$0xff]
  %v32 = vld [vmem:[%s0 + $0x28] sm:$0xff]
  %v33 = vld [vmem:[%s0 + $0x30] sm:$0xff]
  %v34 = vld [vmem:[%s0 + $0x38] sm:$0xff]
  %v35 = vpack.c.bf16 %v28, %v27
  %v36 = vpack.c.bf16 %v30, %v29
  %v37 = vpack.c.bf16 %v32, %v31
  %v38 = vpack.c.bf16 %v34, %v33
  %v39 = vld [vmem:[%s1] sm:$0xf]
  %v40 = vld [vmem:[%s1 + $0x4] sm:$0xf]
  %v41 = vld [vmem:[%s1 + $0x8] sm:$0xf]
  %v42 = vld [vmem:[%s1 + $0xc] sm:$0xf]
  %v43 = vld [vmem:[%s3] sm:$0x1]
  %v45 = vlaneseq
  %v46 = vshrl.u32 %v45, 7
  %v47 = vsub.s32 0, %v46
  %v48 = vrot.slane %v43, %v47
  %v54 = vunpack.c.l.b16 %v39
  %v55 = vunpack.c.l.b16 %v40
  %v56 = vunpack.c.l.b16 %v41
  %v57 = vunpack.c.l.b16 %v42
  %v58 = vpack.c.b16 %v55, %v54
  %v59 = vpack.c.b16 %v57, %v56
  %vm62 = vcmask 261120
  %v64 = vsel %vm62, %v35, 0
  %v67 = vsel %vm62, %v36, 0
  %v70 = vsel %vm62, %v37, 0
  %v73 = vsel %vm62, %v38, 0
  %75 = vmatprep.subr.bf16.mxu0 0
  %76 = vmatpush1.bf16.msra.mxu0 %v58
  %77 = vmatprep.subr.bf16.mxu0 0
  %78 = vmatpush1.bf16.msra.mxu0 %v59
  %79 = vmatprep.subr.bf16.mxu0 0
  %80 = vmatpush1.bf16.msra.mxu0 0
  %81 = vmatprep.subr.bf16.mxu0 0
  %82 = vmatpush1.bf16.msra.mxu0 0
  %83 = vmatprep.subr.bf16.mxu0 0
  %84 = vmatpush1.bf16.msra.mxu0 0
  %85 = vmatprep.subr.bf16.mxu0 0
  %86 = vmatpush1.bf16.msra.mxu0 0
  %87 = vmatprep.subr.bf16.mxu0 0
  %88 = vmatpush1.bf16.msra.mxu0 0
  %89 = vmatprep.subr.bf16.mxu0 0
  %90 = vmatpush1.bf16.msra.mxu0 0
  %91 = vmatprep.subr.bf16.mxu0 0
  %92 = vmatpush1.bf16.msra.mxu0 0
  %93 = vmatprep.subr.bf16.mxu0 0
  %94 = vmatpush1.bf16.msra.mxu0 0
  %95 = vmatprep.subr.bf16.mxu0 0
  %96 = vmatpush1.bf16.msra.mxu0 0
  %97 = vmatprep.subr.bf16.mxu0 0
  %98 = vmatpush1.bf16.msra.mxu0 0
  %99 = vmatprep.subr.bf16.mxu0 0
  %100 = vmatpush1.bf16.msra.mxu0 0
  %101 = vmatprep.subr.bf16.mxu0 0
  %102 = vmatpush1.bf16.msra.mxu0 0
  %103 = vmatprep.subr.bf16.mxu0 0
  %104 = vmatpush1.bf16.msra.mxu0 0
  %105 = vmatprep.subr.bf16.mxu0 0
  %106 = vmatpush1.bf16.msra.mxu0 0
  %107 = vmatprep.mubr.bf16.mxu0 0
  %108 = vmatmul.mubr.bf16.gmra.mrb[0].mxu0 %v64
  %v109 = vpop.f32.mrb[0].mxu0
  %v110 = vadd.f32 %v48, %v109
  %v111 = vpop.f32.mrb[0].mxu0
  %v112 = vpop.f32.mrb[0].mxu0
  %v113 = vadd.f32 %v48, %v112
  %v114 = vpop.f32.mrb[0].mxu0
  %115 = vmatprep.mubr.bf16.mxu0 0
  %116 = vmatmul.mubr.bf16.gmra.mrb[0].mxu0 %v67
  %v117 = vpop.f32.mrb[0].mxu0
  %v118 = vadd.f32 %v48, %v117
  %v119 = vpop.f32.mrb[0].mxu0
  %v120 = vpop.f32.mrb[0].mxu0
  %v121 = vadd.f32 %v48, %v120
  %v122 = vpop.f32.mrb[0].mxu0
  %123 = vmatprep.mubr.bf16.mxu0 0
  %124 = vmatmul.mubr.bf16.gmra.mrb[0].mxu0 %v70
  %v125 = vpop.f32.mrb[0].mxu0
  %v126 = vadd.f32 %v48, %v125
  %v127 = vpop.f32.mrb[0].mxu0
  %v128 = vpop.f32.mrb[0].mxu0
  %v129 = vadd.f32 %v48, %v128
  %v130 = vpop.f32.mrb[0].mxu0
  %131 = vmatprep.mubr.bf16.mxu0 0
  %132 = vmatmul.mubr.bf16.gmra.mrb[0].mxu0 %v73
  %v133 = vpop.f32.mrb[0].mxu0
  %v134 = vadd.f32 %v48, %v133
  %v135 = vpop.f32.mrb[0].mxu0
  %v136 = vpop.f32.mrb[0].mxu0
  %v137 = vadd.f32 %v48, %v136
  %v138 = vpop.f32.mrb[0].mxu0
  %139 = vdwg.mxu0
  %140 = vst [vmem:[#allocation4] sm:$0xff] %v110
  %141 = vst [vmem:[#allocation4 + $0x8] sm:$0xff] %v113
  %142 = vst [vmem:[#allocation4 + $0x10] sm:$0xff] %v118
  %143 = vst [vmem:[#allocation4 + $0x18] sm:$0xff] %v121
  %144 = vst [vmem:[#allocation4 + $0x20] sm:$0xff] %v126
  %145 = vst [vmem:[#allocation4 + $0x28] sm:$0xff] %v129
  %146 = vst [vmem:[#allocation4 + $0x30] sm:$0xff] %v134
  %147 = vst [vmem:[#allocation4 + $0x38] sm:$0xff] %v137
  %v148 = vld [vmem:[%s4] sm:$0xf]
  %v149 = vld [vmem:[%s4 + $0x4] sm:$0xf]
  %v150 = vld [vmem:[%s4 + $0x8] sm:$0xf]
  %v151 = vld [vmem:[%s4 + $0xc] sm:$0xf]
  %v152 = vld [vmem:[%s6] sm:$0x1]
  %v154 = vlaneseq
  %v155 = vshrl.u32 %v154, 7
  %v156 = vsub.s32 0, %v155
  %v157 = vrot.slane %v152, %v156
  %v163 = vunpack.c.l.b16 %v148
  %v164 = vunpack.c.l.b16 %v149
  %v165 = vunpack.c.l.b16 %v150
  %v166 = vunpack.c.l.b16 %v151
  %v167 = vpack.c.b16 %v164, %v163
  %v168 = vpack.c.b16 %v166, %v165
  %171 = vmatprep.subr.bf16.mxu0 0
  %172 = vmatpush1.bf16.msra.mxu0 %v167
  %173 = vmatprep.subr.bf16.mxu0 0
  %174 = vmatpush1.bf16.msra.mxu0 %v168
  %175 = vmatprep.subr.bf16.mxu0 0
  %176 = vmatpush1.bf16.msra.mxu0 0
  %177 = vmatprep.subr.bf16.mxu0 0
  %178 = vmatpush1.bf16.msra.mxu0 0
  %179 = vmatprep.subr.bf16.mxu0 0
  %180 = vmatpush1.bf16.msra.mxu0 0
  %181 = vmatprep.subr.bf16.mxu0 0
  %182 = vmatpush1.bf16.msra.mxu0 0
  %183 = vmatprep.subr.bf16.mxu0 0
  %184 = vmatpush1.bf16.msra.mxu0 0
  %185 = vmatprep.subr.bf16.mxu0 0
  %186 = vmatpush1.bf16.msra.mxu0 0
  %187 = vmatprep.subr.bf16.mxu0 0
  %188 = vmatpush1.bf16.msra.mxu0 0
  %189 = vmatprep.subr.bf16.mxu0 0
  %190 = vmatpush1.bf16.msra.mxu0 0
  %191 = vmatprep.subr.bf16.mxu0 0
  %192 = vmatpush1.bf16.msra.mxu0 0
  %193 = vmatprep.subr.bf16.mxu0 0
  %194 = vmatpush1.bf16.msra.mxu0 0
  %195 = vmatprep.subr.bf16.mxu0 0
  %196 = vmatpush1.bf16.msra.mxu0 0
  %197 = vmatprep.subr.bf16.mxu0 0
  %198 = vmatpush1.bf16.msra.mxu0 0
  %199 = vmatprep.subr.bf16.mxu0 0
  %200 = vmatpush1.bf16.msra.mxu0 0
  %201 = vmatprep.subr.bf16.mxu0 0
  %202 = vmatpush1.bf16.msra.mxu0 0
  %203 = vmatprep.mubr.bf16.mxu0 0
  %204 = vmatmul.mubr.bf16.gmra.mrb[0].mxu0 %v64
  %v205 = vpop.f32.mrb[0].mxu0
  %v206 = vadd.f32 %v157, %v205
  %v207 = vpop.f32.mrb[0].mxu0
  %v208 = vpop.f32.mrb[0].mxu0
  %v209 = vadd.f32 %v157, %v208
  %v210 = vpop.f32.mrb[0].mxu0
  %211 = vmatprep.mubr.bf16.mxu0 0
  %212 = vmatmul.mubr.bf16.gmra.mrb[0].mxu0 %v67
  %v213 = vpop.f32.mrb[0].mxu0
  %v214 = vadd.f32 %v157, %v213
  %v215 = vpop.f32.mrb[0].mxu0
  %v216 = vpop.f32.mrb[0].mxu0
  %v217 = vadd.f32 %v157, %v216
  %v218 = vpop.f32.mrb[0].mxu0
  %219 = vmatprep.mubr.bf16.mxu0 0
  %220 = vmatmul.mubr.bf16.gmra.mrb[0].mxu0 %v70
  %v221 = vpop.f32.mrb[0].mxu0
  %v222 = vadd.f32 %v157, %v221
  %v223 = vpop.f32.mrb[0].mxu0
  %v224 = vpop.f32.mrb[0].mxu0
  %v225 = vadd.f32 %v157, %v224
  %v226 = vpop.f32.mrb[0].mxu0
  %227 = vmatprep.mubr.bf16.mxu0 0
  %228 = vmatmul.mubr.bf16.gmra.mrb[0].mxu0 %v73
  %v229 = vpop.f32.mrb[0].mxu0
  %v230 = vadd.f32 %v157, %v229
  %v231 = vpop.f32.mrb[0].mxu0
  %v232 = vpop.f32.mrb[0].mxu0
  %v233 = vadd.f32 %v157, %v232
  %v234 = vpop.f32.mrb[0].mxu0
  %235 = vdwg.mxu0
  %236 = vst [vmem:[#allocation5] sm:$0xff] %v206
  %237 = vst [vmem:[#allocation5 + $0x8] sm:$0xff] %v209
  %238 = vst [vmem:[#allocation5 + $0x10] sm:$0xff] %v214
  %239 = vst [vmem:[#allocation5 + $0x18] sm:$0xff] %v217
  %240 = vst [vmem:[#allocation5 + $0x20] sm:$0xff] %v222
  %241 = vst [vmem:[#allocation5 + $0x28] sm:$0xff] %v225
  %242 = vst [vmem:[#allocation5 + $0x30] sm:$0xff] %v230
  %243 = vst [vmem:[#allocation5 + $0x38] sm:$0xff] %v233
  %v244 = vld [vmem:[%s2] sm:$0xf]
  %v245 = vld [vmem:[%s2 + $0x4] sm:$0xf]
  %v246 = vld [vmem:[%s2 + $0x8] sm:$0xf]
  %v247 = vld [vmem:[%s2 + $0xc] sm:$0xf]
  %v248 = vld [vmem:[%s5] sm:$0xf]
  %v249 = vld [vmem:[%s5 + $0x4] sm:$0xf]
  %v250 = vld [vmem:[%s5 + $0x8] sm:$0xf]
  %v251 = vld [vmem:[%s5 + $0xc] sm:$0xf]
  %v252 = vld [vmem:[#allocation4] sm:$0xff]
  %v257 = vunpack.c.l.b16 %v244
  %v258 = vunpack.c.l.b16 %v245
  %v259 = vunpack.c.l.b16 %v246
  %v260 = vunpack.c.l.b16 %v247
  %v261 = vpack.c.b16 %v258, %v257
  %v262 = vpack.c.b16 %v260, %v259
  %v266 = vsel %vm62, 0, 0
  %268 = vmatprep.subr.bf16.mxu0 0
  %269 = vmatpush1.bf16.msra.mxu0 %v261
  %270 = vmatprep.subr.bf16.mxu0 0
  %271 = vmatpush1.bf16.msra.mxu0 %v262
  %272 = vmatprep.subr.bf16.mxu0 0
  %273 = vmatpush1.bf16.msra.mxu0 0
  %274 = vmatprep.subr.bf16.mxu0 0
  %275 = vmatpush1.bf16.msra.mxu0 0
  %276 = vmatprep.subr.bf16.mxu0 0
  %277 = vmatpush1.bf16.msra.mxu0 0
  %278 = vmatprep.subr.bf16.mxu0 0
  %279 = vmatpush1.bf16.msra.mxu0 0
  %280 = vmatprep.subr.bf16.mxu0 0
  %281 = vmatpush1.bf16.msra.mxu0 0
  %282 = vmatprep.subr.bf16.mxu0 0
  %283 = vmatpush1.bf16.msra.mxu0 0
  %284 = vmatprep.subr.bf16.mxu0 0
  %285 = vmatpush1.bf16.msra.mxu0 0
  %286 = vmatprep.subr.bf16.mxu0 0
  %287 = vmatpush1.bf16.msra.mxu0 0
  %288 = vmatprep.subr.bf16.mxu0 0
  %289 = vmatpush1.bf16.msra.mxu0 0
  %290 = vmatprep.subr.bf16.mxu0 0
  %291 = vmatpush1.bf16.msra.mxu0 0
  %292 = vmatprep.subr.bf16.mxu0 0
  %293 = vmatpush1.bf16.msra.mxu0 0
  %294 = vmatprep.subr.bf16.mxu0 0
  %295 = vmatpush1.bf16.msra.mxu0 0
  %296 = vmatprep.subr.bf16.mxu0 0
  %297 = vmatpush1.bf16.msra.mxu0 0
  %298 = vmatprep.subr.bf16.mxu0 0
  %299 = vmatpush1.bf16.msra.mxu0 0
  %300 = vmatprep.mubr.bf16.mxu0 0
  %301 = vmatmul.mubr.bf16.gmra.mrb[0].mxu0 %v266
  %v302 = vpop.f32.mrb[0].mxu0
  %v303 = vadd.f32 0.0, %v302
  %v304 = vpop.f32.mrb[0].mxu0
  %v305 = vpop.f32.mrb[0].mxu0
  %v306 = vpop.f32.mrb[0].mxu0
  %307 = vdwg.mxu0
  %v308 = vadd.f32 %v252, %v303
  %s309 = scalar_lea.vmem [#allocation5], 56
  %v310 = vld [vmem:[%s309] sm:$0xff]
  %v315 = vunpack.c.l.b16 %v248
  %v316 = vunpack.c.l.b16 %v249
  %v317 = vunpack.c.l.b16 %v250
  %v318 = vunpack.c.l.b16 %v251
  %v319 = vpack.c.b16 %v316, %v315
  %v320 = vpack.c.b16 %v318, %v317
  %323 = vmatprep.subr.bf16.mxu0 0
  %324 = vmatpush1.bf16.msra.mxu0 %v319
  %325 = vmatprep.subr.bf16.mxu0 0
  %326 = vmatpush1.bf16.msra.mxu0 %v320
  %327 = vmatprep.subr.bf16.mxu0 0
  %328 = vmatpush1.bf16.msra.mxu0 0
  %329 = vmatprep.subr.bf16.mxu0 0
  %330 = vmatpush1.bf16.msra.mxu0 0
  %331 = vmatprep.subr.bf16.mxu0 0
  %332 = vmatpush1.bf16.msra.mxu0 0
  %333 = vmatprep.subr.bf16.mxu0 0
  %334 = vmatpush1.bf16.msra.mxu0 0
  %335 = vmatprep.subr.bf16.mxu0 0
  %336 = vmatpush1.bf16.msra.mxu0 0
  %337 = vmatprep.subr.bf16.mxu0 0
  %338 = vmatpush1.bf16.msra.mxu0 0
  %339 = vmatprep.subr.bf16.mxu0 0
  %340 = vmatpush1.bf16.msra.mxu0 0
  %341 = vmatprep.subr.bf16.mxu0 0
  %342 = vmatpush1.bf16.msra.mxu0 0
  %343 = vmatprep.subr.bf16.mxu0 0
  %344 = vmatpush1.bf16.msra.mxu0 0
  %345 = vmatprep.subr.bf16.mxu0 0
  %346 = vmatpush1.bf16.msra.mxu0 0
  %347 = vmatprep.subr.bf16.mxu0 0
  %348 = vmatpush1.bf16.msra.mxu0 0
  %349 = vmatprep.subr.bf16.mxu0 0
  %350 = vmatpush1.bf16.msra.mxu0 0
  %351 = vmatprep.subr.bf16.mxu0 0
  %352 = vmatpush1.bf16.msra.mxu0 0
  %353 = vmatprep.subr.bf16.mxu0 0
  %354 = vmatpush1.bf16.msra.mxu0 0
  %355 = vmatprep.mubr.bf16.mxu0 0
  %356 = vmatmul.mubr.bf16.gmra.mrb[0].mxu0 %v266
  %v357 = vpop.f32.mrb[0].mxu0
  %v358 = vadd.f32 0.0, %v357
  %v359 = vpop.f32.mrb[0].mxu0
  %v360 = vpop.f32.mrb[0].mxu0
  %v361 = vpop.f32.mrb[0].mxu0
  %362 = vdwg.mxu0
  %v363 = vadd.f32 %v310, %v358
  %v364 = vxor.u32 %v308, 2147483648
  %v365 = vmul.f32 %v364, 1.442695
  %v366 = vpow.pop %v365
  %v367 = vadd.f32 %v366, 1.0
  %v368 = vrcp.pop %v367
  %v369 = vmul.f32 1.0, %v368
  %v370 = vtanh.pop %v308
  %v371 = vmul.f32 %v369, 0.0
  %373 = vrot.lane.b32.xlu0 %v370, 64
  %v374 = vpop.permute.xlu0 %373
  %v376 = vmul.f32 %v369, %v374
  %378 = vrot.lane.b32.xlu0 %v376, 32
  %v379 = vpop.permute.xlu0 %378
  %v381 = vadd.f32 %v371, %v379
  %v382 = vtanh.pop %v381
  %384 = vrot.lane.b32.xlu0 %v382, 64
  %v385 = vpop.permute.xlu0 %384
  %v387 = vmul.f32 %v369, %v385
  %v388 = vxor.u32 %v363, 2147483648
  %v389 = vmul.f32 %v388, 1.442695
  %v390 = vpow.pop %v389
  %v391 = vadd.f32 %v390, 1.0
  %v392 = vrcp.pop %v391
  %v393 = vmul.f32 1.0, %v392
  %v394 = vtanh.pop %v363
  %v395 = vmul.f32 %v393, 0.0
  %397 = vrot.lane.b32.xlu0 %v394, 64
  %v398 = vpop.permute.xlu0 %397
  %v400 = vmul.f32 %v393, %v398
  %402 = vrot.lane.b32.xlu0 %v400, 32
  %v403 = vpop.permute.xlu0 %402
  %v405 = vadd.f32 %v395, %v403
  %v406 = vtanh.pop %v405
  %408 = vrot.lane.b32.xlu0 %v406, 64
  %v409 = vpop.permute.xlu0 %408
  %v411 = vmul.f32 %v393, %v409
  %413 = vrot.lane.b32.xlu0 %v387, 32
  %v414 = vpop.permute.xlu0 %413
  %416 = vst.msk [vmem:[#allocation2] sm:$0xff] %vm62, %v414
  %418 = vrot.lane.b32.xlu0 %v411, 32
  %v419 = vpop.permute.xlu0 %418
  %s421 = scalar_lea.vmem [#allocation3], 56
  %422 = vst.msk [vmem:[%s421] sm:$0xff] %vm62, %v419
  %s423 = scalar_lea.vmem [#allocation4], 8
  %v424 = vld [vmem:[%s423] sm:$0xff]
  %v425 = vpack.c.bf16 %v387, %v387
  %427 = vrot.lane.b32.xlu0 %v425, 32
  %v428 = vpop.permute.xlu0 %427
  %v430 = vsel %vm62, %v428, 0
  %432 = vmatprep.subr.bf16.mxu0 0
  %433 = vmatpush1.bf16.msra.mxu0 %v261
  %434 = vmatprep.subr.bf16.mxu0 0
  %435 = vmatpush1.bf16.msra.mxu0 %v262
  %436 = vmatprep.subr.bf16.mxu0 0
  %437 = vmatpush1.bf16.msra.mxu0 0
  %438 = vmatprep.subr.bf16.mxu0 0
  %439 = vmatpush1.bf16.msra.mxu0 0
  %440 = vmatprep.subr.bf16.mxu0 0
  %441 = vmatpush1.bf16.msra.mxu0 0
  %442 = vmatprep.subr.bf16.mxu0 0
  %443 = vmatpush1.bf16.msra.mxu0 0
  %444 = vmatprep.subr.bf16.mxu0 0
  %445 = vmatpush1.bf16.msra.mxu0 0
  %446 = vmatprep.subr.bf16.mxu0 0
  %447 = vmatpush1.bf16.msra.mxu0 0
  %448 = vmatprep.subr.bf16.mxu0 0
  %449 = vmatpush1.bf16.msra.mxu0 0
  %450 = vmatprep.subr.bf16.mxu0 0
  %451 = vmatpush1.bf16.msra.mxu0 0
  %452 = vmatprep.subr.bf16.mxu0 0
  %453 = vmatpush1.bf16.msra.mxu0 0
  %454 = vmatprep.subr.bf16.mxu0 0
  %455 = vmatpush1.bf16.msra.mxu0 0
  %456 = vmatprep.subr.bf16.mxu0 0
  %457 = vmatpush1.bf16.msra.mxu0 0
  %458 = vmatprep.subr.bf16.mxu0 0
  %459 = vmatpush1.bf16.msra.mxu0 0
  %460 = vmatprep.subr.bf16.mxu0 0
  %461 = vmatpush1.bf16.msra.mxu0 0
  %462 = vmatprep.subr.bf16.mxu0 0
  %463 = vmatpush1.bf16.msra.mxu0 0
  %464 = vmatprep.mubr.bf16.mxu0 0
  %465 = vmatmul.mubr.bf16.gmra.mrb[0].mxu0 %v430
  %v466 = vpop.f32.mrb[0].mxu0
  %v467 = vadd.f32 0.0, %v466
  %v468 = vpop.f32.mrb[0].mxu0
  %v469 = vpop.f32.mrb[0].mxu0
  %v470 = vpop.f32.mrb[0].mxu0
  %471 = vdwg.mxu0
  %v472 = vadd.f32 %v424, %v467
  %s473 = scalar_lea.vmem [#allocation5], 48
  %v474 = vld [vmem:[%s473] sm:$0xff]
  %v475 = vpack.c.bf16 %v411, %v411
  %477 = vrot.lane.b32.xlu0 %v475, 32
  %v478 = vpop.permute.xlu0 %477
  %v480 = vsel %vm62, %v478, 0
  %482 = vmatprep.subr.bf16.mxu0 0
  %483 = vmatpush1.bf16.msra.mxu0 %v319
  %484 = vmatprep.subr.bf16.mxu0 0
  %485 = vmatpush1.bf16.msra.mxu0 %v320
  %486 = vmatprep.subr.bf16.mxu0 0
  %487 = vmatpush1.bf16.msra.mxu0 0
  %488 = vmatprep.subr.bf16.mxu0 0
  %489 = vmatpush1.bf16.msra.mxu0 0
  %490 = vmatprep.subr.bf16.mxu0 0
  %491 = vmatpush1.bf16.msra.mxu0 0
  %492 = vmatprep.subr.bf16.mxu0 0
  %493 = vmatpush1.bf16.msra.mxu0 0
  %494 = vmatprep.subr.bf16.mxu0 0
  %495 = vmatpush1.bf16.msra.mxu0 0
  %496 = vmatprep.subr.bf16.mxu0 0
  %497 = vmatpush1.bf16.msra.mxu0 0
  %498 = vmatprep.subr.bf16.mxu0 0
  %499 = vmatpush1.bf16.msra.mxu0 0
  %500 = vmatprep.subr.bf16.mxu0 0
  %501 = vmatpush1.bf16.msra.mxu0 0
  %502 = vmatprep.subr.bf16.mxu0 0
  %503 = vmatpush1.bf16.msra.mxu0 0
  %504 = vmatprep.subr.bf16.mxu0 0
  %505 = vmatpush1.bf16.msra.mxu0 0
  %506 = vmatprep.subr.bf16.mxu0 0
  %507 = vmatpush1.bf16.msra.mxu0 0
  %508 = vmatprep.subr.bf16.mxu0 0
  %509 = vmatpush1.bf16.msra.mxu0 0
  %510 = vmatprep.subr.bf16.mxu0 0
  %511 = vmatpush1.bf16.msra.mxu0 0
  %512 = vmatprep.subr.bf16.mxu0 0
  %513 = vmatpush1.bf16.msra.mxu0 0
  %514 = vmatprep.mubr.bf16.mxu0 0
  %515 = vmatmul.mubr.bf16.gmra.mrb[0].mxu0 %v480
  %v516 = vpop.f32.mrb[0].mxu0
  %v517 = vadd.f32 0.0, %v516
  %v518 = vpop.f32.mrb[0].mxu0
  %v519 = vpop.f32.mrb[0].mxu0
  %v520 = vpop.f32.mrb[0].mxu0
  %521 = vdwg.mxu0
  %v522 = vadd.f32 %v474, %v517
  %v523 = vxor.u32 %v472, 2147483648
  %v524 = vmul.f32 %v523, 1.442695
  %v525 = vpow.pop %v524
  %v526 = vadd.f32 %v525, 1.0
  %v527 = vrcp.pop %v526
  %v528 = vmul.f32 1.0, %v527
  %v529 = vtanh.pop %v472
  %v530 = vmul.f32 %v528, %v381
  %532 = vrot.lane.b32.xlu0 %v529, 64
  %v533 = vpop.permute.xlu0 %532
  %v535 = vmul.f32 %v528, %v533
  %537 = vrot.lane.b32.xlu0 %v535, 32
  %v538 = vpop.permute.xlu0 %537
  %v540 = vadd.f32 %v530, %v538
  %v541 = vtanh.pop %v540
  %543 = vrot.lane.b32.xlu0 %v541, 64
  %v544 = vpop.permute.xlu0 %543
  %v546 = vmul.f32 %v528, %v544
  %v547 = vxor.u32 %v522, 2147483648
  %v548 = vmul.f32 %v547, 1.442695
  %v549 = vpow.pop %v548
  %v550 = vadd.f32 %v549, 1.0
  %v551 = vrcp.pop %v550
  %v552 = vmul.f32 1.0, %v551
  %v553 = vtanh.pop %v522
  %v554 = vmul.f32 %v552, %v405
  %556 = vrot.lane.b32.xlu0 %v553, 64
  %v557 = vpop.permute.xlu0 %556
  %v559 = vmul.f32 %v552, %v557
  %561 = vrot.lane.b32.xlu0 %v559, 32
  %v562 = vpop.permute.xlu0 %561
  %v564 = vadd.f32 %v554, %v562
  %v565 = vtanh.pop %v564
  %567 = vrot.lane.b32.xlu0 %v565, 64
  %v568 = vpop.permute.xlu0 %567
  %v570 = vmul.f32 %v552, %v568
  %572 = vrot.lane.b32.xlu0 %v546, 32
  %v573 = vpop.permute.xlu0 %572
  %s575 = scalar_lea.vmem [#allocation2], 8
  %576 = vst.msk [vmem:[%s575] sm:$0xff] %vm62, %v573
  %578 = vrot.lane.b32.xlu0 %v570, 32
  %v579 = vpop.permute.xlu0 %578
  %s581 = scalar_lea.vmem [#allocation3], 48
  %582 = vst.msk [vmem:[%s581] sm:$0xff] %vm62, %v579
  %s583 = scalar_lea.vmem [#allocation4], 16
  %v584 = vld [vmem:[%s583] sm:$0xff]
  %v585 = vpack.c.bf16 %v546, %v546
  %587 = vrot.lane.b32.xlu0 %v585, 32
  %v588 = vpop.permute.xlu0 %587
  %v590 = vsel %vm62, %v588, 0
  %592 = vmatprep.subr.bf16.mxu0 0
  %593 = vmatpush1.bf16.msra.mxu0 %v261
  %594 = vmatprep.subr.bf16.mxu0 0
  %595 = vmatpush1.bf16.msra.mxu0 %v262
  %596 = vmatprep.subr.bf16.mxu0 0
  %597 = vmatpush1.bf16.msra.mxu0 0
  %598 = vmatprep.subr.bf16.mxu0 0
  %599 = vmatpush1.bf16.msra.mxu0 0
  %600 = vmatprep.subr.bf16.mxu0 0
  %601 = vmatpush1.bf16.msra.mxu0 0
  %602 = vmatprep.subr.bf16.mxu0 0
  %603 = vmatpush1.bf16.msra.mxu0 0
  %604 = vmatprep.subr.bf16.mxu0 0
  %605 = vmatpush1.bf16.msra.mxu0 0
  %606 = vmatprep.subr.bf16.mxu0 0
  %607 = vmatpush1.bf16.msra.mxu0 0
  %608 = vmatprep.subr.bf16.mxu0 0
  %609 = vmatpush1.bf16.msra.mxu0 0
  %610 = vmatprep.subr.bf16.mxu0 0
  %611 = vmatpush1.bf16.msra.mxu0 0
  %612 = vmatprep.subr.bf16.mxu0 0
  %613 = vmatpush1.bf16.msra.mxu0 0
  %614 = vmatprep.subr.bf16.mxu0 0
  %615 = vmatpush1.bf16.msra.mxu0 0
  %616 = vmatprep.subr.bf16.mxu0 0
  %617 = vmatpush1.bf16.msra.mxu0 0
  %618 = vmatprep.subr.bf16.mxu0 0
  %619 = vmatpush1.bf16.msra.mxu0 0
  %620 = vmatprep.subr.bf16.mxu0 0
  %621 = vmatpush1.bf16.msra.mxu0 0
  %622 = vmatprep.subr.bf16.mxu0 0
  %623 = vmatpush1.bf16.msra.mxu0 0
  %624 = vmatprep.mubr.bf16.mxu0 0
  %625 = vmatmul.mubr.bf16.gmra.mrb[0].mxu0 %v590
  %v626 = vpop.f32.mrb[0].mxu0
  %v627 = vadd.f32 0.0, %v626
  %v628 = vpop.f32.mrb[0].mxu0
  %v629 = vpop.f32.mrb[0].mxu0
  %v630 = vpop.f32.mrb[0].mxu0
  %631 = vdwg.mxu0
  %v632 = vadd.f32 %v584, %v627
  %s633 = scalar_lea.vmem [#allocation5], 40
  %v634 = vld [vmem:[%s633] sm:$0xff]
  %v635 = vpack.c.bf16 %v570, %v570
  %637 = vrot.lane.b32.xlu0 %v635, 32
  %v638 = vpop.permute.xlu0 %637
  %v640 = vsel %vm62, %v638, 0
  %642 = vmatprep.subr.bf16.mxu0 0
  %643 = vmatpush1.bf16.msra.mxu0 %v319
  %644 = vmatprep.subr.bf16.mxu0 0
  %645 = vmatpush1.bf16.msra.mxu0 %v320
  %646 = vmatprep.subr.bf16.mxu0 0
  %647 = vmatpush1.bf16.msra.mxu0 0
  %648 = vmatprep.subr.bf16.mxu0 0
  %649 = vmatpush1.bf16.msra.mxu0 0
  %650 = vmatprep.subr.bf16.mxu0 0
  %651 = vmatpush1.bf16.msra.mxu0 0
  %652 = vmatprep.subr.bf16.mxu0 0
  %653 = vmatpush1.bf16.msra.mxu0 0
  %654 = vmatprep.subr.bf16.mxu0 0
  %655 = vmatpush1.bf16.msra.mxu0 0
  %656 = vmatprep.subr.bf16.mxu0 0
  %657 = vmatpush1.bf16.msra.mxu0 0
  %658 = vmatprep.subr.bf16.mxu0 0
  %659 = vmatpush1.bf16.msra.mxu0 0
  %660 = vmatprep.subr.bf16.mxu0 0
  %661 = vmatpush1.bf16.msra.mxu0 0
  %662 = vmatprep.subr.bf16.mxu0 0
  %663 = vmatpush1.bf16.msra.mxu0 0
  %664 = vmatprep.subr.bf16.mxu0 0
  %665 = vmatpush1.bf16.msra.mxu0 0
  %666 = vmatprep.subr.bf16.mxu0 0
  %667 = vmatpush1.bf16.msra.mxu0 0
  %668 = vmatprep.subr.bf16.mxu0 0
  %669 = vmatpush1.bf16.msra.mxu0 0
  %670 = vmatprep.subr.bf16.mxu0 0
  %671 = vmatpush1.bf16.msra.mxu0 0
  %672 = vmatprep.subr.bf16.mxu0 0
  %673 = vmatpush1.bf16.msra.mxu0 0
  %674 = vmatprep.mubr.bf16.mxu0 0
  %675 = vmatmul.mubr.bf16.gmra.mrb[0].mxu0 %v640
  %v676 = vpop.f32.mrb[0].mxu0
  %v677 = vadd.f32 0.0, %v676
  %v678 = vpop.f32.mrb[0].mxu0
  %v679 = vpop.f32.mrb[0].mxu0
  %v680 = vpop.f32.mrb[0].mxu0
  %681 = vdwg.mxu0
  %v682 = vadd.f32 %v634, %v677
  %v683 = vxor.u32 %v632, 2147483648
  %v684 = vmul.f32 %v683, 1.442695
  %v685 = vpow.pop %v684
  %v686 = vadd.f32 %v685, 1.0
  %v687 = vrcp.pop %v686
  %v688 = vmul.f32 1.0, %v687
  %v689 = vtanh.pop %v632
  %v690 = vmul.f32 %v688, %v540
  %692 = vrot.lane.b32.xlu0 %v689, 64
  %v693 = vpop.permute.xlu0 %692
  %v695 = vmul.f32 %v688, %v693
  %697 = vrot.lane.b32.xlu0 %v695, 32
  %v698 = vpop.permute.xlu0 %697
  %v700 = vadd.f32 %v690, %v698
  %v701 = vtanh.pop %v700
  %703 = vrot.lane.b32.xlu0 %v701, 64
  %v704 = vpop.permute.xlu0 %703
  %v706 = vmul.f32 %v688, %v704
  %v707 = vxor.u32 %v682, 2147483648
  %v708 = vmul.f32 %v707, 1.442695
  %v709 = vpow.pop %v708
  %v710 = vadd.f32 %v709, 1.0
  %v711 = vrcp.pop %v710
  %v712 = vmul.f32 1.0, %v711
  %v713 = vtanh.pop %v682
  %v714 = vmul.f32 %v712, %v564
  %716 = vrot.lane.b32.xlu0 %v713, 64
  %v717 = vpop.permute.xlu0 %716
  %v719 = vmul.f32 %v712, %v717
  %721 = vrot.lane.b32.xlu0 %v719, 32
  %v722 = vpop.permute.xlu0 %721
  %v724 = vadd.f32 %v714, %v722
  %v725 = vtanh.pop %v724
  %727 = vrot.lane.b32.xlu0 %v725, 64
  %v728 = vpop.permute.xlu0 %727
  %v730 = vmul.f32 %v712, %v728
  %732 = vrot.lane.b32.xlu0 %v706, 32
  %v733 = vpop.permute.xlu0 %732
  %s735 = scalar_lea.vmem [#allocation2], 16
  %736 = vst.msk [vmem:[%s735] sm:$0xff] %vm62, %v733
  %738 = vrot.lane.b32.xlu0 %v730, 32
  %v739 = vpop.permute.xlu0 %738
  %s741 = scalar_lea.vmem [#allocation3], 40
  %742 = vst.msk [vmem:[%s741] sm:$0xff] %vm62, %v739
  %s743 = scalar_lea.vmem [#allocation4], 24
  %v744 = vld [vmem:[%s743] sm:$0xff]
  %v745 = vpack.c.bf16 %v706, %v706
  %747 = vrot.lane.b32.xlu0 %v745, 32
  %v748 = vpop.permute.xlu0 %747
  %v750 = vsel %vm62, %v748, 0
  %752 = vmatprep.subr.bf16.mxu0 0
  %753 = vmatpush1.bf16.msra.mxu0 %v261
  %754 = vmatprep.subr.bf16.mxu0 0
  %755 = vmatpush1.bf16.msra.mxu0 %v262
  %756 = vmatprep.subr.bf16.mxu0 0
  %757 = vmatpush1.bf16.msra.mxu0 0
  %758 = vmatprep.subr.bf16.mxu0 0
  %759 = vmatpush1.bf16.msra.mxu0 0
  %760 = vmatprep.subr.bf16.mxu0 0
  %761 = vmatpush1.bf16.msra.mxu0 0
  %762 = vmatprep.subr.bf16.mxu0 0
  %763 = vmatpush1.bf16.msra.mxu0 0
  %764 = vmatprep.subr.bf16.mxu0 0
  %765 = vmatpush1.bf16.msra.mxu0 0
  %766 = vmatprep.subr.bf16.mxu0 0
  %767 = vmatpush1.bf16.msra.mxu0 0
  %768 = vmatprep.subr.bf16.mxu0 0
  %769 = vmatpush1.bf16.msra.mxu0 0
  %770 = vmatprep.subr.bf16.mxu0 0
  %771 = vmatpush1.bf16.msra.mxu0 0
  %772 = vmatprep.subr.bf16.mxu0 0
  %773 = vmatpush1.bf16.msra.mxu0 0
  %774 = vmatprep.subr.bf16.mxu0 0
  %775 = vmatpush1.bf16.msra.mxu0 0
  %776 = vmatprep.subr.bf16.mxu0 0
  %777 = vmatpush1.bf16.msra.mxu0 0
  %778 = vmatprep.subr.bf16.mxu0 0
  %779 = vmatpush1.bf16.msra.mxu0 0
  %780 = vmatprep.subr.bf16.mxu0 0
  %781 = vmatpush1.bf16.msra.mxu0 0
  %782 = vmatprep.subr.bf16.mxu0 0
  %783 = vmatpush1.bf16.msra.mxu0 0
  %784 = vmatprep.mubr.bf16.mxu0 0
  %785 = vmatmul.mubr.bf16.gmra.mrb[0].mxu0 %v750
  %v786 = vpop.f32.mrb[0].mxu0
  %v787 = vadd.f32 0.0, %v786
  %v788 = vpop.f32.mrb[0].mxu0
  %v789 = vpop.f32.mrb[0].mxu0
  %v790 = vpop.f32.mrb[0].mxu0
  %791 = vdwg.mxu0
  %v792 = vadd.f32 %v744, %v787
  %s793 = scalar_lea.vmem [#allocation5], 32
  %v794 = vld [vmem:[%s793] sm:$0xff]
  %v795 = vpack.c.bf16 %v730, %v730
  %797 = vrot.lane.b32.xlu0 %v795, 32
  %v798 = vpop.permute.xlu0 %797
  %v800 = vsel %vm62, %v798, 0
  %802 = vmatprep.subr.bf16.mxu0 0
  %803 = vmatpush1.bf16.msra.mxu0 %v319
  %804 = vmatprep.subr.bf16.mxu0 0
  %805 = vmatpush1.bf16.msra.mxu0 %v320
  %806 = vmatprep.subr.bf16.mxu0 0
  %807 = vmatpush1.bf16.msra.mxu0 0
  %808 = vmatprep.subr.bf16.mxu0 0
  %809 = vmatpush1.bf16.msra.mxu0 0
  %810 = vmatprep.subr.bf16.mxu0 0
  %811 = vmatpush1.bf16.msra.mxu0 0
  %812 = vmatprep.subr.bf16.mxu0 0
  %813 = vmatpush1.bf16.msra.mxu0 0
  %814 = vmatprep.subr.bf16.mxu0 0
  %815 = vmatpush1.bf16.msra.mxu0 0
  %816 = vmatprep.subr.bf16.mxu0 0
  %817 = vmatpush1.bf16.msra.mxu0 0
  %818 = vmatprep.subr.bf16.mxu0 0
  %819 = vmatpush1.bf16.msra.mxu0 0
  %820 = vmatprep.subr.bf16.mxu0 0
  %821 = vmatpush1.bf16.msra.mxu0 0
  %822 = vmatprep.subr.bf16.mxu0 0
  %823 = vmatpush1.bf16.msra.mxu0 0
  %824 = vmatprep.subr.bf16.mxu0 0
  %825 = vmatpush1.bf16.msra.mxu0 0
  %826 = vmatprep.subr.bf16.mxu0 0
  %827 = vmatpush1.bf16.msra.mxu0 0
  %828 = vmatprep.subr.bf16.mxu0 0
  %829 = vmatpush1.bf16.msra.mxu0 0
  %830 = vmatprep.subr.bf16.mxu0 0
  %831 = vmatpush1.bf16.msra.mxu0 0
  %832 = vmatprep.subr.bf16.mxu0 0
  %833 = vmatpush1.bf16.msra.mxu0 0
  %834 = vmatprep.mubr.bf16.mxu0 0
  %835 = vmatmul.mubr.bf16.gmra.mrb[0].mxu0 %v800
  %v836 = vpop.f32.mrb[0].mxu0
  %v837 = vadd.f32 0.0, %v836
  %v838 = vpop.f32.mrb[0].mxu0
  %v839 = vpop.f32.mrb[0].mxu0
  %v840 = vpop.f32.mrb[0].mxu0
  %841 = vdwg.mxu0
  %v842 = vadd.f32 %v794, %v837
  %v843 = vxor.u32 %v792, 2147483648
  %v844 = vmul.f32 %v843, 1.442695
  %v845 = vpow.pop %v844
  %v846 = vadd.f32 %v845, 1.0
  %v847 = vrcp.pop %v846
  %v848 = vmul.f32 1.0, %v847
  %v849 = vtanh.pop %v792
  %v850 = vmul.f32 %v848, %v700
  %852 = vrot.lane.b32.xlu0 %v849, 64
  %v853 = vpop.permute.xlu0 %852
  %v855 = vmul.f32 %v848, %v853
  %857 = vrot.lane.b32.xlu0 %v855, 32
  %v858 = vpop.permute.xlu0 %857
  %v860 = vadd.f32 %v850, %v858
  %v861 = vtanh.pop %v860
  %863 = vrot.lane.b32.xlu0 %v861, 64
  %v864 = vpop.permute.xlu0 %863
  %v866 = vmul.f32 %v848, %v864
  %v867 = vxor.u32 %v842, 2147483648
  %v868 = vmul.f32 %v867, 1.442695
  %v869 = vpow.pop %v868
  %v870 = vadd.f32 %v869, 1.0
  %v871 = vrcp.pop %v870
  %v872 = vmul.f32 1.0, %v871
  %v873 = vtanh.pop %v842
  %v874 = vmul.f32 %v872, %v724
  %876 = vrot.lane.b32.xlu0 %v873, 64
  %v877 = vpop.permute.xlu0 %876
  %v879 = vmul.f32 %v872, %v877
  %881 = vrot.lane.b32.xlu0 %v879, 32
  %v882 = vpop.permute.xlu0 %881
  %v884 = vadd.f32 %v874, %v882
  %v885 = vtanh.pop %v884
  %887 = vrot.lane.b32.xlu0 %v885, 64
  %v888 = vpop.permute.xlu0 %887
  %v890 = vmul.f32 %v872, %v888
  %892 = vrot.lane.b32.xlu0 %v866, 32
  %v893 = vpop.permute.xlu0 %892
  %s895 = scalar_lea.vmem [#allocation2], 24
  %896 = vst.msk [vmem:[%s895] sm:$0xff] %vm62, %v893
  %898 = vrot.lane.b32.xlu0 %v890, 32
  %v899 = vpop.permute.xlu0 %898
  %s901 = scalar_lea.vmem [#allocation3], 32
  %902 = vst.msk [vmem:[%s901] sm:$0xff] %vm62, %v899
  %s903 = scalar_lea.vmem [#allocation4], 32
  %v904 = vld [vmem:[%s903] sm:$0xff]
  %v905 = vpack.c.bf16 %v866, %v866
  %907 = vrot.lane.b32.xlu0 %v905, 32
  %v908 = vpop.permute.xlu0 %907
  %v910 = vsel %vm62, %v908, 0
  %912 = vmatprep.subr.bf16.mxu0 0
  %913 = vmatpush1.bf16.msra.mxu0 %v261
  %914 = vmatprep.subr.bf16.mxu0 0
  %915 = vmatpush1.bf16.msra.mxu0 %v262
  %916 = vmatprep.subr.bf16.mxu0 0
  %917 = vmatpush1.bf16.msra.mxu0 0
  %918 = vmatprep.subr.bf16.mxu0 0
  %919 = vmatpush1.bf16.msra.mxu0 0
  %920 = vmatprep.subr.bf16.mxu0 0
  %921 = vmatpush1.bf16.msra.mxu0 0
  %922 = vmatprep.subr.bf16.mxu0 0
  %923 = vmatpush1.bf16.msra.mxu0 0
  %924 = vmatprep.subr.bf16.mxu0 0
  %925 = vmatpush1.bf16.msra.mxu0 0
  %926 = vmatprep.subr.bf16.mxu0 0
  %927 = vmatpush1.bf16.msra.mxu0 0
  %928 = vmatprep.subr.bf16.mxu0 0
  %929 = vmatpush1.bf16.msra.mxu0 0
  %930 = vmatprep.subr.bf16.mxu0 0
  %931 = vmatpush1.bf16.msra.mxu0 0
  %932 = vmatprep.subr.bf16.mxu0 0
  %933 = vmatpush1.bf16.msra.mxu0 0
  %934 = vmatprep.subr.bf16.mxu0 0
  %935 = vmatpush1.bf16.msra.mxu0 0
  %936 = vmatprep.subr.bf16.mxu0 0
  %937 = vmatpush1.bf16.msra.mxu0 0
  %938 = vmatprep.subr.bf16.mxu0 0
  %939 = vmatpush1.bf16.msra.mxu0 0
  %940 = vmatprep.subr.bf16.mxu0 0
  %941 = vmatpush1.bf16.msra.mxu0 0
  %942 = vmatprep.subr.bf16.mxu0 0
  %943 = vmatpush1.bf16.msra.mxu0 0
  %944 = vmatprep.mubr.bf16.mxu0 0
  %945 = vmatmul.mubr.bf16.gmra.mrb[0].mxu0 %v910
  %v946 = vpop.f32.mrb[0].mxu0
  %v947 = vadd.f32 0.0, %v946
  %v948 = vpop.f32.mrb[0].mxu0
  %v949 = vpop.f32.mrb[0].mxu0
  %v950 = vpop.f32.mrb[0].mxu0
  %951 = vdwg.mxu0
  %v952 = vadd.f32 %v904, %v947
  %s953 = scalar_lea.vmem [#allocation5], 24
  %v954 = vld [vmem:[%s953] sm:$0xff]
  %v955 = vpack.c.bf16 %v890, %v890
  %957 = vrot.lane.b32.xlu0 %v955, 32
  %v958 = vpop.permute.xlu0 %957
  %v960 = vsel %vm62, %v958, 0
  %962 = vmatprep.subr.bf16.mxu0 0
  %963 = vmatpush1.bf16.msra.mxu0 %v319
  %964 = vmatprep.subr.bf16.mxu0 0
  %965 = vmatpush1.bf16.msra.mxu0 %v320
  %966 = vmatprep.subr.bf16.mxu0 0
  %967 = vmatpush1.bf16.msra.mxu0 0
  %968 = vmatprep.subr.bf16.mxu0 0
  %969 = vmatpush1.bf16.msra.mxu0 0
  %970 = vmatprep.subr.bf16.mxu0 0
  %971 = vmatpush1.bf16.msra.mxu0 0
  %972 = vmatprep.subr.bf16.mxu0 0
  %973 = vmatpush1.bf16.msra.mxu0 0
  %974 = vmatprep.subr.bf16.mxu0 0
  %975 = vmatpush1.bf16.msra.mxu0 0
  %976 = vmatprep.subr.bf16.mxu0 0
  %977 = vmatpush1.bf16.msra.mxu0 0
  %978 = vmatprep.subr.bf16.mxu0 0
  %979 = vmatpush1.bf16.msra.mxu0 0
  %980 = vmatprep.subr.bf16.mxu0 0
  %981 = vmatpush1.bf16.msra.mxu0 0
  %982 = vmatprep.subr.bf16.mxu0 0
  %983 = vmatpush1.bf16.msra.mxu0 0
  %984 = vmatprep.subr.bf16.mxu0 0
  %985 = vmatpush1.bf16.msra.mxu0 0
  %986 = vmatprep.subr.bf16.mxu0 0
  %987 = vmatpush1.bf16.msra.mxu0 0
  %988 = vmatprep.subr.bf16.mxu0 0
  %989 = vmatpush1.bf16.msra.mxu0 0
  %990 = vmatprep.subr.bf16.mxu0 0
  %991 = vmatpush1.bf16.msra.mxu0 0
  %992 = vmatprep.subr.bf16.mxu0 0
  %993 = vmatpush1.bf16.msra.mxu0 0
  %994 = vmatprep.mubr.bf16.mxu0 0
  %995 = vmatmul.mubr.bf16.gmra.mrb[0].mxu0 %v960
  %v996 = vpop.f32.mrb[0].mxu0
  %v997 = vadd.f32 0.0, %v996
  %v998 = vpop.f32.mrb[0].mxu0
  %v999 = vpop.f32.mrb[0].mxu0
  %v1000 = vpop.f32.mrb[0].mxu0
  %1001 = vdwg.mxu0
  %v1002 = vadd.f32 %v954, %v997
  %v1003 = vxor.u32 %v952, 2147483648
  %v1004 = vmul.f32 %v1003, 1.442695
  %v1005 = vpow.pop %v1004
  %v1006 = vadd.f32 %v1005, 1.0
  %v1007 = vrcp.pop %v1006
  %v1008 = vmul.f32 1.0, %v1007
  %v1009 = vtanh.pop %v952
  %v1010 = vmul.f32 %v1008, %v860
  %1012 = vrot.lane.b32.xlu0 %v1009, 64
  %v1013 = vpop.permute.xlu0 %1012
  %v1015 = vmul.f32 %v1008, %v1013
  %1017 = vrot.lane.b32.xlu0 %v1015, 32
  %v1018 = vpop.permute.xlu0 %1017
  %v1020 = vadd.f32 %v1010, %v1018
  %v1021 = vtanh.pop %v1020
  %1023 = vrot.lane.b32.xlu0 %v1021, 64
  %v1024 = vpop.permute.xlu0 %1023
  %v1026 = vmul.f32 %v1008, %v1024
  %v1027 = vxor.u32 %v1002, 2147483648
  %v1028 = vmul.f32 %v1027, 1.442695
  %v1029 = vpow.pop %v1028
  %v1030 = vadd.f32 %v1029, 1.0
  %v1031 = vrcp.pop %v1030
  %v1032 = vmul.f32 1.0, %v1031
  %v1033 = vtanh.pop %v1002
  %v1034 = vmul.f32 %v1032, %v884
  %1036 = vrot.lane.b32.xlu0 %v1033, 64
  %v1037 = vpop.permute.xlu0 %1036
  %v1039 = vmul.f32 %v1032, %v1037
  %1041 = vrot.lane.b32.xlu0 %v1039, 32
  %v1042 = vpop.permute.xlu0 %1041
  %v1044 = vadd.f32 %v1034, %v1042
  %v1045 = vtanh.pop %v1044
  %1047 = vrot.lane.b32.xlu0 %v1045, 64
  %v1048 = vpop.permute.xlu0 %1047
  %v1050 = vmul.f32 %v1032, %v1048
  %1052 = vrot.lane.b32.xlu0 %v1026, 32
  %v1053 = vpop.permute.xlu0 %1052
  %s1055 = scalar_lea.vmem [#allocation2], 32
  %1056 = vst.msk [vmem:[%s1055] sm:$0xff] %vm62, %v1053
  %1058 = vrot.lane.b32.xlu0 %v1050, 32
  %v1059 = vpop.permute.xlu0 %1058
  %s1061 = scalar_lea.vmem [#allocation3], 24
  %1062 = vst.msk [vmem:[%s1061] sm:$0xff] %vm62, %v1059
  %s1063 = scalar_lea.vmem [#allocation4], 40
  %v1064 = vld [vmem:[%s1063] sm:$0xff]
  %v1065 = vpack.c.bf16 %v1026, %v1026
  %1067 = vrot.lane.b32.xlu0 %v1065, 32
  %v1068 = vpop.permute.xlu0 %1067
  %v1070 = vsel %vm62, %v1068, 0
  %1072 = vmatprep.subr.bf16.mxu0 0
  %1073 = vmatpush1.bf16.msra.mxu0 %v261
  %1074 = vmatprep.subr.bf16.mxu0 0
  %1075 = vmatpush1.bf16.msra.mxu0 %v262
  %1076 = vmatprep.subr.bf16.mxu0 0
  %1077 = vmatpush1.bf16.msra.mxu0 0
  %1078 = vmatprep.subr.bf16.mxu0 0
  %1079 = vmatpush1.bf16.msra.mxu0 0
  %1080 = vmatprep.subr.bf16.mxu0 0
  %1081 = vmatpush1.bf16.msra.mxu0 0
  %1082 = vmatprep.subr.bf16.mxu0 0
  %1083 = vmatpush1.bf16.msra.mxu0 0
  %1084 = vmatprep.subr.bf16.mxu0 0
  %1085 = vmatpush1.bf16.msra.mxu0 0
  %1086 = vmatprep.subr.bf16.mxu0 0
  %1087 = vmatpush1.bf16.msra.mxu0 0
  %1088 = vmatprep.subr.bf16.mxu0 0
  %1089 = vmatpush1.bf16.msra.mxu0 0
  %1090 = vmatprep.subr.bf16.mxu0 0
  %1091 = vmatpush1.bf16.msra.mxu0 0
  %1092 = vmatprep.subr.bf16.mxu0 0
  %1093 = vmatpush1.bf16.msra.mxu0 0
  %1094 = vmatprep.subr.bf16.mxu0 0
  %1095 = vmatpush1.bf16.msra.mxu0 0
  %1096 = vmatprep.subr.bf16.mxu0 0
  %1097 = vmatpush1.bf16.msra.mxu0 0
  %1098 = vmatprep.subr.bf16.mxu0 0
  %1099 = vmatpush1.bf16.msra.mxu0 0
  %1100 = vmatprep.subr.bf16.mxu0 0
  %1101 = vmatpush1.bf16.msra.mxu0 0
  %1102 = vmatprep.subr.bf16.mxu0 0
  %1103 = vmatpush1.bf16.msra.mxu0 0
  %1104 = vmatprep.mubr.bf16.mxu0 0
  %1105 = vmatmul.mubr.bf16.gmra.mrb[0].mxu0 %v1070
  %v1106 = vpop.f32.mrb[0].mxu0
  %v1107 = vadd.f32 0.0, %v1106
  %v1108 = vpop.f32.mrb[0].mxu0
  %v1109 = vpop.f32.mrb[0].mxu0
  %v1110 = vpop.f32.mrb[0].mxu0
  %1111 = vdwg.mxu0
  %v1112 = vadd.f32 %v1064, %v1107
  %s1113 = scalar_lea.vmem [#allocation5], 16
  %v1114 = vld [vmem:[%s1113] sm:$0xff]
  %v1115 = vpack.c.bf16 %v1050, %v1050
  %1117 = vrot.lane.b32.xlu0 %v1115, 32
  %v1118 = vpop.permute.xlu0 %1117
  %v1120 = vsel %vm62, %v1118, 0
  %1122 = vmatprep.subr.bf16.mxu0 0
  %1123 = vmatpush1.bf16.msra.mxu0 %v319
  %1124 = vmatprep.subr.bf16.mxu0 0
  %1125 = vmatpush1.bf16.msra.mxu0 %v320
  %1126 = vmatprep.subr.bf16.mxu0 0
  %1127 = vmatpush1.bf16.msra.mxu0 0
  %1128 = vmatprep.subr.bf16.mxu0 0
  %1129 = vmatpush1.bf16.msra.mxu0 0
  %1130 = vmatprep.subr.bf16.mxu0 0
  %1131 = vmatpush1.bf16.msra.mxu0 0
  %1132 = vmatprep.subr.bf16.mxu0 0
  %1133 = vmatpush1.bf16.msra.mxu0 0
  %1134 = vmatprep.subr.bf16.mxu0 0
  %1135 = vmatpush1.bf16.msra.mxu0 0
  %1136 = vmatprep.subr.bf16.mxu0 0
  %1137 = vmatpush1.bf16.msra.mxu0 0
  %1138 = vmatprep.subr.bf16.mxu0 0
  %1139 = vmatpush1.bf16.msra.mxu0 0
  %1140 = vmatprep.subr.bf16.mxu0 0
  %1141 = vmatpush1.bf16.msra.mxu0 0
  %1142 = vmatprep.subr.bf16.mxu0 0
  %1143 = vmatpush1.bf16.msra.mxu0 0
  %1144 = vmatprep.subr.bf16.mxu0 0
  %1145 = vmatpush1.bf16.msra.mxu0 0
  %1146 = vmatprep.subr.bf16.mxu0 0
  %1147 = vmatpush1.bf16.msra.mxu0 0
  %1148 = vmatprep.subr.bf16.mxu0 0
  %1149 = vmatpush1.bf16.msra.mxu0 0
  %1150 = vmatprep.subr.bf16.mxu0 0
  %1151 = vmatpush1.bf16.msra.mxu0 0
  %1152 = vmatprep.subr.bf16.mxu0 0
  %1153 = vmatpush1.bf16.msra.mxu0 0
  %1154 = vmatprep.mubr.bf16.mxu0 0
  %1155 = vmatmul.mubr.bf16.gmra.mrb[0].mxu0 %v1120
  %v1156 = vpop.f32.mrb[0].mxu0
  %v1157 = vadd.f32 0.0, %v1156
  %v1158 = vpop.f32.mrb[0].mxu0
  %v1159 = vpop.f32.mrb[0].mxu0
  %v1160 = vpop.f32.mrb[0].mxu0
  %1161 = vdwg.mxu0
  %v1162 = vadd.f32 %v1114, %v1157
  %v1163 = vxor.u32 %v1112, 2147483648
  %v1164 = vmul.f32 %v1163, 1.442695
  %v1165 = vpow.pop %v1164
  %v1166 = vadd.f32 %v1165, 1.0
  %v1167 = vrcp.pop %v1166
  %v1168 = vmul.f32 1.0, %v1167
  %v1169 = vtanh.pop %v1112
  %v1170 = vmul.f32 %v1168, %v1020
  %1172 = vrot.lane.b32.xlu0 %v1169, 64
  %v1173 = vpop.permute.xlu0 %1172
  %v1175 = vmul.f32 %v1168, %v1173
  %1177 = vrot.lane.b32.xlu0 %v1175, 32
  %v1178 = vpop.permute.xlu0 %1177
  %v1180 = vadd.f32 %v1170, %v1178
  %v1181 = vtanh.pop %v1180
  %1183 = vrot.lane.b32.xlu0 %v1181, 64
  %v1184 = vpop.permute.xlu0 %1183
  %v1186 = vmul.f32 %v1168, %v1184
  %v1187 = vxor.u32 %v1162, 2147483648
  %v1188 = vmul.f32 %v1187, 1.442695
  %v1189 = vpow.pop %v1188
  %v1190 = vadd.f32 %v1189, 1.0
  %v1191 = vrcp.pop %v1190
  %v1192 = vmul.f32 1.0, %v1191
  %v1193 = vtanh.pop %v1162
  %v1194 = vmul.f32 %v1192, %v1044
  %1196 = vrot.lane.b32.xlu0 %v1193, 64
  %v1197 = vpop.permute.xlu0 %1196
  %v1199 = vmul.f32 %v1192, %v1197
  %1201 = vrot.lane.b32.xlu0 %v1199, 32
  %v1202 = vpop.permute.xlu0 %1201
  %v1204 = vadd.f32 %v1194, %v1202
  %v1205 = vtanh.pop %v1204
  %1207 = vrot.lane.b32.xlu0 %v1205, 64
  %v1208 = vpop.permute.xlu0 %1207
  %v1210 = vmul.f32 %v1192, %v1208
  %1212 = vrot.lane.b32.xlu0 %v1186, 32
  %v1213 = vpop.permute.xlu0 %1212
  %s1215 = scalar_lea.vmem [#allocation2], 40
  %1216 = vst.msk [vmem:[%s1215] sm:$0xff] %vm62, %v1213
  %1218 = vrot.lane.b32.xlu0 %v1210, 32
  %v1219 = vpop.permute.xlu0 %1218
  %s1221 = scalar_lea.vmem [#allocation3], 16
  %1222 = vst.msk [vmem:[%s1221] sm:$0xff] %vm62, %v1219
  %s1223 = scalar_lea.vmem [#allocation4], 48
  %v1224 = vld [vmem:[%s1223] sm:$0xff]
  %v1225 = vpack.c.bf16 %v1186, %v1186
  %1227 = vrot.lane.b32.xlu0 %v1225, 32
  %v1228 = vpop.permute.xlu0 %1227
  %v1230 = vsel %vm62, %v1228, 0
  %1232 = vmatprep.subr.bf16.mxu0 0
  %1233 = vmatpush1.bf16.msra.mxu0 %v261
  %1234 = vmatprep.subr.bf16.mxu0 0
  %1235 = vmatpush1.bf16.msra.mxu0 %v262
  %1236 = vmatprep.subr.bf16.mxu0 0
  %1237 = vmatpush1.bf16.msra.mxu0 0
  %1238 = vmatprep.subr.bf16.mxu0 0
  %1239 = vmatpush1.bf16.msra.mxu0 0
  %1240 = vmatprep.subr.bf16.mxu0 0
  %1241 = vmatpush1.bf16.msra.mxu0 0
  %1242 = vmatprep.subr.bf16.mxu0 0
  %1243 = vmatpush1.bf16.msra.mxu0 0
  %1244 = vmatprep.subr.bf16.mxu0 0
  %1245 = vmatpush1.bf16.msra.mxu0 0
  %1246 = vmatprep.subr.bf16.mxu0 0
  %1247 = vmatpush1.bf16.msra.mxu0 0
  %1248 = vmatprep.subr.bf16.mxu0 0
  %1249 = vmatpush1.bf16.msra.mxu0 0
  %1250 = vmatprep.subr.bf16.mxu0 0
  %1251 = vmatpush1.bf16.msra.mxu0 0
  %1252 = vmatprep.subr.bf16.mxu0 0
  %1253 = vmatpush1.bf16.msra.mxu0 0
  %1254 = vmatprep.subr.bf16.mxu0 0
  %1255 = vmatpush1.bf16.msra.mxu0 0
  %1256 = vmatprep.subr.bf16.mxu0 0
  %1257 = vmatpush1.bf16.msra.mxu0 0
  %1258 = vmatprep.subr.bf16.mxu0 0
  %1259 = vmatpush1.bf16.msra.mxu0 0
  %1260 = vmatprep.subr.bf16.mxu0 0
  %1261 = vmatpush1.bf16.msra.mxu0 0
  %1262 = vmatprep.subr.bf16.mxu0 0
  %1263 = vmatpush1.bf16.msra.mxu0 0
  %1264 = vmatprep.mubr.bf16.mxu0 0
  %1265 = vmatmul.mubr.bf16.gmra.mrb[0].mxu0 %v1230
  %v1266 = vpop.f32.mrb[0].mxu0
  %v1267 = vadd.f32 0.0, %v1266
  %v1268 = vpop.f32.mrb[0].mxu0
  %v1269 = vpop.f32.mrb[0].mxu0
  %v1270 = vpop.f32.mrb[0].mxu0
  %1271 = vdwg.mxu0
  %v1272 = vadd.f32 %v1224, %v1267
  %s1273 = scalar_lea.vmem [#allocation5], 8
  %v1274 = vld [vmem:[%s1273] sm:$0xff]
  %v1275 = vpack.c.bf16 %v1210, %v1210
  %1277 = vrot.lane.b32.xlu0 %v1275, 32
  %v1278 = vpop.permute.xlu0 %1277
  %v1280 = vsel %vm62, %v1278, 0
  %1282 = vmatprep.subr.bf16.mxu0 0
  %1283 = vmatpush1.bf16.msra.mxu0 %v319
  %1284 = vmatprep.subr.bf16.mxu0 0
  %1285 = vmatpush1.bf16.msra.mxu0 %v320
  %1286 = vmatprep.subr.bf16.mxu0 0
  %1287 = vmatpush1.bf16.msra.mxu0 0
  %1288 = vmatprep.subr.bf16.mxu0 0
  %1289 = vmatpush1.bf16.msra.mxu0 0
  %1290 = vmatprep.subr.bf16.mxu0 0
  %1291 = vmatpush1.bf16.msra.mxu0 0
  %1292 = vmatprep.subr.bf16.mxu0 0
  %1293 = vmatpush1.bf16.msra.mxu0 0
  %1294 = vmatprep.subr.bf16.mxu0 0
  %1295 = vmatpush1.bf16.msra.mxu0 0
  %1296 = vmatprep.subr.bf16.mxu0 0
  %1297 = vmatpush1.bf16.msra.mxu0 0
  %1298 = vmatprep.subr.bf16.mxu0 0
  %1299 = vmatpush1.bf16.msra.mxu0 0
  %1300 = vmatprep.subr.bf16.mxu0 0
  %1301 = vmatpush1.bf16.msra.mxu0 0
  %1302 = vmatprep.subr.bf16.mxu0 0
  %1303 = vmatpush1.bf16.msra.mxu0 0
  %1304 = vmatprep.subr.bf16.mxu0 0
  %1305 = vmatpush1.bf16.msra.mxu0 0
  %1306 = vmatprep.subr.bf16.mxu0 0
  %1307 = vmatpush1.bf16.msra.mxu0 0
  %1308 = vmatprep.subr.bf16.mxu0 0
  %1309 = vmatpush1.bf16.msra.mxu0 0
  %1310 = vmatprep.subr.bf16.mxu0 0
  %1311 = vmatpush1.bf16.msra.mxu0 0
  %1312 = vmatprep.subr.bf16.mxu0 0
  %1313 = vmatpush1.bf16.msra.mxu0 0
  %1314 = vmatprep.mubr.bf16.mxu0 0
  %1315 = vmatmul.mubr.bf16.gmra.mrb[0].mxu0 %v1280
  %v1316 = vpop.f32.mrb[0].mxu0
  %v1317 = vadd.f32 0.0, %v1316
  %v1318 = vpop.f32.mrb[0].mxu0
  %v1319 = vpop.f32.mrb[0].mxu0
  %v1320 = vpop.f32.mrb[0].mxu0
  %1321 = vdwg.mxu0
  %v1322 = vadd.f32 %v1274, %v1317
  %v1323 = vxor.u32 %v1272, 2147483648
  %v1324 = vmul.f32 %v1323, 1.442695
  %v1325 = vpow.pop %v1324
  %v1326 = vadd.f32 %v1325, 1.0
  %v1327 = vrcp.pop %v1326
  %v1328 = vmul.f32 1.0, %v1327
  %v1329 = vtanh.pop %v1272
  %v1330 = vmul.f32 %v1328, %v1180
  %1332 = vrot.lane.b32.xlu0 %v1329, 64
  %v1333 = vpop.permute.xlu0 %1332
  %v1335 = vmul.f32 %v1328, %v1333
  %1337 = vrot.lane.b32.xlu0 %v1335, 32
  %v1338 = vpop.permute.xlu0 %1337
  %v1340 = vadd.f32 %v1330, %v1338
  %v1341 = vtanh.pop %v1340
  %1343 = vrot.lane.b32.xlu0 %v1341, 64
  %v1344 = vpop.permute.xlu0 %1343
  %v1346 = vmul.f32 %v1328, %v1344
  %v1347 = vxor.u32 %v1322, 2147483648
  %v1348 = vmul.f32 %v1347, 1.442695
  %v1349 = vpow.pop %v1348
  %v1350 = vadd.f32 %v1349, 1.0
  %v1351 = vrcp.pop %v1350
  %v1352 = vmul.f32 1.0, %v1351
  %v1353 = vtanh.pop %v1322
  %v1354 = vmul.f32 %v1352, %v1204
  %1356 = vrot.lane.b32.xlu0 %v1353, 64
  %v1357 = vpop.permute.xlu0 %1356
  %v1359 = vmul.f32 %v1352, %v1357
  %1361 = vrot.lane.b32.xlu0 %v1359, 32
  %v1362 = vpop.permute.xlu0 %1361
  %v1364 = vadd.f32 %v1354, %v1362
  %v1365 = vtanh.pop %v1364
  %1367 = vrot.lane.b32.xlu0 %v1365, 64
  %v1368 = vpop.permute.xlu0 %1367
  %v1370 = vmul.f32 %v1352, %v1368
  %1372 = vrot.lane.b32.xlu0 %v1346, 32
  %v1373 = vpop.permute.xlu0 %1372
  %s1375 = scalar_lea.vmem [#allocation2], 48
  %1376 = vst.msk [vmem:[%s1375] sm:$0xff] %vm62, %v1373
  %1378 = vrot.lane.b32.xlu0 %v1370, 32
  %v1379 = vpop.permute.xlu0 %1378
  %s1381 = scalar_lea.vmem [#allocation3], 8
  %1382 = vst.msk [vmem:[%s1381] sm:$0xff] %vm62, %v1379
  %s1383 = scalar_lea.vmem [#allocation4], 56
  %v1384 = vld [vmem:[%s1383] sm:$0xff]
  %v1385 = vpack.c.bf16 %v1346, %v1346
  %1387 = vrot.lane.b32.xlu0 %v1385, 32
  %v1388 = vpop.permute.xlu0 %1387
  %v1390 = vsel %vm62, %v1388, 0
  %1392 = vmatprep.subr.bf16.mxu0 0
  %1393 = vmatpush1.bf16.msra.mxu0 %v261
  %1394 = vmatprep.subr.bf16.mxu0 0
  %1395 = vmatpush1.bf16.msra.mxu0 %v262
  %1396 = vmatprep.subr.bf16.mxu0 0
  %1397 = vmatpush1.bf16.msra.mxu0 0
  %1398 = vmatprep.subr.bf16.mxu0 0
  %1399 = vmatpush1.bf16.msra.mxu0 0
  %1400 = vmatprep.subr.bf16.mxu0 0
  %1401 = vmatpush1.bf16.msra.mxu0 0
  %1402 = vmatprep.subr.bf16.mxu0 0
  %1403 = vmatpush1.bf16.msra.mxu0 0
  %1404 = vmatprep.subr.bf16.mxu0 0
  %1405 = vmatpush1.bf16.msra.mxu0 0
  %1406 = vmatprep.subr.bf16.mxu0 0
  %1407 = vmatpush1.bf16.msra.mxu0 0
  %1408 = vmatprep.subr.bf16.mxu0 0
  %1409 = vmatpush1.bf16.msra.mxu0 0
  %1410 = vmatprep.subr.bf16.mxu0 0
  %1411 = vmatpush1.bf16.msra.mxu0 0
  %1412 = vmatprep.subr.bf16.mxu0 0
  %1413 = vmatpush1.bf16.msra.mxu0 0
  %1414 = vmatprep.subr.bf16.mxu0 0
  %1415 = vmatpush1.bf16.msra.mxu0 0
  %1416 = vmatprep.subr.bf16.mxu0 0
  %1417 = vmatpush1.bf16.msra.mxu0 0
  %1418 = vmatprep.subr.bf16.mxu0 0
  %1419 = vmatpush1.bf16.msra.mxu0 0
  %1420 = vmatprep.subr.bf16.mxu0 0
  %1421 = vmatpush1.bf16.msra.mxu0 0
  %1422 = vmatprep.subr.bf16.mxu0 0
  %1423 = vmatpush1.bf16.msra.mxu0 0
  %1424 = vmatprep.mubr.bf16.mxu0 0
  %1425 = vmatmul.mubr.bf16.gmra.mrb[0].mxu0 %v1390
  %v1426 = vpop.f32.mrb[0].mxu0
  %v1427 = vadd.f32 0.0, %v1426
  %v1428 = vpop.f32.mrb[0].mxu0
  %v1429 = vpop.f32.mrb[0].mxu0
  %v1430 = vpop.f32.mrb[0].mxu0
  %1431 = vdwg.mxu0
  %v1432 = vadd.f32 %v1384, %v1427
  %v1433 = vld [vmem:[#allocation5] sm:$0xff]
  %v1434 = vpack.c.bf16 %v1370, %v1370
  %1436 = vrot.lane.b32.xlu0 %v1434, 32
  %v1437 = vpop.permute.xlu0 %1436
  %v1439 = vsel %vm62, %v1437, 0
  %1441 = vmatprep.subr.bf16.mxu0 0
  %1442 = vmatpush1.bf16.msra.mxu0 %v319
  %1443 = vmatprep.subr.bf16.mxu0 0
  %1444 = vmatpush1.bf16.msra.mxu0 %v320
  %1445 = vmatprep.subr.bf16.mxu0 0
  %1446 = vmatpush1.bf16.msra.mxu0 0
  %1447 = vmatprep.subr.bf16.mxu0 0
  %1448 = vmatpush1.bf16.msra.mxu0 0
  %1449 = vmatprep.subr.bf16.mxu0 0
  %1450 = vmatpush1.bf16.msra.mxu0 0
  %1451 = vmatprep.subr.bf16.mxu0 0
  %1452 = vmatpush1.bf16.msra.mxu0 0
  %1453 = vmatprep.subr.bf16.mxu0 0
  %1454 = vmatpush1.bf16.msra.mxu0 0
  %1455 = vmatprep.subr.bf16.mxu0 0
  %1456 = vmatpush1.bf16.msra.mxu0 0
  %1457 = vmatprep.subr.bf16.mxu0 0
  %1458 = vmatpush1.bf16.msra.mxu0 0
  %1459 = vmatprep.subr.bf16.mxu0 0
  %1460 = vmatpush1.bf16.msra.mxu0 0
  %1461 = vmatprep.subr.bf16.mxu0 0
  %1462 = vmatpush1.bf16.msra.mxu0 0
  %1463 = vmatprep.subr.bf16.mxu0 0
  %1464 = vmatpush1.bf16.msra.mxu0 0
  %1465 = vmatprep.subr.bf16.mxu0 0
  %1466 = vmatpush1.bf16.msra.mxu0 0
  %1467 = vmatprep.subr.bf16.mxu0 0
  %1468 = vmatpush1.bf16.msra.mxu0 0
  %1469 = vmatprep.subr.bf16.mxu0 0
  %1470 = vmatpush1.bf16.msra.mxu0 0
  %1471 = vmatprep.subr.bf16.mxu0 0
  %1472 = vmatpush1.bf16.msra.mxu0 0
  %1473 = vmatprep.mubr.bf16.mxu0 0
  %1474 = vmatmul.mubr.bf16.gmra.mrb[0].mxu0 %v1439
  %v1475 = vpop.f32.mrb[0].mxu0
  %v1476 = vadd.f32 0.0, %v1475
  %v1477 = vpop.f32.mrb[0].mxu0
  %v1478 = vpop.f32.mrb[0].mxu0
  %v1479 = vpop.f32.mrb[0].mxu0
  %1480 = vdwg.mxu0
  %v1481 = vadd.f32 %v1433, %v1476
  %v1482 = vxor.u32 %v1432, 2147483648
  %v1483 = vmul.f32 %v1482, 1.442695
  %v1484 = vpow.pop %v1483
  %v1485 = vadd.f32 %v1484, 1.0
  %v1486 = vrcp.pop %v1485
  %v1487 = vmul.f32 1.0, %v1486
  %v1488 = vtanh.pop %v1432
  %v1489 = vmul.f32 %v1487, %v1340
  %1491 = vrot.lane.b32.xlu0 %v1488, 64
  %v1492 = vpop.permute.xlu0 %1491
  %v1494 = vmul.f32 %v1487, %v1492
  %1496 = vrot.lane.b32.xlu0 %v1494, 32
  %v1497 = vpop.permute.xlu0 %1496
  %v1499 = vadd.f32 %v1489, %v1497
  %v1500 = vtanh.pop %v1499
  %1502 = vrot.lane.b32.xlu0 %v1500, 64
  %v1503 = vpop.permute.xlu0 %1502
  %v1505 = vmul.f32 %v1487, %v1503
  %v1506 = vxor.u32 %v1481, 2147483648
  %v1507 = vmul.f32 %v1506, 1.442695
  %v1508 = vpow.pop %v1507
  %v1509 = vadd.f32 %v1508, 1.0
  %v1510 = vrcp.pop %v1509
  %v1511 = vmul.f32 1.0, %v1510
  %v1512 = vtanh.pop %v1481
  %v1513 = vmul.f32 %v1511, %v1364
  %1515 = vrot.lane.b32.xlu0 %v1512, 64
  %v1516 = vpop.permute.xlu0 %1515
  %v1518 = vmul.f32 %v1511, %v1516
  %1520 = vrot.lane.b32.xlu0 %v1518, 32
  %v1521 = vpop.permute.xlu0 %1520
  %v1523 = vadd.f32 %v1513, %v1521
  %v1524 = vtanh.pop %v1523
  %1526 = vrot.lane.b32.xlu0 %v1524, 64
  %v1527 = vpop.permute.xlu0 %1526
  %v1529 = vmul.f32 %v1511, %v1527
  %1531 = vrot.lane.b32.xlu0 %v1505, 32
  %v1532 = vpop.permute.xlu0 %1531
  %s1534 = scalar_lea.vmem [#allocation2], 56
  %1535 = vst.msk [vmem:[%s1534] sm:$0xff] %vm62, %v1532
  %1537 = vrot.lane.b32.xlu0 %v1529, 32
  %v1538 = vpop.permute.xlu0 %1537
  %1540 = vst.msk [vmem:[#allocation3] sm:$0xff] %vm62, %v1538
  %v1541 = vld [vmem:[#allocation2] sm:$0xff]
  %v1542 = vld [vmem:[#allocation2 + $0x8] sm:$0xff]
  %v1543 = vld [vmem:[#allocation2 + $0x10] sm:$0xff]
  %v1544 = vld [vmem:[#allocation2 + $0x18] sm:$0xff]
  %v1545 = vld [vmem:[#allocation2 + $0x20] sm:$0xff]
  %v1546 = vld [vmem:[#allocation2 + $0x28] sm:$0xff]
  %v1547 = vld [vmem:[#allocation2 + $0x30] sm:$0xff]
  %v1548 = vld [vmem:[#allocation2 + $0x38] sm:$0xff]
  %v1549 = vld [vmem:[#allocation3] sm:$0xff]
  %v1550 = vld [vmem:[#allocation3 + $0x8] sm:$0xff]
  %v1551 = vld [vmem:[#allocation3 + $0x10] sm:$0xff]
  %v1552 = vld [vmem:[#allocation3 + $0x18] sm:$0xff]
  %v1553 = vld [vmem:[#allocation3 + $0x20] sm:$0xff]
  %v1554 = vld [vmem:[#allocation3 + $0x28] sm:$0xff]
  %v1555 = vld [vmem:[#allocation3 + $0x30] sm:$0xff]
  %v1556 = vld [vmem:[#allocation3 + $0x38] sm:$0xff]
  %1565 = vrot.lane.b32.xlu0 %v1549, 32
  %v1566 = vpop.permute.xlu0 %1565
  %1567 = vrot.lane.b32.xlu0 %v1550, 32
  %v1568 = vpop.permute.xlu0 %1567
  %1569 = vrot.lane.b32.xlu0 %v1551, 32
  %v1570 = vpop.permute.xlu0 %1569
  %1571 = vrot.lane.b32.xlu0 %v1552, 32
  %v1572 = vpop.permute.xlu0 %1571
  %1573 = vrot.lane.b32.xlu0 %v1553, 32
  %v1574 = vpop.permute.xlu0 %1573
  %1575 = vrot.lane.b32.xlu0 %v1554, 32
  %v1576 = vpop.permute.xlu0 %1575
  %1577 = vrot.lane.b32.xlu0 %v1555, 32
  %v1578 = vpop.permute.xlu0 %1577
  %1579 = vrot.lane.b32.xlu0 %v1556, 32
  %v1580 = vpop.permute.xlu0 %1579
  %v1589 = vsel %vm62, %v1541, %v1566
  %v1590 = vsel %vm62, %v1542, %v1568
  %v1591 = vsel %vm62, %v1543, %v1570
  %v1592 = vsel %vm62, %v1544, %v1572
  %v1593 = vsel %vm62, %v1545, %v1574
  %v1594 = vsel %vm62, %v1546, %v1576
  %v1595 = vsel %vm62, %v1547, %v1578
  %v1596 = vsel %vm62, %v1548, %v1580
  %vm1597 = vcmask 523264
  %1598 = vst.msk [vmem:[%s7] sm:$0xff] %vm1597, %v1589
  %1599 = vst.msk [vmem:[%s7 + $0x8] sm:$0xff] %vm1597, %v1590
  %1600 = vst.msk [vmem:[%s7 + $0x10] sm:$0xff] %vm1597, %v1591
  %1601 = vst.msk [vmem:[%s7 + $0x18] sm:$0xff] %vm1597, %v1592
  %1602 = vst.msk [vmem:[%s7 + $0x20] sm:$0xff] %vm1597, %v1593
  %1603 = vst.msk [vmem:[%s7 + $0x28] sm:$0xff] %vm1597, %v1594
  %1604 = vst.msk [vmem:[%s7 + $0x30] sm:$0xff] %vm1597, %v1595
  %1605 = vst.msk [vmem:[%s7 + $0x38] sm:$0xff] %vm1597, %v1596
  // Predicated region
  $region30: #{torch_model_forward.2} parent=0 // pred_check
    _
  $region31: #{torch_model_forward.2} parent=0 // pred_check_branch
    %1607 = sbr.rel (0) target = $region33
  $region32: #{torch_model_forward.2} parent=0 // pred_region
    _
  $region33: #{torch_model_forward.2} parent=0 // pred_fallthru
    _
  // Predicated region
  $region34: #{torch_model_forward.2} parent=0 // pred_check
    _
  $region35: #{torch_model_forward.2} parent=0 // pred_check_branch
    %1609 = sbr.rel (0) target = $region37
  $region36: #{torch_model_forward.2} parent=0 // pred_region
    _
  $region37: #{torch_model_forward.2} parent=0 // pred_fallthru
    _

// kernel: torch_model_forward.3
$region0: #{torch_model_forward.3}
  #allocation0 [shape = 'u32[]', space=smem, size = 0x4, offset = 0x4, fixed_abs, tag = 'smem constant byte address 0x4 - core index']
  #allocation1 [shape = 'u32[144,128]{1,0:T(1,128)}', space=vmem, size = 0x12000, scoped, tag = 'internal scratch']
  #allocation2 [shape = 'f32[8,8,32]{2,1,0:T(8,128)}', space=vmem, size = 0x8000, scoped, tag = 'scratch operand']
  #allocation3 [shape = 'f32[8,8,32]{2,1,0:T(8,128)}', space=vmem, size = 0x8000, scoped, tag = 'scratch operand']
  #allocation4 [shape = 'f32[8,8,128]{2,1,0:T(8,128)}', space=vmem, size = 0x8000, scoped, tag = 'scratch operand']
  #allocation5 [shape = 'f32[8,8,128]{2,1,0:T(8,128)}', space=vmem, size = 0x8000, scoped, tag = 'scratch operand']
  %s0 = inlined_call_operand.vmem [shape: f32[8,8,64], index: 0, kind: input, shape index: {}]
  %s1 = inlined_call_operand.vmem [shape: bf16[64,128], index: 1, kind: input, shape index: {}]
  %s2 = inlined_call_operand.vmem [shape: bf16[32,128], index: 2, kind: input, shape index: {}]
  %s3 = inlined_call_operand.vmem [shape: f32[1,128], index: 3, kind: input, shape index: {}]
  %s4 = inlined_call_operand.vmem [shape: bf16[64,128], index: 4, kind: input, shape index: {}]
  %s5 = inlined_call_operand.vmem [shape: bf16[32,128], index: 5, kind: input, shape index: {}]
  %s6 = inlined_call_operand.vmem [shape: f32[1,128], index: 6, kind: input, shape index: {}]
  %s7 = inlined_call_operand.vmem [shape: bf16[64,128], index: 7, kind: input, shape index: {}]
  %s8 = inlined_call_operand.vmem [shape: f32[1,128], index: 8, kind: input, shape index: {}]
  %s9 = inlined_call_operand.vmem [shape: f32[8,8,128], index: 9, kind: output, shape index: {}]
  %s10 = sld [smem:[#allocation0]]
  $region46: #{torch_model_forward.3} parent=0
    _
  %s12 = ssub.s32 1, %s10
  %s13 = scalar_select 0, %s12, %s10
  // Predicated region
  $region2: #{torch_model_forward.3} parent=0 // pred_check
    _
  $region3: #{torch_model_forward.3} parent=0 // pred_check_branch
    %15 = sbr.rel (0) target = $region5
  $region4: #{torch_model_forward.3} parent=0 // pred_region
    _
  $region5: #{torch_model_forward.3} parent=0 // pred_fallthru
    _
  // Predicated region
  $region6: #{torch_model_forward.3} parent=0 // pred_check
    _
  $region7: #{torch_model_forward.3} parent=0 // pred_check_branch
    %17 = sbr.rel (0) target = $region9
  $region8: #{torch_model_forward.3} parent=0 // pred_region
    _
  $region9: #{torch_model_forward.3} parent=0 // pred_fallthru
    _
  // Predicated region
  $region10: #{torch_model_forward.3} parent=0 // pred_check
    _
  $region11: #{torch_model_forward.3} parent=0 // pred_check_branch
    %19 = sbr.rel (0) target = $region13
  $region12: #{torch_model_forward.3} parent=0 // pred_region
    _
  $region13: #{torch_model_forward.3} parent=0 // pred_fallthru
    _
  // Predicated region
  $region14: #{torch_model_forward.3} parent=0 // pred_check
    _
  $region15: #{torch_model_forward.3} parent=0 // pred_check_branch
    %21 = sbr.rel (0) target = $region17
  $region16: #{torch_model_forward.3} parent=0 // pred_region
    _
  $region17: #{torch_model_forward.3} parent=0 // pred_fallthru
    _
  // Predicated region
  $region18: #{torch_model_forward.3} parent=0 // pred_check
    _
  $region19: #{torch_model_forward.3} parent=0 // pred_check_branch
    %23 = sbr.rel (0) target = $region21
  $region20: #{torch_model_forward.3} parent=0 // pred_region
    _
  $region21: #{torch_model_forward.3} parent=0 // pred_fallthru
    _
  // Predicated region
  $region22: #{torch_model_forward.3} parent=0 // pred_check
    _
  $region23: #{torch_model_forward.3} parent=0 // pred_check_branch
    %25 = sbr.rel (0) target = $region25
  $region24: #{torch_model_forward.3} parent=0 // pred_region
    _
  $region25: #{torch_model_forward.3} parent=0 // pred_fallthru
    _
  // Predicated region
  $region26: #{torch_model_forward.3} parent=0 // pred_check
    _
  $region27: #{torch_model_forward.3} parent=0 // pred_check_branch
    %27 = sbr.rel (0) target = $region29
  $region28: #{torch_model_forward.3} parent=0 // pred_region
    _
  $region29: #{torch_model_forward.3} parent=0 // pred_fallthru
    _
  // Predicated region
  $region30: #{torch_model_forward.3} parent=0 // pred_check
    _
  $region31: #{torch_model_forward.3} parent=0 // pred_check_branch
    %29 = sbr.rel (0) target = $region33
  $region32: #{torch_model_forward.3} parent=0 // pred_region
    _
  $region33: #{torch_model_forward.3} parent=0 // pred_fallthru
    _
  // Predicated region
  $region34: #{torch_model_forward.3} parent=0 // pred_check
    _
  $region35: #{torch_model_forward.3} parent=0 // pred_check_branch
    %31 = sbr.rel (0) target = $region37
  $region36: #{torch_model_forward.3} parent=0 // pred_region
    _
  $region37: #{torch_model_forward.3} parent=0 // pred_fallthru
    _
  %v33 = vld [vmem:[%s0] sm:$0xff]
  %v34 = vld [vmem:[%s0 + $0x8] sm:$0xff]
  %v35 = vld [vmem:[%s0 + $0x10] sm:$0xff]
  %v36 = vld [vmem:[%s0 + $0x18] sm:$0xff]
  %v37 = vld [vmem:[%s0 + $0x20] sm:$0xff]
  %v38 = vld [vmem:[%s0 + $0x28] sm:$0xff]
  %v39 = vld [vmem:[%s0 + $0x30] sm:$0xff]
  %v40 = vld [vmem:[%s0 + $0x38] sm:$0xff]
  %v41 = vpack.c.bf16 %v34, %v33
  %v42 = vpack.c.bf16 %v36, %v35
  %v43 = vpack.c.bf16 %v38, %v37
  %v44 = vpack.c.bf16 %v40, %v39
  %v45 = vld [vmem:[%s1] sm:$0xf]
  %v46 = vld [vmem:[%s1 + $0x4] sm:$0xf]
  %v47 = vld [vmem:[%s1 + $0x8] sm:$0xf]
  %v48 = vld [vmem:[%s1 + $0xc] sm:$0xf]
  %v49 = vld [vmem:[%s1 + $0x10] sm:$0xf]
  %v50 = vld [vmem:[%s1 + $0x14] sm:$0xf]
  %v51 = vld [vmem:[%s1 + $0x18] sm:$0xf]
  %v52 = vld [vmem:[%s1 + $0x1c] sm:$0xf]
  %v53 = vld [vmem:[%s3] sm:$0x1]
  %v55 = vlaneseq
  %v56 = vshrl.u32 %v55, 7
  %v57 = vsub.s32 0, %v56
  %v58 = vrot.slane %v53, %v57
  %v68 = vunpack.c.l.b16 %v45
  %v69 = vunpack.c.l.b16 %v46
  %v70 = vunpack.c.l.b16 %v47
  %v71 = vunpack.c.l.b16 %v48
  %v72 = vunpack.c.l.b16 %v49
  %v73 = vunpack.c.l.b16 %v50
  %v74 = vunpack.c.l.b16 %v51
  %v75 = vunpack.c.l.b16 %v52
  %v76 = vpack.c.b16 %v69, %v68
  %v77 = vpack.c.b16 %v71, %v70
  %v78 = vpack.c.b16 %v73, %v72
  %v79 = vpack.c.b16 %v75, %v74
  %vm84 = vcmask 523264
  %v86 = vsel %vm84, %v41, 0
  %v89 = vsel %vm84, %v42, 0
  %v92 = vsel %vm84, %v43, 0
  %v95 = vsel %vm84, %v44, 0
  %97 = vmatprep.subr.bf16.mxu0 0
  %98 = vmatpush1.bf16.msra.mxu0 %v76
  %99 = vmatprep.subr.bf16.mxu0 0
  %100 = vmatpush1.bf16.msra.mxu0 %v77
  %101 = vmatprep.subr.bf16.mxu0 0
  %102 = vmatpush1.bf16.msra.mxu0 %v78
  %103 = vmatprep.subr.bf16.mxu0 0
  %104 = vmatpush1.bf16.msra.mxu0 %v79
  %105 = vmatprep.subr.bf16.mxu0 0
  %106 = vmatpush1.bf16.msra.mxu0 0
  %107 = vmatprep.subr.bf16.mxu0 0
  %108 = vmatpush1.bf16.msra.mxu0 0
  %109 = vmatprep.subr.bf16.mxu0 0
  %110 = vmatpush1.bf16.msra.mxu0 0
  %111 = vmatprep.subr.bf16.mxu0 0
  %112 = vmatpush1.bf16.msra.mxu0 0
  %113 = vmatprep.subr.bf16.mxu0 0
  %114 = vmatpush1.bf16.msra.mxu0 0
  %115 = vmatprep.subr.bf16.mxu0 0
  %116 = vmatpush1.bf16.msra.mxu0 0
  %117 = vmatprep.subr.bf16.mxu0 0
  %118 = vmatpush1.bf16.msra.mxu0 0
  %119 = vmatprep.subr.bf16.mxu0 0
  %120 = vmatpush1.bf16.msra.mxu0 0
  %121 = vmatprep.subr.bf16.mxu0 0
  %122 = vmatpush1.bf16.msra.mxu0 0
  %123 = vmatprep.subr.bf16.mxu0 0
  %124 = vmatpush1.bf16.msra.mxu0 0
  %125 = vmatprep.subr.bf16.mxu0 0
  %126 = vmatpush1.bf16.msra.mxu0 0
  %127 = vmatprep.subr.bf16.mxu0 0
  %128 = vmatpush1.bf16.msra.mxu0 0
  %129 = vmatprep.mubr.bf16.mxu0 0
  %130 = vmatmul.mubr.bf16.gmra.mrb[0].mxu0 %v86
  %v131 = vpop.f32.mrb[0].mxu0
  %v132 = vadd.f32 %v58, %v131
  %v133 = vpop.f32.mrb[0].mxu0
  %v134 = vpop.f32.mrb[0].mxu0
  %v135 = vadd.f32 %v58, %v134
  %v136 = vpop.f32.mrb[0].mxu0
  %137 = vmatprep.mubr.bf16.mxu0 0
  %138 = vmatmul.mubr.bf16.gmra.mrb[0].mxu0 %v89
  %v139 = vpop.f32.mrb[0].mxu0
  %v140 = vadd.f32 %v58, %v139
  %v141 = vpop.f32.mrb[0].mxu0
  %v142 = vpop.f32.mrb[0].mxu0
  %v143 = vadd.f32 %v58, %v142
  %v144 = vpop.f32.mrb[0].mxu0
  %145 = vmatprep.mubr.bf16.mxu0 0
  %146 = vmatmul.mubr.bf16.gmra.mrb[0].mxu0 %v92
  %v147 = vpop.f32.mrb[0].mxu0
  %v148 = vadd.f32 %v58, %v147
  %v149 = vpop.f32.mrb[0].mxu0
  %v150 = vpop.f32.mrb[0].mxu0
  %v151 = vadd.f32 %v58, %v150
  %v152 = vpop.f32.mrb[0].mxu0
  %153 = vmatprep.mubr.bf16.mxu0 0
  %154 = vmatmul.mubr.bf16.gmra.mrb[0].mxu0 %v95
  %v155 = vpop.f32.mrb[0].mxu0
  %v156 = vadd.f32 %v58, %v155
  %v157 = vpop.f32.mrb[0].mxu0
  %v158 = vpop.f32.mrb[0].mxu0
  %v159 = vadd.f32 %v58, %v158
  %v160 = vpop.f32.mrb[0].mxu0
  %161 = vdwg.mxu0
  %162 = vst [vmem:[#allocation4] sm:$0xff] %v132
  %163 = vst [vmem:[#allocation4 + $0x8] sm:$0xff] %v135
  %164 = vst [vmem:[#allocation4 + $0x10] sm:$0xff] %v140
  %165 = vst [vmem:[#allocation4 + $0x18] sm:$0xff] %v143
  %166 = vst [vmem:[#allocation4 + $0x20] sm:$0xff] %v148
  %167 = vst [vmem:[#allocation4 + $0x28] sm:$0xff] %v151
  %168 = vst [vmem:[#allocation4 + $0x30] sm:$0xff] %v156
  %169 = vst [vmem:[#allocation4 + $0x38] sm:$0xff] %v159
  %v170 = vld [vmem:[%s4] sm:$0xf]
  %v171 = vld [vmem:[%s4 + $0x4] sm:$0xf]
  %v172 = vld [vmem:[%s4 + $0x8] sm:$0xf]
  %v173 = vld [vmem:[%s4 + $0xc] sm:$0xf]
  %v174 = vld [vmem:[%s4 + $0x10] sm:$0xf]
  %v175 = vld [vmem:[%s4 + $0x14] sm:$0xf]
  %v176 = vld [vmem:[%s4 + $0x18] sm:$0xf]
  %v177 = vld [vmem:[%s4 + $0x1c] sm:$0xf]
  %v178 = vld [vmem:[%s6] sm:$0x1]
  %v180 = vlaneseq
  %v181 = vshrl.u32 %v180, 7
  %v182 = vsub.s32 0, %v181
  %v183 = vrot.slane %v178, %v182
  %v193 = vunpack.c.l.b16 %v170
  %v194 = vunpack.c.l.b16 %v171
  %v195 = vunpack.c.l.b16 %v172
  %v196 = vunpack.c.l.b16 %v173
  %v197 = vunpack.c.l.b16 %v174
  %v198 = vunpack.c.l.b16 %v175
  %v199 = vunpack.c.l.b16 %v176
  %v200 = vunpack.c.l.b16 %v177
  %v201 = vpack.c.b16 %v194, %v193
  %v202 = vpack.c.b16 %v196, %v195
  %v203 = vpack.c.b16 %v198, %v197
  %v204 = vpack.c.b16 %v200, %v199
  %209 = vmatprep.subr.bf16.mxu0 0
  %210 = vmatpush1.bf16.msra.mxu0 %v201
  %211 = vmatprep.subr.bf16.mxu0 0
  %212 = vmatpush1.bf16.msra.mxu0 %v202
  %213 = vmatprep.subr.bf16.mxu0 0
  %214 = vmatpush1.bf16.msra.mxu0 %v203
  %215 = vmatprep.subr.bf16.mxu0 0
  %216 = vmatpush1.bf16.msra.mxu0 %v204
  %217 = vmatprep.subr.bf16.mxu0 0
  %218 = vmatpush1.bf16.msra.mxu0 0
  %219 = vmatprep.subr.bf16.mxu0 0
  %220 = vmatpush1.bf16.msra.mxu0 0
  %221 = vmatprep.subr.bf16.mxu0 0
  %222 = vmatpush1.bf16.msra.mxu0 0
  %223 = vmatprep.subr.bf16.mxu0 0
  %224 = vmatpush1.bf16.msra.mxu0 0
  %225 = vmatprep.subr.bf16.mxu0 0
  %226 = vmatpush1.bf16.msra.mxu0 0
  %227 = vmatprep.subr.bf16.mxu0 0
  %228 = vmatpush1.bf16.msra.mxu0 0
  %229 = vmatprep.subr.bf16.mxu0 0
  %230 = vmatpush1.bf16.msra.mxu0 0
  %231 = vmatprep.subr.bf16.mxu0 0
  %232 = vmatpush1.bf16.msra.mxu0 0
  %233 = vmatprep.subr.bf16.mxu0 0
  %234 = vmatpush1.bf16.msra.mxu0 0
  %235 = vmatprep.subr.bf16.mxu0 0
  %236 = vmatpush1.bf16.msra.mxu0 0
  %237 = vmatprep.subr.bf16.mxu0 0
  %238 = vmatpush1.bf16.msra.mxu0 0
  %239 = vmatprep.subr.bf16.mxu0 0
  %240 = vmatpush1.bf16.msra.mxu0 0
  %241 = vmatprep.mubr.bf16.mxu0 0
  %242 = vmatmul.mubr.bf16.gmra.mrb[0].mxu0 %v86
  %v243 = vpop.f32.mrb[0].mxu0
  %v244 = vadd.f32 %v183, %v243
  %v245 = vpop.f32.mrb[0].mxu0
  %v246 = vpop.f32.mrb[0].mxu0
  %v247 = vadd.f32 %v183, %v246
  %v248 = vpop.f32.mrb[0].mxu0
  %249 = vmatprep.mubr.bf16.mxu0 0
  %250 = vmatmul.mubr.bf16.gmra.mrb[0].mxu0 %v89
  %v251 = vpop.f32.mrb[0].mxu0
  %v252 = vadd.f32 %v183, %v251
  %v253 = vpop.f32.mrb[0].mxu0
  %v254 = vpop.f32.mrb[0].mxu0
  %v255 = vadd.f32 %v183, %v254
  %v256 = vpop.f32.mrb[0].mxu0
  %257 = vmatprep.mubr.bf16.mxu0 0
  %258 = vmatmul.mubr.bf16.gmra.mrb[0].mxu0 %v92
  %v259 = vpop.f32.mrb[0].mxu0
  %v260 = vadd.f32 %v183, %v259
  %v261 = vpop.f32.mrb[0].mxu0
  %v262 = vpop.f32.mrb[0].mxu0
  %v263 = vadd.f32 %v183, %v262
  %v264 = vpop.f32.mrb[0].mxu0
  %265 = vmatprep.mubr.bf16.mxu0 0
  %266 = vmatmul.mubr.bf16.gmra.mrb[0].mxu0 %v95
  %v267 = vpop.f32.mrb[0].mxu0
  %v268 = vadd.f32 %v183, %v267
  %v269 = vpop.f32.mrb[0].mxu0
  %v270 = vpop.f32.mrb[0].mxu0
  %v271 = vadd.f32 %v183, %v270
  %v272 = vpop.f32.mrb[0].mxu0
  %273 = vdwg.mxu0
  %274 = vst [vmem:[#allocation5] sm:$0xff] %v244
  %275 = vst [vmem:[#allocation5 + $0x8] sm:$0xff] %v247
  %276 = vst [vmem:[#allocation5 + $0x10] sm:$0xff] %v252
  %277 = vst [vmem:[#allocation5 + $0x18] sm:$0xff] %v255
  %278 = vst [vmem:[#allocation5 + $0x20] sm:$0xff] %v260
  %279 = vst [vmem:[#allocation5 + $0x28] sm:$0xff] %v263
  %280 = vst [vmem:[#allocation5 + $0x30] sm:$0xff] %v268
  %281 = vst [vmem:[#allocation5 + $0x38] sm:$0xff] %v271
  %v282 = vld [vmem:[%s2] sm:$0xf]
  %v283 = vld [vmem:[%s2 + $0x4] sm:$0xf]
  %v284 = vld [vmem:[%s2 + $0x8] sm:$0xf]
  %v285 = vld [vmem:[%s2 + $0xc] sm:$0xf]
  %v286 = vld [vmem:[%s5] sm:$0xf]
  %v287 = vld [vmem:[%s5 + $0x4] sm:$0xf]
  %v288 = vld [vmem:[%s5 + $0x8] sm:$0xf]
  %v289 = vld [vmem:[%s5 + $0xc] sm:$0xf]
  %v290 = vld [vmem:[#allocation4] sm:$0xff]
  %v295 = vunpack.c.l.b16 %v282
  %v296 = vunpack.c.l.b16 %v283
  %v297 = vunpack.c.l.b16 %v284
  %v298 = vunpack.c.l.b16 %v285
  %v299 = vpack.c.b16 %v296, %v295
  %v300 = vpack.c.b16 %v298, %v297
  %vm303 = vcmask 261120
  %v305 = vsel %vm303, 0, 0
  %307 = vmatprep.subr.bf16.mxu0 0
  %308 = vmatpush1.bf16.msra.mxu0 %v299
  %309 = vmatprep.subr.bf16.mxu0 0
  %310 = vmatpush1.bf16.msra.mxu0 %v300
  %311 = vmatprep.subr.bf16.mxu0 0
  %312 = vmatpush1.bf16.msra.mxu0 0
  %313 = vmatprep.subr.bf16.mxu0 0
  %314 = vmatpush1.bf16.msra.mxu0 0
  %315 = vmatprep.subr.bf16.mxu0 0
  %316 = vmatpush1.bf16.msra.mxu0 0
  %317 = vmatprep.subr.bf16.mxu0 0
  %318 = vmatpush1.bf16.msra.mxu0 0
  %319 = vmatprep.subr.bf16.mxu0 0
  %320 = vmatpush1.bf16.msra.mxu0 0
  %321 = vmatprep.subr.bf16.mxu0 0
  %322 = vmatpush1.bf16.msra.mxu0 0
  %323 = vmatprep.subr.bf16.mxu0 0
  %324 = vmatpush1.bf16.msra.mxu0 0
  %325 = vmatprep.subr.bf16.mxu0 0
  %326 = vmatpush1.bf16.msra.mxu0 0
  %327 = vmatprep.subr.bf16.mxu0 0
  %328 = vmatpush1.bf16.msra.mxu0 0
  %329 = vmatprep.subr.bf16.mxu0 0
  %330 = vmatpush1.bf16.msra.mxu0 0
  %331 = vmatprep.subr.bf16.mxu0 0
  %332 = vmatpush1.bf16.msra.mxu0 0
  %333 = vmatprep.subr.bf16.mxu0 0
  %334 = vmatpush1.bf16.msra.mxu0 0
  %335 = vmatprep.subr.bf16.mxu0 0
  %336 = vmatpush1.bf16.msra.mxu0 0
  %337 = vmatprep.subr.bf16.mxu0 0
  %338 = vmatpush1.bf16.msra.mxu0 0
  %339 = vmatprep.mubr.bf16.mxu0 0
  %340 = vmatmul.mubr.bf16.gmra.mrb[0].mxu0 %v305
  %v341 = vpop.f32.mrb[0].mxu0
  %v342 = vadd.f32 0.0, %v341
  %v343 = vpop.f32.mrb[0].mxu0
  %v344 = vpop.f32.mrb[0].mxu0
  %v345 = vpop.f32.mrb[0].mxu0
  %346 = vdwg.mxu0
  %v347 = vadd.f32 %v290, %v342
  %s348 = scalar_lea.vmem [#allocation5], 56
  %v349 = vld [vmem:[%s348] sm:$0xff]
  %v354 = vunpack.c.l.b16 %v286
  %v355 = vunpack.c.l.b16 %v287
  %v356 = vunpack.c.l.b16 %v288
  %v357 = vunpack.c.l.b16 %v289
  %v358 = vpack.c.b16 %v355, %v354
  %v359 = vpack.c.b16 %v357, %v356
  %362 = vmatprep.subr.bf16.mxu0 0
  %363 = vmatpush1.bf16.msra.mxu0 %v358
  %364 = vmatprep.subr.bf16.mxu0 0
  %365 = vmatpush1.bf16.msra.mxu0 %v359
  %366 = vmatprep.subr.bf16.mxu0 0
  %367 = vmatpush1.bf16.msra.mxu0 0
  %368 = vmatprep.subr.bf16.mxu0 0
  %369 = vmatpush1.bf16.msra.mxu0 0
  %370 = vmatprep.subr.bf16.mxu0 0
  %371 = vmatpush1.bf16.msra.mxu0 0
  %372 = vmatprep.subr.bf16.mxu0 0
  %373 = vmatpush1.bf16.msra.mxu0 0
  %374 = vmatprep.subr.bf16.mxu0 0
  %375 = vmatpush1.bf16.msra.mxu0 0
  %376 = vmatprep.subr.bf16.mxu0 0
  %377 = vmatpush1.bf16.msra.mxu0 0
  %378 = vmatprep.subr.bf16.mxu0 0
  %379 = vmatpush1.bf16.msra.mxu0 0
  %380 = vmatprep.subr.bf16.mxu0 0
  %381 = vmatpush1.bf16.msra.mxu0 0
  %382 = vmatprep.subr.bf16.mxu0 0
  %383 = vmatpush1.bf16.msra.mxu0 0
  %384 = vmatprep.subr.bf16.mxu0 0
  %385 = vmatpush1.bf16.msra.mxu0 0
  %386 = vmatprep.subr.bf16.mxu0 0
  %387 = vmatpush1.bf16.msra.mxu0 0
  %388 = vmatprep.subr.bf16.mxu0 0
  %389 = vmatpush1.bf16.msra.mxu0 0
  %390 = vmatprep.subr.bf16.mxu0 0
  %391 = vmatpush1.bf16.msra.mxu0 0
  %392 = vmatprep.subr.bf16.mxu0 0
  %393 = vmatpush1.bf16.msra.mxu0 0
  %394 = vmatprep.mubr.bf16.mxu0 0
  %395 = vmatmul.mubr.bf16.gmra.mrb[0].mxu0 %v305
  %v396 = vpop.f32.mrb[0].mxu0
  %v397 = vadd.f32 0.0, %v396
  %v398 = vpop.f32.mrb[0].mxu0
  %v399 = vpop.f32.mrb[0].mxu0
  %v400 = vpop.f32.mrb[0].mxu0
  %401 = vdwg.mxu0
  %v402 = vadd.f32 %v349, %v397
  %v403 = vxor.u32 %v347, 2147483648
  %v404 = vmul.f32 %v403, 1.442695
  %v405 = vpow.pop %v404
  %v406 = vadd.f32 %v405, 1.0
  %v407 = vrcp.pop %v406
  %v408 = vmul.f32 1.0, %v407
  %v409 = vtanh.pop %v347
  %v410 = vmul.f32 %v408, 0.0
  %412 = vrot.lane.b32.xlu0 %v409, 64
  %v413 = vpop.permute.xlu0 %412
  %v415 = vmul.f32 %v408, %v413
  %417 = vrot.lane.b32.xlu0 %v415, 32
  %v418 = vpop.permute.xlu0 %417
  %v420 = vadd.f32 %v410, %v418
  %v421 = vtanh.pop %v420
  %423 = vrot.lane.b32.xlu0 %v421, 64
  %v424 = vpop.permute.xlu0 %423
  %v426 = vmul.f32 %v408, %v424
  %v427 = vxor.u32 %v402, 2147483648
  %v428 = vmul.f32 %v427, 1.442695
  %v429 = vpow.pop %v428
  %v430 = vadd.f32 %v429, 1.0
  %v431 = vrcp.pop %v430
  %v432 = vmul.f32 1.0, %v431
  %v433 = vtanh.pop %v402
  %v434 = vmul.f32 %v432, 0.0
  %436 = vrot.lane.b32.xlu0 %v433, 64
  %v437 = vpop.permute.xlu0 %436
  %v439 = vmul.f32 %v432, %v437
  %441 = vrot.lane.b32.xlu0 %v439, 32
  %v442 = vpop.permute.xlu0 %441
  %v444 = vadd.f32 %v434, %v442
  %v445 = vtanh.pop %v444
  %447 = vrot.lane.b32.xlu0 %v445, 64
  %v448 = vpop.permute.xlu0 %447
  %v450 = vmul.f32 %v432, %v448
  %452 = vrot.lane.b32.xlu0 %v426, 32
  %v453 = vpop.permute.xlu0 %452
  %455 = vst.msk [vmem:[#allocation2] sm:$0xff] %vm303, %v453
  %457 = vrot.lane.b32.xlu0 %v450, 32
  %v458 = vpop.permute.xlu0 %457
  %s460 = scalar_lea.vmem [#allocation3], 56
  %461 = vst.msk [vmem:[%s460] sm:$0xff] %vm303, %v458
  %s462 = scalar_lea.vmem [#allocation4], 8
  %v463 = vld [vmem:[%s462] sm:$0xff]
  %v464 = vpack.c.bf16 %v426, %v426
  %466 = vrot.lane.b32.xlu0 %v464, 32
  %v467 = vpop.permute.xlu0 %466
  %v469 = vsel %vm303, %v467, 0
  %471 = vmatprep.subr.bf16.mxu0 0
  %472 = vmatpush1.bf16.msra.mxu0 %v299
  %473 = vmatprep.subr.bf16.mxu0 0
  %474 = vmatpush1.bf16.msra.mxu0 %v300
  %475 = vmatprep.subr.bf16.mxu0 0
  %476 = vmatpush1.bf16.msra.mxu0 0
  %477 = vmatprep.subr.bf16.mxu0 0
  %478 = vmatpush1.bf16.msra.mxu0 0
  %479 = vmatprep.subr.bf16.mxu0 0
  %480 = vmatpush1.bf16.msra.mxu0 0
  %481 = vmatprep.subr.bf16.mxu0 0
  %482 = vmatpush1.bf16.msra.mxu0 0
  %483 = vmatprep.subr.bf16.mxu0 0
  %484 = vmatpush1.bf16.msra.mxu0 0
  %485 = vmatprep.subr.bf16.mxu0 0
  %486 = vmatpush1.bf16.msra.mxu0 0
  %487 = vmatprep.subr.bf16.mxu0 0
  %488 = vmatpush1.bf16.msra.mxu0 0
  %489 = vmatprep.subr.bf16.mxu0 0
  %490 = vmatpush1.bf16.msra.mxu0 0
  %491 = vmatprep.subr.bf16.mxu0 0
  %492 = vmatpush1.bf16.msra.mxu0 0
  %493 = vmatprep.subr.bf16.mxu0 0
  %494 = vmatpush1.bf16.msra.mxu0 0
  %495 = vmatprep.subr.bf16.mxu0 0
  %496 = vmatpush1.bf16.msra.mxu0 0
  %497 = vmatprep.subr.bf16.mxu0 0
  %498 = vmatpush1.bf16.msra.mxu0 0
  %499 = vmatprep.subr.bf16.mxu0 0
  %500 = vmatpush1.bf16.msra.mxu0 0
  %501 = vmatprep.subr.bf16.mxu0 0
  %502 = vmatpush1.bf16.msra.mxu0 0
  %503 = vmatprep.mubr.bf16.mxu0 0
  %504 = vmatmul.mubr.bf16.gmra.mrb[0].mxu0 %v469
  %v505 = vpop.f32.mrb[0].mxu0
  %v506 = vadd.f32 0.0, %v505
  %v507 = vpop.f32.mrb[0].mxu0
  %v508 = vpop.f32.mrb[0].mxu0
  %v509 = vpop.f32.mrb[0].mxu0
  %510 = vdwg.mxu0
  %v511 = vadd.f32 %v463, %v506
  %s512 = scalar_lea.vmem [#allocation5], 48
  %v513 = vld [vmem:[%s512] sm:$0xff]
  %v514 = vpack.c.bf16 %v450, %v450
  %516 = vrot.lane.b32.xlu0 %v514, 32
  %v517 = vpop.permute.xlu0 %516
  %v519 = vsel %vm303, %v517, 0
  %521 = vmatprep.subr.bf16.mxu0 0
  %522 = vmatpush1.bf16.msra.mxu0 %v358
  %523 = vmatprep.subr.bf16.mxu0 0
  %524 = vmatpush1.bf16.msra.mxu0 %v359
  %525 = vmatprep.subr.bf16.mxu0 0
  %526 = vmatpush1.bf16.msra.mxu0 0
  %527 = vmatprep.subr.bf16.mxu0 0
  %528 = vmatpush1.bf16.msra.mxu0 0
  %529 = vmatprep.subr.bf16.mxu0 0
  %530 = vmatpush1.bf16.msra.mxu0 0
  %531 = vmatprep.subr.bf16.mxu0 0
  %532 = vmatpush1.bf16.msra.mxu0 0
  %533 = vmatprep.subr.bf16.mxu0 0
  %534 = vmatpush1.bf16.msra.mxu0 0
  %535 = vmatprep.subr.bf16.mxu0 0
  %536 = vmatpush1.bf16.msra.mxu0 0
  %537 = vmatprep.subr.bf16.mxu0 0
  %538 = vmatpush1.bf16.msra.mxu0 0
  %539 = vmatprep.subr.bf16.mxu0 0
  %540 = vmatpush1.bf16.msra.mxu0 0
  %541 = vmatprep.subr.bf16.mxu0 0
  %542 = vmatpush1.bf16.msra.mxu0 0
  %543 = vmatprep.subr.bf16.mxu0 0
  %544 = vmatpush1.bf16.msra.mxu0 0
  %545 = vmatprep.subr.bf16.mxu0 0
  %546 = vmatpush1.bf16.msra.mxu0 0
  %547 = vmatprep.subr.bf16.mxu0 0
  %548 = vmatpush1.bf16.msra.mxu0 0
  %549 = vmatprep.subr.bf16.mxu0 0
  %550 = vmatpush1.bf16.msra.mxu0 0
  %551 = vmatprep.subr.bf16.mxu0 0
  %552 = vmatpush1.bf16.msra.mxu0 0
  %553 = vmatprep.mubr.bf16.mxu0 0
  %554 = vmatmul.mubr.bf16.gmra.mrb[0].mxu0 %v519
  %v555 = vpop.f32.mrb[0].mxu0
  %v556 = vadd.f32 0.0, %v555
  %v557 = vpop.f32.mrb[0].mxu0
  %v558 = vpop.f32.mrb[0].mxu0
  %v559 = vpop.f32.mrb[0].mxu0
  %560 = vdwg.mxu0
  %v561 = vadd.f32 %v513, %v556
  %v562 = vxor.u32 %v511, 2147483648
  %v563 = vmul.f32 %v562, 1.442695
  %v564 = vpow.pop %v563
  %v565 = vadd.f32 %v564, 1.0
  %v566 = vrcp.pop %v565
  %v567 = vmul.f32 1.0, %v566
  %v568 = vtanh.pop %v511
  %v569 = vmul.f32 %v567, %v420
  %571 = vrot.lane.b32.xlu0 %v568, 64
  %v572 = vpop.permute.xlu0 %571
  %v574 = vmul.f32 %v567, %v572
  %576 = vrot.lane.b32.xlu0 %v574, 32
  %v577 = vpop.permute.xlu0 %576
  %v579 = vadd.f32 %v569, %v577
  %v580 = vtanh.pop %v579
  %582 = vrot.lane.b32.xlu0 %v580, 64
  %v583 = vpop.permute.xlu0 %582
  %v585 = vmul.f32 %v567, %v583
  %v586 = vxor.u32 %v561, 2147483648
  %v587 = vmul.f32 %v586, 1.442695
  %v588 = vpow.pop %v587
  %v589 = vadd.f32 %v588, 1.0
  %v590 = vrcp.pop %v589
  %v591 = vmul.f32 1.0, %v590
  %v592 = vtanh.pop %v561
  %v593 = vmul.f32 %v591, %v444
  %595 = vrot.lane.b32.xlu0 %v592, 64
  %v596 = vpop.permute.xlu0 %595
  %v598 = vmul.f32 %v591, %v596
  %600 = vrot.lane.b32.xlu0 %v598, 32
  %v601 = vpop.permute.xlu0 %600
  %v603 = vadd.f32 %v593, %v601
  %v604 = vtanh.pop %v603
  %606 = vrot.lane.b32.xlu0 %v604, 64
  %v607 = vpop.permute.xlu0 %606
  %v609 = vmul.f32 %v591, %v607
  %611 = vrot.lane.b32.xlu0 %v585, 32
  %v612 = vpop.permute.xlu0 %611
  %s614 = scalar_lea.vmem [#allocation2], 8
  %615 = vst.msk [vmem:[%s614] sm:$0xff] %vm303, %v612
  %617 = vrot.lane.b32.xlu0 %v609, 32
  %v618 = vpop.permute.xlu0 %617
  %s620 = scalar_lea.vmem [#allocation3], 48
  %621 = vst.msk [vmem:[%s620] sm:$0xff] %vm303, %v618
  %s622 = scalar_lea.vmem [#allocation4], 16
  %v623 = vld [vmem:[%s622] sm:$0xff]
  %v624 = vpack.c.bf16 %v585, %v585
  %626 = vrot.lane.b32.xlu0 %v624, 32
  %v627 = vpop.permute.xlu0 %626
  %v629 = vsel %vm303, %v627, 0
  %631 = vmatprep.subr.bf16.mxu0 0
  %632 = vmatpush1.bf16.msra.mxu0 %v299
  %633 = vmatprep.subr.bf16.mxu0 0
  %634 = vmatpush1.bf16.msra.mxu0 %v300
  %635 = vmatprep.subr.bf16.mxu0 0
  %636 = vmatpush1.bf16.msra.mxu0 0
  %637 = vmatprep.subr.bf16.mxu0 0
  %638 = vmatpush1.bf16.msra.mxu0 0
  %639 = vmatprep.subr.bf16.mxu0 0
  %640 = vmatpush1.bf16.msra.mxu0 0
  %641 = vmatprep.subr.bf16.mxu0 0
  %642 = vmatpush1.bf16.msra.mxu0 0
  %643 = vmatprep.subr.bf16.mxu0 0
  %644 = vmatpush1.bf16.msra.mxu0 0
  %645 = vmatprep.subr.bf16.mxu0 0
  %646 = vmatpush1.bf16.msra.mxu0 0
  %647 = vmatprep.subr.bf16.mxu0 0
  %648 = vmatpush1.bf16.msra.mxu0 0
  %649 = vmatprep.subr.bf16.mxu0 0
  %650 = vmatpush1.bf16.msra.mxu0 0
  %651 = vmatprep.subr.bf16.mxu0 0
  %652 = vmatpush1.bf16.msra.mxu0 0
  %653 = vmatprep.subr.bf16.mxu0 0
  %654 = vmatpush1.bf16.msra.mxu0 0
  %655 = vmatprep.subr.bf16.mxu0 0
  %656 = vmatpush1.bf16.msra.mxu0 0
  %657 = vmatprep.subr.bf16.mxu0 0
  %658 = vmatpush1.bf16.msra.mxu0 0
  %659 = vmatprep.subr.bf16.mxu0 0
  %660 = vmatpush1.bf16.msra.mxu0 0
  %661 = vmatprep.subr.bf16.mxu0 0
  %662 = vmatpush1.bf16.msra.mxu0 0
  %663 = vmatprep.mubr.bf16.mxu0 0
  %664 = vmatmul.mubr.bf16.gmra.mrb[0].mxu0 %v629
  %v665 = vpop.f32.mrb[0].mxu0
  %v666 = vadd.f32 0.0, %v665
  %v667 = vpop.f32.mrb[0].mxu0
  %v668 = vpop.f32.mrb[0].mxu0
  %v669 = vpop.f32.mrb[0].mxu0
  %670 = vdwg.mxu0
  %v671 = vadd.f32 %v623, %v666
  %s672 = scalar_lea.vmem [#allocation5], 40
  %v673 = vld [vmem:[%s672] sm:$0xff]
  %v674 = vpack.c.bf16 %v609, %v609
  %676 = vrot.lane.b32.xlu0 %v674, 32
  %v677 = vpop.permute.xlu0 %676
  %v679 = vsel %vm303, %v677, 0
  %681 = vmatprep.subr.bf16.mxu0 0
  %682 = vmatpush1.bf16.msra.mxu0 %v358
  %683 = vmatprep.subr.bf16.mxu0 0
  %684 = vmatpush1.bf16.msra.mxu0 %v359
  %685 = vmatprep.subr.bf16.mxu0 0
  %686 = vmatpush1.bf16.msra.mxu0 0
  %687 = vmatprep.subr.bf16.mxu0 0
  %688 = vmatpush1.bf16.msra.mxu0 0
  %689 = vmatprep.subr.bf16.mxu0 0
  %690 = vmatpush1.bf16.msra.mxu0 0
  %691 = vmatprep.subr.bf16.mxu0 0
  %692 = vmatpush1.bf16.msra.mxu0 0
  %693 = vmatprep.subr.bf16.mxu0 0
  %694 = vmatpush1.bf16.msra.mxu0 0
  %695 = vmatprep.subr.bf16.mxu0 0
  %696 = vmatpush1.bf16.msra.mxu0 0
  %697 = vmatprep.subr.bf16.mxu0 0
  %698 = vmatpush1.bf16.msra.mxu0 0
  %699 = vmatprep.subr.bf16.mxu0 0
  %700 = vmatpush1.bf16.msra.mxu0 0
  %701 = vmatprep.subr.bf16.mxu0 0
  %702 = vmatpush1.bf16.msra.mxu0 0
  %703 = vmatprep.subr.bf16.mxu0 0
  %704 = vmatpush1.bf16.msra.mxu0 0
  %705 = vmatprep.subr.bf16.mxu0 0
  %706 = vmatpush1.bf16.msra.mxu0 0
  %707 = vmatprep.subr.bf16.mxu0 0
  %708 = vmatpush1.bf16.msra.mxu0 0
  %709 = vmatprep.subr.bf16.mxu0 0
  %710 = vmatpush1.bf16.msra.mxu0 0
  %711 = vmatprep.subr.bf16.mxu0 0
  %712 = vmatpush1.bf16.msra.mxu0 0
  %713 = vmatprep.mubr.bf16.mxu0 0
  %714 = vmatmul.mubr.bf16.gmra.mrb[0].mxu0 %v679
  %v715 = vpop.f32.mrb[0].mxu0
  %v716 = vadd.f32 0.0, %v715
  %v717 = vpop.f32.mrb[0].mxu0
  %v718 = vpop.f32.mrb[0].mxu0
  %v719 = vpop.f32.mrb[0].mxu0
  %720 = vdwg.mxu0
  %v721 = vadd.f32 %v673, %v716
  %v722 = vxor.u32 %v671, 2147483648
  %v723 = vmul.f32 %v722, 1.442695
  %v724 = vpow.pop %v723
  %v725 = vadd.f32 %v724, 1.0
  %v726 = vrcp.pop %v725
  %v727 = vmul.f32 1.0, %v726
  %v728 = vtanh.pop %v671
  %v729 = vmul.f32 %v727, %v579
  %731 = vrot.lane.b32.xlu0 %v728, 64
  %v732 = vpop.permute.xlu0 %731
  %v734 = vmul.f32 %v727, %v732
  %736 = vrot.lane.b32.xlu0 %v734, 32
  %v737 = vpop.permute.xlu0 %736
  %v739 = vadd.f32 %v729, %v737
  %v740 = vtanh.pop %v739
  %742 = vrot.lane.b32.xlu0 %v740, 64
  %v743 = vpop.permute.xlu0 %742
  %v745 = vmul.f32 %v727, %v743
  %v746 = vxor.u32 %v721, 2147483648
  %v747 = vmul.f32 %v746, 1.442695
  %v748 = vpow.pop %v747
  %v749 = vadd.f32 %v748, 1.0
  %v750 = vrcp.pop %v749
  %v751 = vmul.f32 1.0, %v750
  %v752 = vtanh.pop %v721
  %v753 = vmul.f32 %v751, %v603
  %755 = vrot.lane.b32.xlu0 %v752, 64
  %v756 = vpop.permute.xlu0 %755
  %v758 = vmul.f32 %v751, %v756
  %760 = vrot.lane.b32.xlu0 %v758, 32
  %v761 = vpop.permute.xlu0 %760
  %v763 = vadd.f32 %v753, %v761
  %v764 = vtanh.pop %v763
  %766 = vrot.lane.b32.xlu0 %v764, 64
  %v767 = vpop.permute.xlu0 %766
  %v769 = vmul.f32 %v751, %v767
  %771 = vrot.lane.b32.xlu0 %v745, 32
  %v772 = vpop.permute.xlu0 %771
  %s774 = scalar_lea.vmem [#allocation2], 16
  %775 = vst.msk [vmem:[%s774] sm:$0xff] %vm303, %v772
  %777 = vrot.lane.b32.xlu0 %v769, 32
  %v778 = vpop.permute.xlu0 %777
  %s780 = scalar_lea.vmem [#allocation3], 40
  %781 = vst.msk [vmem:[%s780] sm:$0xff] %vm303, %v778
  %s782 = scalar_lea.vmem [#allocation4], 24
  %v783 = vld [vmem:[%s782] sm:$0xff]
  %v784 = vpack.c.bf16 %v745, %v745
  %786 = vrot.lane.b32.xlu0 %v784, 32
  %v787 = vpop.permute.xlu0 %786
  %v789 = vsel %vm303, %v787, 0
  %791 = vmatprep.subr.bf16.mxu0 0
  %792 = vmatpush1.bf16.msra.mxu0 %v299
  %793 = vmatprep.subr.bf16.mxu0 0
  %794 = vmatpush1.bf16.msra.mxu0 %v300
  %795 = vmatprep.subr.bf16.mxu0 0
  %796 = vmatpush1.bf16.msra.mxu0 0
  %797 = vmatprep.subr.bf16.mxu0 0
  %798 = vmatpush1.bf16.msra.mxu0 0
  %799 = vmatprep.subr.bf16.mxu0 0
  %800 = vmatpush1.bf16.msra.mxu0 0
  %801 = vmatprep.subr.bf16.mxu0 0
  %802 = vmatpush1.bf16.msra.mxu0 0
  %803 = vmatprep.subr.bf16.mxu0 0
  %804 = vmatpush1.bf16.msra.mxu0 0
  %805 = vmatprep.subr.bf16.mxu0 0
  %806 = vmatpush1.bf16.msra.mxu0 0
  %807 = vmatprep.subr.bf16.mxu0 0
  %808 = vmatpush1.bf16.msra.mxu0 0
  %809 = vmatprep.subr.bf16.mxu0 0
  %810 = vmatpush1.bf16.msra.mxu0 0
  %811 = vmatprep.subr.bf16.mxu0 0
  %812 = vmatpush1.bf16.msra.mxu0 0
  %813 = vmatprep.subr.bf16.mxu0 0
  %814 = vmatpush1.bf16.msra.mxu0 0
  %815 = vmatprep.subr.bf16.mxu0 0
  %816 = vmatpush1.bf16.msra.mxu0 0
  %817 = vmatprep.subr.bf16.mxu0 0
  %818 = vmatpush1.bf16.msra.mxu0 0
  %819 = vmatprep.subr.bf16.mxu0 0
  %820 = vmatpush1.bf16.msra.mxu0 0
  %821 = vmatprep.subr.bf16.mxu0 0
  %822 = vmatpush1.bf16.msra.mxu0 0
  %823 = vmatprep.mubr.bf16.mxu0 0
  %824 = vmatmul.mubr.bf16.gmra.mrb[0].mxu0 %v789
  %v825 = vpop.f32.mrb[0].mxu0
  %v826 = vadd.f32 0.0, %v825
  %v827 = vpop.f32.mrb[0].mxu0
  %v828 = vpop.f32.mrb[0].mxu0
  %v829 = vpop.f32.mrb[0].mxu0
  %830 = vdwg.mxu0
  %v831 = vadd.f32 %v783, %v826
  %s832 = scalar_lea.vmem [#allocation5], 32
  %v833 = vld [vmem:[%s832] sm:$0xff]
  %v834 = vpack.c.bf16 %v769, %v769
  %836 = vrot.lane.b32.xlu0 %v834, 32
  %v837 = vpop.permute.xlu0 %836
  %v839 = vsel %vm303, %v837, 0
  %841 = vmatprep.subr.bf16.mxu0 0
  %842 = vmatpush1.bf16.msra.mxu0 %v358
  %843 = vmatprep.subr.bf16.mxu0 0
  %844 = vmatpush1.bf16.msra.mxu0 %v359
  %845 = vmatprep.subr.bf16.mxu0 0
  %846 = vmatpush1.bf16.msra.mxu0 0
  %847 = vmatprep.subr.bf16.mxu0 0
  %848 = vmatpush1.bf16.msra.mxu0 0
  %849 = vmatprep.subr.bf16.mxu0 0
  %850 = vmatpush1.bf16.msra.mxu0 0
  %851 = vmatprep.subr.bf16.mxu0 0
  %852 = vmatpush1.bf16.msra.mxu0 0
  %853 = vmatprep.subr.bf16.mxu0 0
  %854 = vmatpush1.bf16.msra.mxu0 0
  %855 = vmatprep.subr.bf16.mxu0 0
  %856 = vmatpush1.bf16.msra.mxu0 0
  %857 = vmatprep.subr.bf16.mxu0 0
  %858 = vmatpush1.bf16.msra.mxu0 0
  %859 = vmatprep.subr.bf16.mxu0 0
  %860 = vmatpush1.bf16.msra.mxu0 0
  %861 = vmatprep.subr.bf16.mxu0 0
  %862 = vmatpush1.bf16.msra.mxu0 0
  %863 = vmatprep.subr.bf16.mxu0 0
  %864 = vmatpush1.bf16.msra.mxu0 0
  %865 = vmatprep.subr.bf16.mxu0 0
  %866 = vmatpush1.bf16.msra.mxu0 0
  %867 = vmatprep.subr.bf16.mxu0 0
  %868 = vmatpush1.bf16.msra.mxu0 0
  %869 = vmatprep.subr.bf16.mxu0 0
  %870 = vmatpush1.bf16.msra.mxu0 0
  %871 = vmatprep.subr.bf16.mxu0 0
  %872 = vmatpush1.bf16.msra.mxu0 0
  %873 = vmatprep.mubr.bf16.mxu0 0
  %874 = vmatmul.mubr.bf16.gmra.mrb[0].mxu0 %v839
  %v875 = vpop.f32.mrb[0].mxu0
  %v876 = vadd.f32 0.0, %v875
  %v877 = vpop.f32.mrb[0].mxu0
  %v878 = vpop.f32.mrb[0].mxu0
  %v879 = vpop.f32.mrb[0].mxu0
  %880 = vdwg.mxu0
  %v881 = vadd.f32 %v833, %v876
  %v882 = vxor.u32 %v831, 2147483648
  %v883 = vmul.f32 %v882, 1.442695
  %v884 = vpow.pop %v883
  %v885 = vadd.f32 %v884, 1.0
  %v886 = vrcp.pop %v885
  %v887 = vmul.f32 1.0, %v886
  %v888 = vtanh.pop %v831
  %v889 = vmul.f32 %v887, %v739
  %891 = vrot.lane.b32.xlu0 %v888, 64
  %v892 = vpop.permute.xlu0 %891
  %v894 = vmul.f32 %v887, %v892
  %896 = vrot.lane.b32.xlu0 %v894, 32
  %v897 = vpop.permute.xlu0 %896
  %v899 = vadd.f32 %v889, %v897
  %v900 = vtanh.pop %v899
  %902 = vrot.lane.b32.xlu0 %v900, 64
  %v903 = vpop.permute.xlu0 %902
  %v905 = vmul.f32 %v887, %v903
  %v906 = vxor.u32 %v881, 2147483648
  %v907 = vmul.f32 %v906, 1.442695
  %v908 = vpow.pop %v907
  %v909 = vadd.f32 %v908, 1.0
  %v910 = vrcp.pop %v909
  %v911 = vmul.f32 1.0, %v910
  %v912 = vtanh.pop %v881
  %v913 = vmul.f32 %v911, %v763
  %915 = vrot.lane.b32.xlu0 %v912, 64
  %v916 = vpop.permute.xlu0 %915
  %v918 = vmul.f32 %v911, %v916
  %920 = vrot.lane.b32.xlu0 %v918, 32
  %v921 = vpop.permute.xlu0 %920
  %v923 = vadd.f32 %v913, %v921
  %v924 = vtanh.pop %v923
  %926 = vrot.lane.b32.xlu0 %v924, 64
  %v927 = vpop.permute.xlu0 %926
  %v929 = vmul.f32 %v911, %v927
  %931 = vrot.lane.b32.xlu0 %v905, 32
  %v932 = vpop.permute.xlu0 %931
  %s934 = scalar_lea.vmem [#allocation2], 24
  %935 = vst.msk [vmem:[%s934] sm:$0xff] %vm303, %v932
  %937 = vrot.lane.b32.xlu0 %v929, 32
  %v938 = vpop.permute.xlu0 %937
  %s940 = scalar_lea.vmem [#allocation3], 32
  %941 = vst.msk [vmem:[%s940] sm:$0xff] %vm303, %v938
  %s942 = scalar_lea.vmem [#allocation4], 32
  %v943 = vld [vmem:[%s942] sm:$0xff]
  %v944 = vpack.c.bf16 %v905, %v905
  %946 = vrot.lane.b32.xlu0 %v944, 32
  %v947 = vpop.permute.xlu0 %946
  %v949 = vsel %vm303, %v947, 0
  %951 = vmatprep.subr.bf16.mxu0 0
  %952 = vmatpush1.bf16.msra.mxu0 %v299
  %953 = vmatprep.subr.bf16.mxu0 0
  %954 = vmatpush1.bf16.msra.mxu0 %v300
  %955 = vmatprep.subr.bf16.mxu0 0
  %956 = vmatpush1.bf16.msra.mxu0 0
  %957 = vmatprep.subr.bf16.mxu0 0
  %958 = vmatpush1.bf16.msra.mxu0 0
  %959 = vmatprep.subr.bf16.mxu0 0
  %960 = vmatpush1.bf16.msra.mxu0 0
  %961 = vmatprep.subr.bf16.mxu0 0
  %962 = vmatpush1.bf16.msra.mxu0 0
  %963 = vmatprep.subr.bf16.mxu0 0
  %964 = vmatpush1.bf16.msra.mxu0 0
  %965 = vmatprep.subr.bf16.mxu0 0
  %966 = vmatpush1.bf16.msra.mxu0 0
  %967 = vmatprep.subr.bf16.mxu0 0
  %968 = vmatpush1.bf16.msra.mxu0 0
  %969 = vmatprep.subr.bf16.mxu0 0
  %970 = vmatpush1.bf16.msra.mxu0 0
  %971 = vmatprep.subr.bf16.mxu0 0
  %972 = vmatpush1.bf16.msra.mxu0 0
  %973 = vmatprep.subr.bf16.mxu0 0
  %974 = vmatpush1.bf16.msra.mxu0 0
  %975 = vmatprep.subr.bf16.mxu0 0
  %976 = vmatpush1.bf16.msra.mxu0 0
  %977 = vmatprep.subr.bf16.mxu0 0
  %978 = vmatpush1.bf16.msra.mxu0 0
  %979 = vmatprep.subr.bf16.mxu0 0
  %980 = vmatpush1.bf16.msra.mxu0 0
  %981 = vmatprep.subr.bf16.mxu0 0
  %982 = vmatpush1.bf16.msra.mxu0 0
  %983 = vmatprep.mubr.bf16.mxu0 0
  %984 = vmatmul.mubr.bf16.gmra.mrb[0].mxu0 %v949
  %v985 = vpop.f32.mrb[0].mxu0
  %v986 = vadd.f32 0.0, %v985
  %v987 = vpop.f32.mrb[0].mxu0
  %v988 = vpop.f32.mrb[0].mxu0
  %v989 = vpop.f32.mrb[0].mxu0
  %990 = vdwg.mxu0
  %v991 = vadd.f32 %v943, %v986
  %s992 = scalar_lea.vmem [#allocation5], 24
  %v993 = vld [vmem:[%s992] sm:$0xff]
  %v994 = vpack.c.bf16 %v929, %v929
  %996 = vrot.lane.b32.xlu0 %v994, 32
  %v997 = vpop.permute.xlu0 %996
  %v999 = vsel %vm303, %v997, 0
  %1001 = vmatprep.subr.bf16.mxu0 0
  %1002 = vmatpush1.bf16.msra.mxu0 %v358
  %1003 = vmatprep.subr.bf16.mxu0 0
  %1004 = vmatpush1.bf16.msra.mxu0 %v359
  %1005 = vmatprep.subr.bf16.mxu0 0
  %1006 = vmatpush1.bf16.msra.mxu0 0
  %1007 = vmatprep.subr.bf16.mxu0 0
  %1008 = vmatpush1.bf16.msra.mxu0 0
  %1009 = vmatprep.subr.bf16.mxu0 0
  %1010 = vmatpush1.bf16.msra.mxu0 0
  %1011 = vmatprep.subr.bf16.mxu0 0
  %1012 = vmatpush1.bf16.msra.mxu0 0
  %1013 = vmatprep.subr.bf16.mxu0 0
  %1014 = vmatpush1.bf16.msra.mxu0 0
  %1015 = vmatprep.subr.bf16.mxu0 0
  %1016 = vmatpush1.bf16.msra.mxu0 0
  %1017 = vmatprep.subr.bf16.mxu0 0
  %1018 = vmatpush1.bf16.msra.mxu0 0
  %1019 = vmatprep.subr.bf16.mxu0 0
  %1020 = vmatpush1.bf16.msra.mxu0 0
  %1021 = vmatprep.subr.bf16.mxu0 0
  %1022 = vmatpush1.bf16.msra.mxu0 0
  %1023 = vmatprep.subr.bf16.mxu0 0
  %1024 = vmatpush1.bf16.msra.mxu0 0
  %1025 = vmatprep.subr.bf16.mxu0 0
  %1026 = vmatpush1.bf16.msra.mxu0 0
  %1027 = vmatprep.subr.bf16.mxu0 0
  %1028 = vmatpush1.bf16.msra.mxu0 0
  %1029 = vmatprep.subr.bf16.mxu0 0
  %1030 = vmatpush1.bf16.msra.mxu0 0
  %1031 = vmatprep.subr.bf16.mxu0 0
  %1032 = vmatpush1.bf16.msra.mxu0 0
  %1033 = vmatprep.mubr.bf16.mxu0 0
  %1034 = vmatmul.mubr.bf16.gmra.mrb[0].mxu0 %v999
  %v1035 = vpop.f32.mrb[0].mxu0
  %v1036 = vadd.f32 0.0, %v1035
  %v1037 = vpop.f32.mrb[0].mxu0
  %v1038 = vpop.f32.mrb[0].mxu0
  %v1039 = vpop.f32.mrb[0].mxu0
  %1040 = vdwg.mxu0
  %v1041 = vadd.f32 %v993, %v1036
  %v1042 = vxor.u32 %v991, 2147483648
  %v1043 = vmul.f32 %v1042, 1.442695
  %v1044 = vpow.pop %v1043
  %v1045 = vadd.f32 %v1044, 1.0
  %v1046 = vrcp.pop %v1045
  %v1047 = vmul.f32 1.0, %v1046
  %v1048 = vtanh.pop %v991
  %v1049 = vmul.f32 %v1047, %v899
  %1051 = vrot.lane.b32.xlu0 %v1048, 64
  %v1052 = vpop.permute.xlu0 %1051
  %v1054 = vmul.f32 %v1047, %v1052
  %1056 = vrot.lane.b32.xlu0 %v1054, 32
  %v1057 = vpop.permute.xlu0 %1056
  %v1059 = vadd.f32 %v1049, %v1057
  %v1060 = vtanh.pop %v1059
  %1062 = vrot.lane.b32.xlu0 %v1060, 64
  %v1063 = vpop.permute.xlu0 %1062
  %v1065 = vmul.f32 %v1047, %v1063
  %v1066 = vxor.u32 %v1041, 2147483648
  %v1067 = vmul.f32 %v1066, 1.442695
  %v1068 = vpow.pop %v1067
  %v1069 = vadd.f32 %v1068, 1.0
  %v1070 = vrcp.pop %v1069
  %v1071 = vmul.f32 1.0, %v1070
  %v1072 = vtanh.pop %v1041
  %v1073 = vmul.f32 %v1071, %v923
  %1075 = vrot.lane.b32.xlu0 %v1072, 64
  %v1076 = vpop.permute.xlu0 %1075
  %v1078 = vmul.f32 %v1071, %v1076
  %1080 = vrot.lane.b32.xlu0 %v1078, 32
  %v1081 = vpop.permute.xlu0 %1080
  %v1083 = vadd.f32 %v1073, %v1081
  %v1084 = vtanh.pop %v1083
  %1086 = vrot.lane.b32.xlu0 %v1084, 64
  %v1087 = vpop.permute.xlu0 %1086
  %v1089 = vmul.f32 %v1071, %v1087
  %1091 = vrot.lane.b32.xlu0 %v1065, 32
  %v1092 = vpop.permute.xlu0 %1091
  %s1094 = scalar_lea.vmem [#allocation2], 32
  %1095 = vst.msk [vmem:[%s1094] sm:$0xff] %vm303, %v1092
  %1097 = vrot.lane.b32.xlu0 %v1089, 32
  %v1098 = vpop.permute.xlu0 %1097
  %s1100 = scalar_lea.vmem [#allocation3], 24
  %1101 = vst.msk [vmem:[%s1100] sm:$0xff] %vm303, %v1098
  %s1102 = scalar_lea.vmem [#allocation4], 40
  %v1103 = vld [vmem:[%s1102] sm:$0xff]
  %v1104 = vpack.c.bf16 %v1065, %v1065
  %1106 = vrot.lane.b32.xlu0 %v1104, 32
  %v1107 = vpop.permute.xlu0 %1106
  %v1109 = vsel %vm303, %v1107, 0
  %1111 = vmatprep.subr.bf16.mxu0 0
  %1112 = vmatpush1.bf16.msra.mxu0 %v299
  %1113 = vmatprep.subr.bf16.mxu0 0
  %1114 = vmatpush1.bf16.msra.mxu0 %v300
  %1115 = vmatprep.subr.bf16.mxu0 0
  %1116 = vmatpush1.bf16.msra.mxu0 0
  %1117 = vmatprep.subr.bf16.mxu0 0
  %1118 = vmatpush1.bf16.msra.mxu0 0
  %1119 = vmatprep.subr.bf16.mxu0 0
  %1120 = vmatpush1.bf16.msra.mxu0 0
  %1121 = vmatprep.subr.bf16.mxu0 0
  %1122 = vmatpush1.bf16.msra.mxu0 0
  %1123 = vmatprep.subr.bf16.mxu0 0
  %1124 = vmatpush1.bf16.msra.mxu0 0
  %1125 = vmatprep.subr.bf16.mxu0 0
  %1126 = vmatpush1.bf16.msra.mxu0 0
  %1127 = vmatprep.subr.bf16.mxu0 0
  %1128 = vmatpush1.bf16.msra.mxu0 0
  %1129 = vmatprep.subr.bf16.mxu0 0
  %1130 = vmatpush1.bf16.msra.mxu0 0
  %1131 = vmatprep.subr.bf16.mxu0 0
  %1132 = vmatpush1.bf16.msra.mxu0 0
  %1133 = vmatprep.subr.bf16.mxu0 0
  %1134 = vmatpush1.bf16.msra.mxu0 0
  %1135 = vmatprep.subr.bf16.mxu0 0
  %1136 = vmatpush1.bf16.msra.mxu0 0
  %1137 = vmatprep.subr.bf16.mxu0 0
  %1138 = vmatpush1.bf16.msra.mxu0 0
  %1139 = vmatprep.subr.bf16.mxu0 0
  %1140 = vmatpush1.bf16.msra.mxu0 0
  %1141 = vmatprep.subr.bf16.mxu0 0
  %1142 = vmatpush1.bf16.msra.mxu0 0
  %1143 = vmatprep.mubr.bf16.mxu0 0
  %1144 = vmatmul.mubr.bf16.gmra.mrb[0].mxu0 %v1109
  %v1145 = vpop.f32.mrb[0].mxu0
  %v1146 = vadd.f32 0.0, %v1145
  %v1147 = vpop.f32.mrb[0].mxu0
  %v1148 = vpop.f32.mrb[0].mxu0
  %v1149 = vpop.f32.mrb[0].mxu0
  %1150 = vdwg.mxu0
  %v1151 = vadd.f32 %v1103, %v1146
  %s1152 = scalar_lea.vmem [#allocation5], 16
  %v1153 = vld [vmem:[%s1152] sm:$0xff]
  %v1154 = vpack.c.bf16 %v1089, %v1089
  %1156 = vrot.lane.b32.xlu0 %v1154, 32
  %v1157 = vpop.permute.xlu0 %1156
  %v1159 = vsel %vm303, %v1157, 0
  %1161 = vmatprep.subr.bf16.mxu0 0
  %1162 = vmatpush1.bf16.msra.mxu0 %v358
  %1163 = vmatprep.subr.bf16.mxu0 0
  %1164 = vmatpush1.bf16.msra.mxu0 %v359
  %1165 = vmatprep.subr.bf16.mxu0 0
  %1166 = vmatpush1.bf16.msra.mxu0 0
  %1167 = vmatprep.subr.bf16.mxu0 0
  %1168 = vmatpush1.bf16.msra.mxu0 0
  %1169 = vmatprep.subr.bf16.mxu0 0
  %1170 = vmatpush1.bf16.msra.mxu0 0
  %1171 = vmatprep.subr.bf16.mxu0 0
  %1172 = vmatpush1.bf16.msra.mxu0 0
  %1173 = vmatprep.subr.bf16.mxu0 0
  %1174 = vmatpush1.bf16.msra.mxu0 0
  %1175 = vmatprep.subr.bf16.mxu0 0
  %1176 = vmatpush1.bf16.msra.mxu0 0
  %1177 = vmatprep.subr.bf16.mxu0 0
  %1178 = vmatpush1.bf16.msra.mxu0 0
  %1179 = vmatprep.subr.bf16.mxu0 0
  %1180 = vmatpush1.bf16.msra.mxu0 0
  %1181 = vmatprep.subr.bf16.mxu0 0
  %1182 = vmatpush1.bf16.msra.mxu0 0
  %1183 = vmatprep.subr.bf16.mxu0 0
  %1184 = vmatpush1.bf16.msra.mxu0 0
  %1185 = vmatprep.subr.bf16.mxu0 0
  %1186 = vmatpush1.bf16.msra.mxu0 0
  %1187 = vmatprep.subr.bf16.mxu0 0
  %1188 = vmatpush1.bf16.msra.mxu0 0
  %1189 = vmatprep.subr.bf16.mxu0 0
  %1190 = vmatpush1.bf16.msra.mxu0 0
  %1191 = vmatprep.subr.bf16.mxu0 0
  %1192 = vmatpush1.bf16.msra.mxu0 0
  %1193 = vmatprep.mubr.bf16.mxu0 0
  %1194 = vmatmul.mubr.bf16.gmra.mrb[0].mxu0 %v1159
  %v1195 = vpop.f32.mrb[0].mxu0
  %v1196 = vadd.f32 0.0, %v1195
  %v1197 = vpop.f32.mrb[0].mxu0
  %v1198 = vpop.f32.mrb[0].mxu0
  %v1199 = vpop.f32.mrb[0].mxu0
  %1200 = vdwg.mxu0
  %v1201 = vadd.f32 %v1153, %v1196
  %v1202 = vxor.u32 %v1151, 2147483648
  %v1203 = vmul.f32 %v1202, 1.442695
  %v1204 = vpow.pop %v1203
  %v1205 = vadd.f32 %v1204, 1.0
  %v1206 = vrcp.pop %v1205
  %v1207 = vmul.f32 1.0, %v1206
  %v1208 = vtanh.pop %v1151
  %v1209 = vmul.f32 %v1207, %v1059
  %1211 = vrot.lane.b32.xlu0 %v1208, 64
  %v1212 = vpop.permute.xlu0 %1211
  %v1214 = vmul.f32 %v1207, %v1212
  %1216 = vrot.lane.b32.xlu0 %v1214, 32
  %v1217 = vpop.permute.xlu0 %1216
  %v1219 = vadd.f32 %v1209, %v1217
  %v1220 = vtanh.pop %v1219
  %1222 = vrot.lane.b32.xlu0 %v1220, 64
  %v1223 = vpop.permute.xlu0 %1222
  %v1225 = vmul.f32 %v1207, %v1223
  %v1226 = vxor.u32 %v1201, 2147483648
  %v1227 = vmul.f32 %v1226, 1.442695
  %v1228 = vpow.pop %v1227
  %v1229 = vadd.f32 %v1228, 1.0
  %v1230 = vrcp.pop %v1229
  %v1231 = vmul.f32 1.0, %v1230
  %v1232 = vtanh.pop %v1201
  %v1233 = vmul.f32 %v1231, %v1083
  %1235 = vrot.lane.b32.xlu0 %v1232, 64
  %v1236 = vpop.permute.xlu0 %1235
  %v1238 = vmul.f32 %v1231, %v1236
  %1240 = vrot.lane.b32.xlu0 %v1238, 32
  %v1241 = vpop.permute.xlu0 %1240
  %v1243 = vadd.f32 %v1233, %v1241
  %v1244 = vtanh.pop %v1243
  %1246 = vrot.lane.b32.xlu0 %v1244, 64
  %v1247 = vpop.permute.xlu0 %1246
  %v1249 = vmul.f32 %v1231, %v1247
  %1251 = vrot.lane.b32.xlu0 %v1225, 32
  %v1252 = vpop.permute.xlu0 %1251
  %s1254 = scalar_lea.vmem [#allocation2], 40
  %1255 = vst.msk [vmem:[%s1254] sm:$0xff] %vm303, %v1252
  %1257 = vrot.lane.b32.xlu0 %v1249, 32
  %v1258 = vpop.permute.xlu0 %1257
  %s1260 = scalar_lea.vmem [#allocation3], 16
  %1261 = vst.msk [vmem:[%s1260] sm:$0xff] %vm303, %v1258
  %s1262 = scalar_lea.vmem [#allocation4], 48
  %v1263 = vld [vmem:[%s1262] sm:$0xff]
  %v1264 = vpack.c.bf16 %v1225, %v1225
  %1266 = vrot.lane.b32.xlu0 %v1264, 32
  %v1267 = vpop.permute.xlu0 %1266
  %v1269 = vsel %vm303, %v1267, 0
  %1271 = vmatprep.subr.bf16.mxu0 0
  %1272 = vmatpush1.bf16.msra.mxu0 %v299
  %1273 = vmatprep.subr.bf16.mxu0 0
  %1274 = vmatpush1.bf16.msra.mxu0 %v300
  %1275 = vmatprep.subr.bf16.mxu0 0
  %1276 = vmatpush1.bf16.msra.mxu0 0
  %1277 = vmatprep.subr.bf16.mxu0 0
  %1278 = vmatpush1.bf16.msra.mxu0 0
  %1279 = vmatprep.subr.bf16.mxu0 0
  %1280 = vmatpush1.bf16.msra.mxu0 0
  %1281 = vmatprep.subr.bf16.mxu0 0
  %1282 = vmatpush1.bf16.msra.mxu0 0
  %1283 = vmatprep.subr.bf16.mxu0 0
  %1284 = vmatpush1.bf16.msra.mxu0 0
  %1285 = vmatprep.subr.bf16.mxu0 0
  %1286 = vmatpush1.bf16.msra.mxu0 0
  %1287 = vmatprep.subr.bf16.mxu0 0
  %1288 = vmatpush1.bf16.msra.mxu0 0
  %1289 = vmatprep.subr.bf16.mxu0 0
  %1290 = vmatpush1.bf16.msra.mxu0 0
  %1291 = vmatprep.subr.bf16.mxu0 0
  %1292 = vmatpush1.bf16.msra.mxu0 0
  %1293 = vmatprep.subr.bf16.mxu0 0
  %1294 = vmatpush1.bf16.msra.mxu0 0
  %1295 = vmatprep.subr.bf16.mxu0 0
  %1296 = vmatpush1.bf16.msra.mxu0 0
  %1297 = vmatprep.subr.bf16.mxu0 0
  %1298 = vmatpush1.bf16.msra.mxu0 0
  %1299 = vmatprep.subr.bf16.mxu0 0
  %1300 = vmatpush1.bf16.msra.mxu0 0
  %1301 = vmatprep.subr.bf16.mxu0 0
  %1302 = vmatpush1.bf16.msra.mxu0 0
  %1303 = vmatprep.mubr.bf16.mxu0 0
  %1304 = vmatmul.mubr.bf16.gmra.mrb[0].mxu0 %v1269
  %v1305 = vpop.f32.mrb[0].mxu0
  %v1306 = vadd.f32 0.0, %v1305
  %v1307 = vpop.f32.mrb[0].mxu0
  %v1308 = vpop.f32.mrb[0].mxu0
  %v1309 = vpop.f32.mrb[0].mxu0
  %1310 = vdwg.mxu0
  %v1311 = vadd.f32 %v1263, %v1306
  %s1312 = scalar_lea.vmem [#allocation5], 8
  %v1313 = vld [vmem:[%s1312] sm:$0xff]
  %v1314 = vpack.c.bf16 %v1249, %v1249
  %1316 = vrot.lane.b32.xlu0 %v1314, 32
  %v1317 = vpop.permute.xlu0 %1316
  %v1319 = vsel %vm303, %v1317, 0
  %1321 = vmatprep.subr.bf16.mxu0 0
  %1322 = vmatpush1.bf16.msra.mxu0 %v358
  %1323 = vmatprep.subr.bf16.mxu0 0
  %1324 = vmatpush1.bf16.msra.mxu0 %v359
  %1325 = vmatprep.subr.bf16.mxu0 0
  %1326 = vmatpush1.bf16.msra.mxu0 0
  %1327 = vmatprep.subr.bf16.mxu0 0
  %1328 = vmatpush1.bf16.msra.mxu0 0
  %1329 = vmatprep.subr.bf16.mxu0 0
  %1330 = vmatpush1.bf16.msra.mxu0 0
  %1331 = vmatprep.subr.bf16.mxu0 0
  %1332 = vmatpush1.bf16.msra.mxu0 0
  %1333 = vmatprep.subr.bf16.mxu0 0
  %1334 = vmatpush1.bf16.msra.mxu0 0
  %1335 = vmatprep.subr.bf16.mxu0 0
  %1336 = vmatpush1.bf16.msra.mxu0 0
  %1337 = vmatprep.subr.bf16.mxu0 0
  %1338 = vmatpush1.bf16.msra.mxu0 0
  %1339 = vmatprep.subr.bf16.mxu0 0
  %1340 = vmatpush1.bf16.msra.mxu0 0
  %1341 = vmatprep.subr.bf16.mxu0 0
  %1342 = vmatpush1.bf16.msra.mxu0 0
  %1343 = vmatprep.subr.bf16.mxu0 0
  %1344 = vmatpush1.bf16.msra.mxu0 0
  %1345 = vmatprep.subr.bf16.mxu0 0
  %1346 = vmatpush1.bf16.msra.mxu0 0
  %1347 = vmatprep.subr.bf16.mxu0 0
  %1348 = vmatpush1.bf16.msra.mxu0 0
  %1349 = vmatprep.subr.bf16.mxu0 0
  %1350 = vmatpush1.bf16.msra.mxu0 0
  %1351 = vmatprep.subr.bf16.mxu0 0
  %1352 = vmatpush1.bf16.msra.mxu0 0
  %1353 = vmatprep.mubr.bf16.mxu0 0
  %1354 = vmatmul.mubr.bf16.gmra.mrb[0].mxu0 %v1319
  %v1355 = vpop.f32.mrb[0].mxu0
  %v1356 = vadd.f32 0.0, %v1355
  %v1357 = vpop.f32.mrb[0].mxu0
  %v1358 = vpop.f32.mrb[0].mxu0
  %v1359 = vpop.f32.mrb[0].mxu0
  %1360 = vdwg.mxu0
  %v1361 = vadd.f32 %v1313, %v1356
  %v1362 = vxor.u32 %v1311, 2147483648
  %v1363 = vmul.f32 %v1362, 1.442695
  %v1364 = vpow.pop %v1363
  %v1365 = vadd.f32 %v1364, 1.0
  %v1366 = vrcp.pop %v1365
  %v1367 = vmul.f32 1.0, %v1366
  %v1368 = vtanh.pop %v1311
  %v1369 = vmul.f32 %v1367, %v1219
  %1371 = vrot.lane.b32.xlu0 %v1368, 64
  %v1372 = vpop.permute.xlu0 %1371
  %v1374 = vmul.f32 %v1367, %v1372
  %1376 = vrot.lane.b32.xlu0 %v1374, 32
  %v1377 = vpop.permute.xlu0 %1376
  %v1379 = vadd.f32 %v1369, %v1377
  %v1380 = vtanh.pop %v1379
  %1382 = vrot.lane.b32.xlu0 %v1380, 64
  %v1383 = vpop.permute.xlu0 %1382
  %v1385 = vmul.f32 %v1367, %v1383
  %v1386 = vxor.u32 %v1361, 2147483648
  %v1387 = vmul.f32 %v1386, 1.442695
  %v1388 = vpow.pop %v1387
  %v1389 = vadd.f32 %v1388, 1.0
  %v1390 = vrcp.pop %v1389
  %v1391 = vmul.f32 1.0, %v1390
  %v1392 = vtanh.pop %v1361
  %v1393 = vmul.f32 %v1391, %v1243
  %1395 = vrot.lane.b32.xlu0 %v1392, 64
  %v1396 = vpop.permute.xlu0 %1395
  %v1398 = vmul.f32 %v1391, %v1396
  %1400 = vrot.lane.b32.xlu0 %v1398, 32
  %v1401 = vpop.permute.xlu0 %1400
  %v1403 = vadd.f32 %v1393, %v1401
  %v1404 = vtanh.pop %v1403
  %1406 = vrot.lane.b32.xlu0 %v1404, 64
  %v1407 = vpop.permute.xlu0 %1406
  %v1409 = vmul.f32 %v1391, %v1407
  %1411 = vrot.lane.b32.xlu0 %v1385, 32
  %v1412 = vpop.permute.xlu0 %1411
  %s1414 = scalar_lea.vmem [#allocation2], 48
  %1415 = vst.msk [vmem:[%s1414] sm:$0xff] %vm303, %v1412
  %1417 = vrot.lane.b32.xlu0 %v1409, 32
  %v1418 = vpop.permute.xlu0 %1417
  %s1420 = scalar_lea.vmem [#allocation3], 8
  %1421 = vst.msk [vmem:[%s1420] sm:$0xff] %vm303, %v1418
  %s1422 = scalar_lea.vmem [#allocation4], 56
  %v1423 = vld [vmem:[%s1422] sm:$0xff]
  %v1424 = vpack.c.bf16 %v1385, %v1385
  %1426 = vrot.lane.b32.xlu0 %v1424, 32
  %v1427 = vpop.permute.xlu0 %1426
  %v1429 = vsel %vm303, %v1427, 0
  %1431 = vmatprep.subr.bf16.mxu0 0
  %1432 = vmatpush1.bf16.msra.mxu0 %v299
  %1433 = vmatprep.subr.bf16.mxu0 0
  %1434 = vmatpush1.bf16.msra.mxu0 %v300
  %1435 = vmatprep.subr.bf16.mxu0 0
  %1436 = vmatpush1.bf16.msra.mxu0 0
  %1437 = vmatprep.subr.bf16.mxu0 0
  %1438 = vmatpush1.bf16.msra.mxu0 0
  %1439 = vmatprep.subr.bf16.mxu0 0
  %1440 = vmatpush1.bf16.msra.mxu0 0
  %1441 = vmatprep.subr.bf16.mxu0 0
  %1442 = vmatpush1.bf16.msra.mxu0 0
  %1443 = vmatprep.subr.bf16.mxu0 0
  %1444 = vmatpush1.bf16.msra.mxu0 0
  %1445 = vmatprep.subr.bf16.mxu0 0
  %1446 = vmatpush1.bf16.msra.mxu0 0
  %1447 = vmatprep.subr.bf16.mxu0 0
  %1448 = vmatpush1.bf16.msra.mxu0 0
  %1449 = vmatprep.subr.bf16.mxu0 0
  %1450 = vmatpush1.bf16.msra.mxu0 0
  %1451 = vmatprep.subr.bf16.mxu0 0
  %1452 = vmatpush1.bf16.msra.mxu0 0
  %1453 = vmatprep.subr.bf16.mxu0 0
  %1454 = vmatpush1.bf16.msra.mxu0 0
  %1455 = vmatprep.subr.bf16.mxu0 0
  %1456 = vmatpush1.bf16.msra.mxu0 0
  %1457 = vmatprep.subr.bf16.mxu0 0
  %1458 = vmatpush1.bf16.msra.mxu0 0
  %1459 = vmatprep.subr.bf16.mxu0 0
  %1460 = vmatpush1.bf16.msra.mxu0 0
  %1461 = vmatprep.subr.bf16.mxu0 0
  %1462 = vmatpush1.bf16.msra.mxu0 0
  %1463 = vmatprep.mubr.bf16.mxu0 0
  %1464 = vmatmul.mubr.bf16.gmra.mrb[0].mxu0 %v1429
  %v1465 = vpop.f32.mrb[0].mxu0
  %v1466 = vadd.f32 0.0, %v1465
  %v1467 = vpop.f32.mrb[0].mxu0
  %v1468 = vpop.f32.mrb[0].mxu0
  %v1469 = vpop.f32.mrb[0].mxu0
  %1470 = vdwg.mxu0
  %v1471 = vadd.f32 %v1423, %v1466
  %v1472 = vld [vmem:[#allocation5] sm:$0xff]
  %v1473 = vpack.c.bf16 %v1409, %v1409
  %1475 = vrot.lane.b32.xlu0 %v1473, 32
  %v1476 = vpop.permute.xlu0 %1475
  %v1478 = vsel %vm303, %v1476, 0
  %1480 = vmatprep.subr.bf16.mxu0 0
  %1481 = vmatpush1.bf16.msra.mxu0 %v358
  %1482 = vmatprep.subr.bf16.mxu0 0
  %1483 = vmatpush1.bf16.msra.mxu0 %v359
  %1484 = vmatprep.subr.bf16.mxu0 0
  %1485 = vmatpush1.bf16.msra.mxu0 0
  %1486 = vmatprep.subr.bf16.mxu0 0
  %1487 = vmatpush1.bf16.msra.mxu0 0
  %1488 = vmatprep.subr.bf16.mxu0 0
  %1489 = vmatpush1.bf16.msra.mxu0 0
  %1490 = vmatprep.subr.bf16.mxu0 0
  %1491 = vmatpush1.bf16.msra.mxu0 0
  %1492 = vmatprep.subr.bf16.mxu0 0
  %1493 = vmatpush1.bf16.msra.mxu0 0
  %1494 = vmatprep.subr.bf16.mxu0 0
  %1495 = vmatpush1.bf16.msra.mxu0 0
  %1496 = vmatprep.subr.bf16.mxu0 0
  %1497 = vmatpush1.bf16.msra.mxu0 0
  %1498 = vmatprep.subr.bf16.mxu0 0
  %1499 = vmatpush1.bf16.msra.mxu0 0
  %1500 = vmatprep.subr.bf16.mxu0 0
  %1501 = vmatpush1.bf16.msra.mxu0 0
  %1502 = vmatprep.subr.bf16.mxu0 0
  %1503 = vmatpush1.bf16.msra.mxu0 0
  %1504 = vmatprep.subr.bf16.mxu0 0
  %1505 = vmatpush1.bf16.msra.mxu0 0
  %1506 = vmatprep.subr.bf16.mxu0 0
  %1507 = vmatpush1.bf16.msra.mxu0 0
  %1508 = vmatprep.subr.bf16.mxu0 0
  %1509 = vmatpush1.bf16.msra.mxu0 0
  %1510 = vmatprep.subr.bf16.mxu0 0
  %1511 = vmatpush1.bf16.msra.mxu0 0
  %1512 = vmatprep.mubr.bf16.mxu0 0
  %1513 = vmatmul.mubr.bf16.gmra.mrb[0].mxu0 %v1478
  %v1514 = vpop.f32.mrb[0].mxu0
  %v1515 = vadd.f32 0.0, %v1514
  %v1516 = vpop.f32.mrb[0].mxu0
  %v1517 = vpop.f32.mrb[0].mxu0
  %v1518 = vpop.f32.mrb[0].mxu0
  %1519 = vdwg.mxu0
  %v1520 = vadd.f32 %v1472, %v1515
  %v1521 = vxor.u32 %v1471, 2147483648
  %v1522 = vmul.f32 %v1521, 1.442695
  %v1523 = vpow.pop %v1522
  %v1524 = vadd.f32 %v1523, 1.0
  %v1525 = vrcp.pop %v1524
  %v1526 = vmul.f32 1.0, %v1525
  %v1527 = vtanh.pop %v1471
  %v1528 = vmul.f32 %v1526, %v1379
  %1530 = vrot.lane.b32.xlu0 %v1527, 64
  %v1531 = vpop.permute.xlu0 %1530
  %v1533 = vmul.f32 %v1526, %v1531
  %1535 = vrot.lane.b32.xlu0 %v1533, 32
  %v1536 = vpop.permute.xlu0 %1535
  %v1538 = vadd.f32 %v1528, %v1536
  %v1539 = vtanh.pop %v1538
  %1541 = vrot.lane.b32.xlu0 %v1539, 64
  %v1542 = vpop.permute.xlu0 %1541
  %v1544 = vmul.f32 %v1526, %v1542
  %v1545 = vxor.u32 %v1520, 2147483648
  %v1546 = vmul.f32 %v1545, 1.442695
  %v1547 = vpow.pop %v1546
  %v1548 = vadd.f32 %v1547, 1.0
  %v1549 = vrcp.pop %v1548
  %v1550 = vmul.f32 1.0, %v1549
  %v1551 = vtanh.pop %v1520
  %v1552 = vmul.f32 %v1550, %v1403
  %1554 = vrot.lane.b32.xlu0 %v1551, 64
  %v1555 = vpop.permute.xlu0 %1554
  %v1557 = vmul.f32 %v1550, %v1555
  %1559 = vrot.lane.b32.xlu0 %v1557, 32
  %v1560 = vpop.permute.xlu0 %1559
  %v1562 = vadd.f32 %v1552, %v1560
  %v1563 = vtanh.pop %v1562
  %1565 = vrot.lane.b32.xlu0 %v1563, 64
  %v1566 = vpop.permute.xlu0 %1565
  %v1568 = vmul.f32 %v1550, %v1566
  %1570 = vrot.lane.b32.xlu0 %v1544, 32
  %v1571 = vpop.permute.xlu0 %1570
  %s1573 = scalar_lea.vmem [#allocation2], 56
  %1574 = vst.msk [vmem:[%s1573] sm:$0xff] %vm303, %v1571
  %1576 = vrot.lane.b32.xlu0 %v1568, 32
  %v1577 = vpop.permute.xlu0 %1576
  %1579 = vst.msk [vmem:[#allocation3] sm:$0xff] %vm303, %v1577
  %v1580 = vld [vmem:[#allocation2] sm:$0xff]
  %v1581 = vld [vmem:[#allocation2 + $0x8] sm:$0xff]
  %v1582 = vld [vmem:[#allocation2 + $0x10] sm:$0xff]
  %v1583 = vld [vmem:[#allocation2 + $0x18] sm:$0xff]
  %v1584 = vld [vmem:[#allocation2 + $0x20] sm:$0xff]
  %v1585 = vld [vmem:[#allocation2 + $0x28] sm:$0xff]
  %v1586 = vld [vmem:[#allocation2 + $0x30] sm:$0xff]
  %v1587 = vld [vmem:[#allocation2 + $0x38] sm:$0xff]
  %v1588 = vld [vmem:[#allocation3] sm:$0xff]
  %v1589 = vld [vmem:[#allocation3 + $0x8] sm:$0xff]
  %v1590 = vld [vmem:[#allocation3 + $0x10] sm:$0xff]
  %v1591 = vld [vmem:[#allocation3 + $0x18] sm:$0xff]
  %v1592 = vld [vmem:[#allocation3 + $0x20] sm:$0xff]
  %v1593 = vld [vmem:[#allocation3 + $0x28] sm:$0xff]
  %v1594 = vld [vmem:[#allocation3 + $0x30] sm:$0xff]
  %v1595 = vld [vmem:[#allocation3 + $0x38] sm:$0xff]
  %1604 = vrot.lane.b32.xlu0 %v1588, 32
  %v1605 = vpop.permute.xlu0 %1604
  %1606 = vrot.lane.b32.xlu0 %v1589, 32
  %v1607 = vpop.permute.xlu0 %1606
  %1608 = vrot.lane.b32.xlu0 %v1590, 32
  %v1609 = vpop.permute.xlu0 %1608
  %1610 = vrot.lane.b32.xlu0 %v1591, 32
  %v1611 = vpop.permute.xlu0 %1610
  %1612 = vrot.lane.b32.xlu0 %v1592, 32
  %v1613 = vpop.permute.xlu0 %1612
  %1614 = vrot.lane.b32.xlu0 %v1593, 32
  %v1615 = vpop.permute.xlu0 %1614
  %1616 = vrot.lane.b32.xlu0 %v1594, 32
  %v1617 = vpop.permute.xlu0 %1616
  %1618 = vrot.lane.b32.xlu0 %v1595, 32
  %v1619 = vpop.permute.xlu0 %1618
  %v1628 = vsel %vm303, %v1580, %v1605
  %v1629 = vsel %vm303, %v1581, %v1607
  %v1630 = vsel %vm303, %v1582, %v1609
  %v1631 = vsel %vm303, %v1583, %v1611
  %v1632 = vsel %vm303, %v1584, %v1613
  %v1633 = vsel %vm303, %v1585, %v1615
  %v1634 = vsel %vm303, %v1586, %v1617
  %v1635 = vsel %vm303, %v1587, %v1619
  %v1636 = vpack.c.bf16 %v1629, %v1628
  %v1637 = vpack.c.bf16 %v1631, %v1630
  %v1638 = vpack.c.bf16 %v1633, %v1632
  %v1639 = vpack.c.bf16 %v1635, %v1634
  %v1640 = vld [vmem:[%s7] sm:$0xf]
  %v1641 = vld [vmem:[%s7 + $0x4] sm:$0xf]
  %v1642 = vld [vmem:[%s7 + $0x8] sm:$0xf]
  %v1643 = vld [vmem:[%s7 + $0xc] sm:$0xf]
  %v1644 = vld [vmem:[%s7 + $0x10] sm:$0xf]
  %v1645 = vld [vmem:[%s7 + $0x14] sm:$0xf]
  %v1646 = vld [vmem:[%s7 + $0x18] sm:$0xf]
  %v1647 = vld [vmem:[%s7 + $0x1c] sm:$0xf]
  %v1648 = vld [vmem:[%s8] sm:$0x1]
  %v1650 = vlaneseq
  %v1651 = vshrl.u32 %v1650, 7
  %v1652 = vsub.s32 0, %v1651
  %v1653 = vrot.slane %v1648, %v1652
  %v1663 = vunpack.c.l.b16 %v1640
  %v1664 = vunpack.c.l.b16 %v1641
  %v1665 = vunpack.c.l.b16 %v1642
  %v1666 = vunpack.c.l.b16 %v1643
  %v1667 = vunpack.c.l.b16 %v1644
  %v1668 = vunpack.c.l.b16 %v1645
  %v1669 = vunpack.c.l.b16 %v1646
  %v1670 = vunpack.c.l.b16 %v1647
  %v1671 = vpack.c.b16 %v1664, %v1663
  %v1672 = vpack.c.b16 %v1666, %v1665
  %v1673 = vpack.c.b16 %v1668, %v1667
  %v1674 = vpack.c.b16 %v1670, %v1669
  %v1680 = vsel %vm84, %v1636, 0
  %v1683 = vsel %vm84, %v1637, 0
  %v1686 = vsel %vm84, %v1638, 0
  %v1689 = vsel %vm84, %v1639, 0
  %1691 = vmatprep.subr.bf16.mxu0 0
  %1692 = vmatpush1.bf16.msra.mxu0 %v1671
  %1693 = vmatprep.subr.bf16.mxu0 0
  %1694 = vmatpush1.bf16.msra.mxu0 %v1672
  %1695 = vmatprep.subr.bf16.mxu0 0
  %1696 = vmatpush1.bf16.msra.mxu0 %v1673
  %1697 = vmatprep.subr.bf16.mxu0 0
  %1698 = vmatpush1.bf16.msra.mxu0 %v1674
  %1699 = vmatprep.subr.bf16.mxu0 0
  %1700 = vmatpush1.bf16.msra.mxu0 0
  %1701 = vmatprep.subr.bf16.mxu0 0
  %1702 = vmatpush1.bf16.msra.mxu0 0
  %1703 = vmatprep.subr.bf16.mxu0 0
  %1704 = vmatpush1.bf16.msra.mxu0 0
  %1705 = vmatprep.subr.bf16.mxu0 0
  %1706 = vmatpush1.bf16.msra.mxu0 0
  %1707 = vmatprep.subr.bf16.mxu0 0
  %1708 = vmatpush1.bf16.msra.mxu0 0
  %1709 = vmatprep.subr.bf16.mxu0 0
  %1710 = vmatpush1.bf16.msra.mxu0 0
  %1711 = vmatprep.subr.bf16.mxu0 0
  %1712 = vmatpush1.bf16.msra.mxu0 0
  %1713 = vmatprep.subr.bf16.mxu0 0
  %1714 = vmatpush1.bf16.msra.mxu0 0
  %1715 = vmatprep.subr.bf16.mxu0 0
  %1716 = vmatpush1.bf16.msra.mxu0 0
  %1717 = vmatprep.subr.bf16.mxu0 0
  %1718 = vmatpush1.bf16.msra.mxu0 0
  %1719 = vmatprep.subr.bf16.mxu0 0
  %1720 = vmatpush1.bf16.msra.mxu0 0
  %1721 = vmatprep.subr.bf16.mxu0 0
  %1722 = vmatpush1.bf16.msra.mxu0 0
  %1723 = vmatprep.mubr.bf16.mxu0 0
  %1724 = vmatmul.mubr.bf16.gmra.mrb[0].mxu0 %v1680
  %v1725 = vpop.f32.mrb[0].mxu0
  %v1726 = vadd.f32 %v1653, %v1725
  %v1727 = vpop.f32.mrb[0].mxu0
  %v1728 = vpop.f32.mrb[0].mxu0
  %v1729 = vadd.f32 %v1653, %v1728
  %v1730 = vpop.f32.mrb[0].mxu0
  %1731 = vmatprep.mubr.bf16.mxu0 0
  %1732 = vmatmul.mubr.bf16.gmra.mrb[0].mxu0 %v1683
  %v1733 = vpop.f32.mrb[0].mxu0
  %v1734 = vadd.f32 %v1653, %v1733
  %v1735 = vpop.f32.mrb[0].mxu0
  %v1736 = vpop.f32.mrb[0].mxu0
  %v1737 = vadd.f32 %v1653, %v1736
  %v1738 = vpop.f32.mrb[0].mxu0
  %1739 = vmatprep.mubr.bf16.mxu0 0
  %1740 = vmatmul.mubr.bf16.gmra.mrb[0].mxu0 %v1686
  %v1741 = vpop.f32.mrb[0].mxu0
  %v1742 = vadd.f32 %v1653, %v1741
  %v1743 = vpop.f32.mrb[0].mxu0
  %v1744 = vpop.f32.mrb[0].mxu0
  %v1745 = vadd.f32 %v1653, %v1744
  %v1746 = vpop.f32.mrb[0].mxu0
  %1747 = vmatprep.mubr.bf16.mxu0 0
  %1748 = vmatmul.mubr.bf16.gmra.mrb[0].mxu0 %v1689
  %v1749 = vpop.f32.mrb[0].mxu0
  %v1750 = vadd.f32 %v1653, %v1749
  %v1751 = vpop.f32.mrb[0].mxu0
  %v1752 = vpop.f32.mrb[0].mxu0
  %v1753 = vadd.f32 %v1653, %v1752
  %v1754 = vpop.f32.mrb[0].mxu0
  %1755 = vdwg.mxu0
  %1756 = vst [vmem:[%s9] sm:$0xff] %v1726
  %1757 = vst [vmem:[%s9 + $0x8] sm:$0xff] %v1729
  %1758 = vst [vmem:[%s9 + $0x10] sm:$0xff] %v1734
  %1759 = vst [vmem:[%s9 + $0x18] sm:$0xff] %v1737
  %1760 = vst [vmem:[%s9 + $0x20] sm:$0xff] %v1742
  %1761 = vst [vmem:[%s9 + $0x28] sm:$0xff] %v1745
  %1762 = vst [vmem:[%s9 + $0x30] sm:$0xff] %v1750
  %1763 = vst [vmem:[%s9 + $0x38] sm:$0xff] %v1753
  // Predicated region
  $region38: #{torch_model_forward.3} parent=0 // pred_check
    _
  $region39: #{torch_model_forward.3} parent=0 // pred_check_branch
    %1765 = sbr.rel (0) target = $region41
  $region40: #{torch_model_forward.3} parent=0 // pred_region
    _
  $region41: #{torch_model_forward.3} parent=0 // pred_fallthru
    _
  // Predicated region
  $region42: #{torch_model_forward.3} parent=0 // pred_check
    _
  $region43: #{torch_model_forward.3} parent=0 // pred_check_branch
    %1767 = sbr.rel (0) target = $region45
  $region44: #{torch_model_forward.3} parent=0 // pred_region
    _
  $region45: #{torch_model_forward.3} parent=0 // pred_fallthru
    _

</llo_original>
